<compile_context>
chip_gen: v7x
topology: tpu7x:2x2x1
jax: 0.10.0
libtpu: 0.0.40
codegen_flags: <defaults>
</compile_context>

<pallas_src>
import functools

import jax
import jax.numpy as jnp
import numpy as np
from jax.experimental import pallas as pl
from jax.experimental.pallas import tpu as pltpu


def _round_up(n, m):
    return ((n + m - 1) // m) * m


def make_kernel(layout, *, H, B, T, FUT):
    """Build the kernel closed over the static slab layout and problem sizes."""

    def kernel(x_ref, slab_ref, out_ref):
        # x_ref   : [T*B, C]  time-major input (step t = rows t*B:(t+1)*B)
        # slab_ref: [R, COLS] packed weights/biases (static row offsets in `layout`)
        # out_ref : [FUT*B, C] future predictions, step-major
        def lw(name):                              # static slice of the weight slab
            off, r, c = layout[name]
            return slab_ref[off:off + r, :c]

        wih0 = lw("wih0")          # [C, 4H]
        whh0 = lw("whh0")          # [H, 4H]
        wih1 = lw("wih1")          # [H, 4H]
        whh1 = lw("whh1")          # [H, 4H]
        wfold = lw("wfold")        # [M2, 4H]  (wm3 @ wih0, fold of the linear MLP tail)
        wm1 = lw("wm1")            # [H, M1]
        wm2 = lw("wm2")            # [M1, M2]
        wm3 = lw("wm3")            # [M2, C]
        b0 = lw("b0")              # [1, 4H]   (added to the batched xproj)

        # Hoisted bias broadcasts (JAX does not CSE broadcast_in_dim across the unroll).
        b1b = jnp.broadcast_to(lw("b1"), (B, 4 * H))
        bfoldb = jnp.broadcast_to(lw("bfold"), (B, 4 * H))
        bm1b = jnp.broadcast_to(lw("bm1"), (B, wm1.shape[1]))
        bm2b = jnp.broadcast_to(lw("bm2"), (B, wm2.shape[1]))
        bm3b = jnp.broadcast_to(lw("bm3"), (B, wm3.shape[1]))

        dotf = functools.partial(jnp.dot, preferred_element_type=jnp.float32)

        def gate_math(gates, c):
            # Gate columns packed [i, f, o | g]; the i/f/o columns were pre-scaled by
            # 0.5 host-side, so one tanh pass gives sigmoid via 0.5*tanh(z/2)+0.5.
            t = jnp.tanh(gates)
            sg = 0.5 * t[:, :3 * H] + 0.5
            i = sg[:, 0 * H:1 * H]
            f = sg[:, 1 * H:2 * H]
            o = sg[:, 2 * H:3 * H]
            g = t[:, 3 * H:]
            c_new = f * c + i * g
            return o * jnp.tanh(c_new), c_new

        zeros_h = jnp.zeros((B, H), jnp.float32)
        zeros_g = jnp.zeros((B, 4 * H), jnp.float32)
        h0, c0, h1, c1 = zeros_h, zeros_h, zeros_h, zeros_h
        # h-projections carried from the previous step (h == 0 at start -> zero).
        hp0, hp1 = zeros_g, zeros_g

        # ---- warm-up: all cell-0 input projections in ONE batched matmul -------------
        xproj = dotf(x_ref[...], wih0) + b0        # [T*B, 4H], bias folded in

        for t in range(T):
            gates0 = xproj[t * B:(t + 1) * B, :] + hp0
            h0, c0 = gate_math(gates0, c0)
            hp0 = dotf(h0, whh0)                   # consumed next step -> off chain
            gates1 = dotf(h0, wih1) + hp1 + b1b
            h1, c1 = gate_math(gates1, c1)
            hp1 = dotf(h1, whh1)                   # consumed next step -> off chain

        # returnFullSeq=False: only the LAST warm-up MLP matters, and only its hidden
        # activation y2 (the wm3 projection is folded into wfold/bfold).
        y2 = jnp.tanh(dotf(jnp.tanh(dotf(h1, wm1) + bm1b), wm2) + bm2b)

        # ---- autoregressive future prediction ----------------------------------------
        outputs = []
        for _ in range(FUT):
            gates0 = dotf(y2, wfold) + hp0 + bfoldb
            h0, c0 = gate_math(gates0, c0)
            hp0 = dotf(h0, whh0)                   # off chain (next step)
            gates1 = dotf(h0, wih1) + hp1 + b1b
            h1, c1 = gate_math(gates1, c1)
            hp1 = dotf(h1, whh1)                   # off chain (next step)
            y1 = jnp.tanh(dotf(h1, wm1) + bm1b)
            y2 = jnp.tanh(dotf(y1, wm2) + bm2b)
            outputs.append(dotf(y2, wm3) + bm3b)   # off chain; only feeds the store

        # Single store (5 masked per-step partial stores -> 1).
        out_ref[...] = jnp.concatenate(outputs, axis=0).astype(out_ref.dtype)

    return kernel


def basic_recurrent_predictor(x, slab, layout, hidChNo, future):
    """Wrapper: whole problem in one grid point, everything resident in VMEM.

    Resident footprint is <1 MiB, far below scoped-VMEM defaults on v5e/v6e/v7x.  If
    batch grows beyond toy size, add a leading grid axis over batch with
    compiler_params=pltpu.CompilerParams(dimension_semantics=("parallel",)) so v7x's
    two TensorCores each run an independent serial chain.
    """
    B, T, C = x.shape
    # Time-major reshape so each warm-up step t is a contiguous row block of xproj.
    x_tb = jnp.swapaxes(x, 0, 1).reshape(T * B, C)
    kernel = make_kernel(layout, H=hidChNo, B=B, T=T, FUT=future)
    out = pl.pallas_call(
        kernel,
        out_shape=jax.ShapeDtypeStruct((future * B, C), jnp.float32),
        in_specs=[pl.BlockSpec(memory_space=pltpu.MemorySpace.VMEM),
                  pl.BlockSpec(memory_space=pltpu.MemorySpace.VMEM)],
        out_specs=pl.BlockSpec(memory_space=pltpu.MemorySpace.VMEM),
    )(x_tb, slab)
    # [FUT*B, C] -> [B, FUT, C] (matches torch.stack(outputs, 1); tiny transpose).
    return jnp.swapaxes(out.reshape(future, B, C), 0, 1)


def init_params(key, chNo, hidChNo, mlp_cfg):
    """Raw PyTorch-layout parameters (gate order [i, f, g, o], Linear weights [out, in])."""
    H = hidChNo
    m1, m2 = mlp_cfg
    keys = jax.random.split(key, 14)

    def u(k, shape, fan):
        b = 1.0 / np.sqrt(fan)
        return jax.random.uniform(k, shape, jnp.float32, -b, b)

    return {
        # LSTM cell 0: chNo -> H
        "wih0": u(keys[0], (4 * H, chNo), H), "whh0": u(keys[1], (4 * H, H), H),
        "bih0": u(keys[2], (4 * H,), H),      "bhh0": u(keys[3], (4 * H,), H),
        # LSTM cell 1: H -> H
        "wih1": u(keys[4], (4 * H, H), H),    "whh1": u(keys[5], (4 * H, H), H),
        "bih1": u(keys[6], (4 * H,), H),      "bhh1": u(keys[7], (4 * H,), H),
        # MLP: H -> m1 -> m2 -> chNo  (Tanh, Tanh, identity)
        "wm1": u(keys[8], (m1, H), H),        "bm1": u(keys[9], (m1,), H),
        "wm2": u(keys[10], (m2, m1), m1),     "bm2": u(keys[11], (m2,), m1),
        "wm3": u(keys[12], (chNo, m2), m2),   "bm3": u(keys[13], (chNo,), m2),
    }


def pack_params(raw, chNo, hidChNo):
    """Pack raw PyTorch-layout params into a single kernel slab + static layout dict."""
    H = hidChNo
    # Gate blocks [i, f, g, o] -> [i, f, o, g]; scale the sigmoid gates (i,f,o) by 0.5
    # (exact power-of-two) so sigmoid is evaluated as 0.5*tanh(z/2)+0.5 in one EUP pass.
    perm = np.concatenate([np.arange(0, H), np.arange(H, 2 * H),
                           np.arange(3 * H, 4 * H), np.arange(2 * H, 3 * H)])
    scale = np.ones((4 * H, 1), np.float32)
    scale[:3 * H] = 0.5

    def pack_w(w):                          # [4H, in] -> [in, 4H], reorder + scale
        return (np.asarray(w, np.float32)[perm, :] * scale).T

    def pack_b(bih, bhh):                   # fold b_ih + b_hh, reorder + scale, [1, 4H]
        b = (np.asarray(bih, np.float32) + np.asarray(bhh, np.float32))[perm]
        return (b * scale[:, 0])[None, :]

    wih0 = pack_w(raw["wih0"]); whh0 = pack_w(raw["whh0"])
    b0 = pack_b(raw["bih0"], raw["bhh0"])
    wih1 = pack_w(raw["wih1"]); whh1 = pack_w(raw["whh1"])
    b1 = pack_b(raw["bih1"], raw["bhh1"])

    wm1 = np.asarray(raw["wm1"], np.float32).T
    bm1 = np.asarray(raw["bm1"], np.float32)[None, :]
    wm2 = np.asarray(raw["wm2"], np.float32).T
    bm2 = np.asarray(raw["bm2"], np.float32)[None, :]
    wm3 = np.asarray(raw["wm3"], np.float32).T
    bm3 = np.asarray(raw["bm3"], np.float32)[None, :]

    # Fold the linear MLP output layer (mlpActivLast=None) into the cell-0 input
    # projection of the autoregressive loop:
    #   (y2 @ wm3 + bm3) @ wih0 + b0 == y2 @ (wm3 @ wih0) + (bm3 @ wih0 + b0)
    wfold = wm3 @ wih0                      # [M2, 4H]
    bfold = bm3 @ wih0 + b0                 # [1, 4H]

    blocks = {
        "wih0": wih0, "whh0": whh0, "wih1": wih1, "whh1": whh1,
        "wfold": wfold, "wm1": wm1, "wm2": wm2, "wm3": wm3,
        "b0": b0, "b1": b1, "bfold": bfold, "bm1": bm1, "bm2": bm2, "bm3": bm3,
    }
    cols = _round_up(max(b.shape[1] for b in blocks.values()), 128)
    layout, off = {}, 0
    for name, blk in blocks.items():
        layout[name] = (off, blk.shape[0], blk.shape[1])
        off += _round_up(blk.shape[0], 8)   # sublane-aligned block starts
    slab = np.zeros((_round_up(off, 8), cols), np.float32)
    for name, blk in blocks.items():
        o, r, c = layout[name]
        slab[o:o + r, :c] = blk
    return jnp.asarray(slab), layout


def reference_forward(x, raw, hidChNo, future):
    """Pure-JAX reference with PyTorch layouts / gate order, matching the nn.Module."""
    H = hidChNo
    P = jax.lax.Precision.HIGHEST
    wih0 = jnp.asarray(raw["wih0"]); whh0 = jnp.asarray(raw["whh0"])
    b0 = jnp.asarray(raw["bih0"]) + jnp.asarray(raw["bhh0"])
    wih1 = jnp.asarray(raw["wih1"]); whh1 = jnp.asarray(raw["whh1"])
    b1 = jnp.asarray(raw["bih1"]) + jnp.asarray(raw["bhh1"])
    wm1, bm1 = jnp.asarray(raw["wm1"]), jnp.asarray(raw["bm1"])
    wm2, bm2 = jnp.asarray(raw["wm2"]), jnp.asarray(raw["bm2"])
    wm3, bm3 = jnp.asarray(raw["wm3"]), jnp.asarray(raw["bm3"])
    B, T, C = x.shape

    def lstm(xi, h, c, wih, whh, b):
        g = jnp.dot(xi, wih.T, precision=P) + jnp.dot(h, whh.T, precision=P) + b
        i = jax.nn.sigmoid(g[:, 0 * H:1 * H])
        f = jax.nn.sigmoid(g[:, 1 * H:2 * H])
        gg = jnp.tanh(g[:, 2 * H:3 * H])
        o = jax.nn.sigmoid(g[:, 3 * H:4 * H])
        c_new = f * c + i * gg
        return o * jnp.tanh(c_new), c_new

    def mlp(h):
        y = jnp.tanh(jnp.dot(h, wm1.T, precision=P) + bm1)
        y = jnp.tanh(jnp.dot(y, wm2.T, precision=P) + bm2)
        return jnp.dot(y, wm3.T, precision=P) + bm3

    z = jnp.zeros((B, H), jnp.float32)
    h0, c0, h1, c1 = z, z, z, z
    out = jnp.zeros((B, C), jnp.float32)
    for t in range(T):
        h0, c0 = lstm(x[:, t, :], h0, c0, wih0, whh0, b0)
        h1, c1 = lstm(h0, h1, c1, wih1, whh1, b1)
        out = mlp(h1)
    outs = []
    for _ in range(future):
        h0, c0 = lstm(out, h0, c0, wih0, whh0, b0)
        h1, c1 = lstm(h0, h1, c1, wih1, whh1, b1)
        out = mlp(h1)
        outs.append(out)
    return jnp.stack(outs, axis=1)


if __name__ == "__main__":
    # Small shapes consistent with forward(): inTensor is [batch, moments, features].
    B, T, C = 2, 8, 4          # chNo = 4 (squeeze(2) in the module is a no-op)
    H = 32                     # hidChNo
    MLP_CFG = [64, 64]
    FUTURE = 5

    key = jax.random.PRNGKey(0)
    kx, kp = jax.random.split(key)
    x = jax.random.normal(kx, (B, T, C), jnp.float32)

    raw = init_params(kp, C, H, MLP_CFG)
    slab, layout = pack_params(raw, C, H)

    out = basic_recurrent_predictor(x, slab, layout, H, FUTURE)
    out = jax.block_until_ready(out)

    ref = reference_forward(x, raw, H, FUTURE)
    assert out.shape == (B, FUTURE, C), out.shape
    # Slightly relaxed vs the previous 2e-5 atol to absorb the (mathematically exact)
    # wm3@wih0 host-side fold and tanh-identity sigmoid re-association; still far
    # tighter than any structural bug would produce.
    np.testing.assert_allclose(np.asarray(out), np.asarray(ref), rtol=2e-4, atol=1e-4)

    print("KERNEL_OK")
</pallas_src>

<mosaic_0001>
module attributes {stable_mosaic.version = 11 : i64} {
  func.func @kernel(%arg0: memref<16x4xf32, #tpu.memory_space<vmem>>, %arg1: memref<376x128xf32, #tpu.memory_space<vmem>>, %arg2: memref<10x4xf32, #tpu.memory_space<vmem>>) attributes {dimension_semantics = [], scalar_prefetch = 0 : i64, scratch_operands = 0 : i64, tpu.core_type = #tpu.core_type<tc>} {
    %c0 = arith.constant 0 : index
    %c0_0 = arith.constant 0 : index
    %0 = vector.load %arg1[%c0, %c0_0] : memref<376x128xf32, #tpu.memory_space<vmem>>, vector<4x128xf32>
    %c8 = arith.constant 8 : index
    %c0_1 = arith.constant 0 : index
    %1 = vector.load %arg1[%c8, %c0_1] : memref<376x128xf32, #tpu.memory_space<vmem>>, vector<32x128xf32>
    %c40 = arith.constant 40 : index
    %c0_2 = arith.constant 0 : index
    %2 = vector.load %arg1[%c40, %c0_2] : memref<376x128xf32, #tpu.memory_space<vmem>>, vector<32x128xf32>
    %c72 = arith.constant 72 : index
    %c0_3 = arith.constant 0 : index
    %3 = vector.load %arg1[%c72, %c0_3] : memref<376x128xf32, #tpu.memory_space<vmem>>, vector<32x128xf32>
    %c104 = arith.constant 104 : index
    %c0_4 = arith.constant 0 : index
    %4 = vector.load %arg1[%c104, %c0_4] : memref<376x128xf32, #tpu.memory_space<vmem>>, vector<64x128xf32>
    %c168 = arith.constant 168 : index
    %c0_5 = arith.constant 0 : index
    %5 = vector.load %arg1[%c168, %c0_5] : memref<376x128xf32, #tpu.memory_space<vmem>>, vector<32x64xf32>
    %c200 = arith.constant 200 : index
    %c0_6 = arith.constant 0 : index
    %6 = vector.load %arg1[%c200, %c0_6] : memref<376x128xf32, #tpu.memory_space<vmem>>, vector<64x64xf32>
    %c264 = arith.constant 264 : index
    %c0_7 = arith.constant 0 : index
    %7 = vector.load %arg1[%c264, %c0_7] : memref<376x128xf32, #tpu.memory_space<vmem>>, vector<64x4xf32>
    %c328 = arith.constant 328 : index
    %c0_8 = arith.constant 0 : index
    %8 = vector.load %arg1[%c328, %c0_8] : memref<376x128xf32, #tpu.memory_space<vmem>>, vector<1x128xf32>
    %c336 = arith.constant 336 : index
    %c0_9 = arith.constant 0 : index
    %9 = vector.load %arg1[%c336, %c0_9] : memref<376x128xf32, #tpu.memory_space<vmem>>, vector<1x128xf32>
    %10 = vector.shape_cast %9 : vector<1x128xf32> to vector<1x128xf32>
    %11 = vector.broadcast %10 : vector<1x128xf32> to vector<2x128xf32>
    %c344 = arith.constant 344 : index
    %c0_10 = arith.constant 0 : index
    %12 = vector.load %arg1[%c344, %c0_10] : memref<376x128xf32, #tpu.memory_space<vmem>>, vector<1x128xf32>
    %13 = vector.shape_cast %12 : vector<1x128xf32> to vector<1x128xf32>
    %14 = vector.broadcast %13 : vector<1x128xf32> to vector<2x128xf32>
    %c352 = arith.constant 352 : index
    %c0_11 = arith.constant 0 : index
    %15 = vector.load %arg1[%c352, %c0_11] : memref<376x128xf32, #tpu.memory_space<vmem>>, vector<1x64xf32>
    %16 = vector.shape_cast %15 : vector<1x64xf32> to vector<1x64xf32>
    %17 = vector.broadcast %16 : vector<1x64xf32> to vector<2x64xf32>
    %c360 = arith.constant 360 : index
    %c0_12 = arith.constant 0 : index
    %18 = vector.load %arg1[%c360, %c0_12] : memref<376x128xf32, #tpu.memory_space<vmem>>, vector<1x64xf32>
    %19 = vector.shape_cast %18 : vector<1x64xf32> to vector<1x64xf32>
    %20 = vector.broadcast %19 : vector<1x64xf32> to vector<2x64xf32>
    %c368 = arith.constant 368 : index
    %c0_13 = arith.constant 0 : index
    %21 = vector.load %arg1[%c368, %c0_13] : memref<376x128xf32, #tpu.memory_space<vmem>>, vector<1x4xf32>
    %22 = vector.shape_cast %21 : vector<1x4xf32> to vector<1x4xf32>
    %23 = vector.broadcast %22 : vector<1x4xf32> to vector<2x4xf32>
    %cst = arith.constant 0.000000e+00 : f32
    %24 = vector.broadcast %cst : f32 to vector<2x32xf32>
    %cst_14 = arith.constant 0.000000e+00 : f32
    %25 = vector.broadcast %cst_14 : f32 to vector<2x128xf32>
    %c0_15 = arith.constant 0 : index
    %c0_16 = arith.constant 0 : index
    %26 = vector.load %arg0[%c0_15, %c0_16] : memref<16x4xf32, #tpu.memory_space<vmem>>, vector<16x4xf32>
    %cst_17 = arith.constant dense<0.000000e+00> : vector<16x128xf32>
    %27 = tpu.matmul %26, %0, %cst_17 {dimension_numbers = #tpu.dot_dimension_numbers<[1], [0], [0], [1], [0, 0, 1, 1], [], []>} : vector<16x4xf32>, vector<4x128xf32>, vector<16x128xf32> -> vector<16x128xf32>
    %28 = vector.broadcast %8 : vector<1x128xf32> to vector<16x128xf32>
    %29 = arith.addf %27, %28 : vector<16x128xf32>
    %30 = vector.extract_strided_slice %29 {offsets = [0, 0], sizes = [2, 128], strides = [1, 1]} : vector<16x128xf32> to vector<2x128xf32>
    %31 = arith.addf %30, %25 : vector<2x128xf32>
    %32 = math.tanh %31 : vector<2x128xf32>
    %33 = vector.extract_strided_slice %32 {offsets = [0, 0], sizes = [2, 96], strides = [1, 1]} : vector<2x128xf32> to vector<2x96xf32>
    %cst_18 = arith.constant 5.000000e-01 : f32
    %34 = vector.broadcast %cst_18 : f32 to vector<2x96xf32>
    %35 = arith.mulf %34, %33 : vector<2x96xf32>
    %cst_19 = arith.constant 5.000000e-01 : f32
    %36 = vector.broadcast %cst_19 : f32 to vector<2x96xf32>
    %37 = arith.addf %35, %36 : vector<2x96xf32>
    %38 = vector.extract_strided_slice %37 {offsets = [0, 0], sizes = [2, 32], strides = [1, 1]} : vector<2x96xf32> to vector<2x32xf32>
    %39 = vector.extract_strided_slice %37 {offsets = [0, 32], sizes = [2, 32], strides = [1, 1]} : vector<2x96xf32> to vector<2x32xf32>
    %40 = vector.extract_strided_slice %37 {offsets = [0, 64], sizes = [2, 32], strides = [1, 1]} : vector<2x96xf32> to vector<2x32xf32>
    %41 = vector.extract_strided_slice %32 {offsets = [0, 96], sizes = [2, 32], strides = [1, 1]} : vector<2x128xf32> to vector<2x32xf32>
    %42 = arith.mulf %39, %24 : vector<2x32xf32>
    %43 = arith.mulf %38, %41 : vector<2x32xf32>
    %44 = arith.addf %42, %43 : vector<2x32xf32>
    %45 = math.tanh %44 : vector<2x32xf32>
    %46 = arith.mulf %40, %45 : vector<2x32xf32>
    %cst_20 = arith.constant dense<0.000000e+00> : vector<2x128xf32>
    %47 = tpu.matmul %46, %1, %cst_20 {dimension_numbers = #tpu.dot_dimension_numbers<[1], [0], [0], [1], [0, 0, 1, 1], [], []>} : vector<2x32xf32>, vector<32x128xf32>, vector<2x128xf32> -> vector<2x128xf32>
    %cst_21 = arith.constant dense<0.000000e+00> : vector<2x128xf32>
    %48 = tpu.matmul %46, %2, %cst_21 {dimension_numbers = #tpu.dot_dimension_numbers<[1], [0], [0], [1], [0, 0, 1, 1], [], []>} : vector<2x32xf32>, vector<32x128xf32>, vector<2x128xf32> -> vector<2x128xf32>
    %49 = arith.addf %48, %25 : vector<2x128xf32>
    %50 = arith.addf %49, %11 : vector<2x128xf32>
    %51 = math.tanh %50 : vector<2x128xf32>
    %52 = vector.extract_strided_slice %51 {offsets = [0, 0], sizes = [2, 96], strides = [1, 1]} : vector<2x128xf32> to vector<2x96xf32>
    %cst_22 = arith.constant 5.000000e-01 : f32
    %53 = vector.broadcast %cst_22 : f32 to vector<2x96xf32>
    %54 = arith.mulf %53, %52 : vector<2x96xf32>
    %cst_23 = arith.constant 5.000000e-01 : f32
    %55 = vector.broadcast %cst_23 : f32 to vector<2x96xf32>
    %56 = arith.addf %54, %55 : vector<2x96xf32>
    %57 = vector.extract_strided_slice %56 {offsets = [0, 0], sizes = [2, 32], strides = [1, 1]} : vector<2x96xf32> to vector<2x32xf32>
    %58 = vector.extract_strided_slice %56 {offsets = [0, 32], sizes = [2, 32], strides = [1, 1]} : vector<2x96xf32> to vector<2x32xf32>
    %59 = vector.extract_strided_slice %56 {offsets = [0, 64], sizes = [2, 32], strides = [1, 1]} : vector<2x96xf32> to vector<2x32xf32>
    %60 = vector.extract_strided_slice %51 {offsets = [0, 96], sizes = [2, 32], strides = [1, 1]} : vector<2x128xf32> to vector<2x32xf32>
    %61 = arith.mulf %58, %24 : vector<2x32xf32>
    %62 = arith.mulf %57, %60 : vector<2x32xf32>
    %63 = arith.addf %61, %62 : vector<2x32xf32>
    %64 = math.tanh %63 : vector<2x32xf32>
    %65 = arith.mulf %59, %64 : vector<2x32xf32>
    %cst_24 = arith.constant dense<0.000000e+00> : vector<2x128xf32>
    %66 = tpu.matmul %65, %3, %cst_24 {dimension_numbers = #tpu.dot_dimension_numbers<[1], [0], [0], [1], [0, 0, 1, 1], [], []>} : vector<2x32xf32>, vector<32x128xf32>, vector<2x128xf32> -> vector<2x128xf32>
    %67 = vector.extract_strided_slice %29 {offsets = [2, 0], sizes = [2, 128], strides = [1, 1]} : vector<16x128xf32> to vector<2x128xf32>
    %68 = arith.addf %67, %47 : vector<2x128xf32>
    %69 = math.tanh %68 : vector<2x128xf32>
    %70 = vector.extract_strided_slice %69 {offsets = [0, 0], sizes = [2, 96], strides = [1, 1]} : vector<2x128xf32> to vector<2x96xf32>
    %cst_25 = arith.constant 5.000000e-01 : f32
    %71 = vector.broadcast %cst_25 : f32 to vector<2x96xf32>
    %72 = arith.mulf %71, %70 : vector<2x96xf32>
    %cst_26 = arith.constant 5.000000e-01 : f32
    %73 = vector.broadcast %cst_26 : f32 to vector<2x96xf32>
    %74 = arith.addf %72, %73 : vector<2x96xf32>
    %75 = vector.extract_strided_slice %74 {offsets = [0, 0], sizes = [2, 32], strides = [1, 1]} : vector<2x96xf32> to vector<2x32xf32>
    %76 = vector.extract_strided_slice %74 {offsets = [0, 32], sizes = [2, 32], strides = [1, 1]} : vector<2x96xf32> to vector<2x32xf32>
    %77 = vector.extract_strided_slice %74 {offsets = [0, 64], sizes = [2, 32], strides = [1, 1]} : vector<2x96xf32> to vector<2x32xf32>
    %78 = vector.extract_strided_slice %69 {offsets = [0, 96], sizes = [2, 32], strides = [1, 1]} : vector<2x128xf32> to vector<2x32xf32>
    %79 = arith.mulf %76, %44 : vector<2x32xf32>
    %80 = arith.mulf %75, %78 : vector<2x32xf32>
    %81 = arith.addf %79, %80 : vector<2x32xf32>
    %82 = math.tanh %81 : vector<2x32xf32>
    %83 = arith.mulf %77, %82 : vector<2x32xf32>
    %cst_27 = arith.constant dense<0.000000e+00> : vector<2x128xf32>
    %84 = tpu.matmul %83, %1, %cst_27 {dimension_numbers = #tpu.dot_dimension_numbers<[1], [0], [0], [1], [0, 0, 1, 1], [], []>} : vector<2x32xf32>, vector<32x128xf32>, vector<2x128xf32> -> vector<2x128xf32>
    %cst_28 = arith.constant dense<0.000000e+00> : vector<2x128xf32>
    %85 = tpu.matmul %83, %2, %cst_28 {dimension_numbers = #tpu.dot_dimension_numbers<[1], [0], [0], [1], [0, 0, 1, 1], [], []>} : vector<2x32xf32>, vector<32x128xf32>, vector<2x128xf32> -> vector<2x128xf32>
    %86 = arith.addf %85, %66 : vector<2x128xf32>
    %87 = arith.addf %86, %11 : vector<2x128xf32>
    %88 = math.tanh %87 : vector<2x128xf32>
    %89 = vector.extract_strided_slice %88 {offsets = [0, 0], sizes = [2, 96], strides = [1, 1]} : vector<2x128xf32> to vector<2x96xf32>
    %cst_29 = arith.constant 5.000000e-01 : f32
    %90 = vector.broadcast %cst_29 : f32 to vector<2x96xf32>
    %91 = arith.mulf %90, %89 : vector<2x96xf32>
    %cst_30 = arith.constant 5.000000e-01 : f32
    %92 = vector.broadcast %cst_30 : f32 to vector<2x96xf32>
    %93 = arith.addf %91, %92 : vector<2x96xf32>
    %94 = vector.extract_strided_slice %93 {offsets = [0, 0], sizes = [2, 32], strides = [1, 1]} : vector<2x96xf32> to vector<2x32xf32>
    %95 = vector.extract_strided_slice %93 {offsets = [0, 32], sizes = [2, 32], strides = [1, 1]} : vector<2x96xf32> to vector<2x32xf32>
    %96 = vector.extract_strided_slice %93 {offsets = [0, 64], sizes = [2, 32], strides = [1, 1]} : vector<2x96xf32> to vector<2x32xf32>
    %97 = vector.extract_strided_slice %88 {offsets = [0, 96], sizes = [2, 32], strides = [1, 1]} : vector<2x128xf32> to vector<2x32xf32>
    %98 = arith.mulf %95, %63 : vector<2x32xf32>
    %99 = arith.mulf %94, %97 : vector<2x32xf32>
    %100 = arith.addf %98, %99 : vector<2x32xf32>
    %101 = math.tanh %100 : vector<2x32xf32>
    %102 = arith.mulf %96, %101 : vector<2x32xf32>
    %cst_31 = arith.constant dense<0.000000e+00> : vector<2x128xf32>
    %103 = tpu.matmul %102, %3, %cst_31 {dimension_numbers = #tpu.dot_dimension_numbers<[1], [0], [0], [1], [0, 0, 1, 1], [], []>} : vector<2x32xf32>, vector<32x128xf32>, vector<2x128xf32> -> vector<2x128xf32>
    %104 = vector.extract_strided_slice %29 {offsets = [4, 0], sizes = [2, 128], strides = [1, 1]} : vector<16x128xf32> to vector<2x128xf32>
    %105 = arith.addf %104, %84 : vector<2x128xf32>
    %106 = math.tanh %105 : vector<2x128xf32>
    %107 = vector.extract_strided_slice %106 {offsets = [0, 0], sizes = [2, 96], strides = [1, 1]} : vector<2x128xf32> to vector<2x96xf32>
    %cst_32 = arith.constant 5.000000e-01 : f32
    %108 = vector.broadcast %cst_32 : f32 to vector<2x96xf32>
    %109 = arith.mulf %108, %107 : vector<2x96xf32>
    %cst_33 = arith.constant 5.000000e-01 : f32
    %110 = vector.broadcast %cst_33 : f32 to vector<2x96xf32>
    %111 = arith.addf %109, %110 : vector<2x96xf32>
    %112 = vector.extract_strided_slice %111 {offsets = [0, 0], sizes = [2, 32], strides = [1, 1]} : vector<2x96xf32> to vector<2x32xf32>
    %113 = vector.extract_strided_slice %111 {offsets = [0, 32], sizes = [2, 32], strides = [1, 1]} : vector<2x96xf32> to vector<2x32xf32>
    %114 = vector.extract_strided_slice %111 {offsets = [0, 64], sizes = [2, 32], strides = [1, 1]} : vector<2x96xf32> to vector<2x32xf32>
    %115 = vector.extract_strided_slice %106 {offsets = [0, 96], sizes = [2, 32], strides = [1, 1]} : vector<2x128xf32> to vector<2x32xf32>
    %116 = arith.mulf %113, %81 : vector<2x32xf32>
    %117 = arith.mulf %112, %115 : vector<2x32xf32>
    %118 = arith.addf %116, %117 : vector<2x32xf32>
    %119 = math.tanh %118 : vector<2x32xf32>
    %120 = arith.mulf %114, %119 : vector<2x32xf32>
    %cst_34 = arith.constant dense<0.000000e+00> : vector<2x128xf32>
    %121 = tpu.matmul %120, %1, %cst_34 {dimension_numbers = #tpu.dot_dimension_numbers<[1], [0], [0], [1], [0, 0, 1, 1], [], []>} : vector<2x32xf32>, vector<32x128xf32>, vector<2x128xf32> -> vector<2x128xf32>
    %cst_35 = arith.constant dense<0.000000e+00> : vector<2x128xf32>
    %122 = tpu.matmul %120, %2, %cst_35 {dimension_numbers = #tpu.dot_dimension_numbers<[1], [0], [0], [1], [0, 0, 1, 1], [], []>} : vector<2x32xf32>, vector<32x128xf32>, vector<2x128xf32> -> vector<2x128xf32>
    %123 = arith.addf %122, %103 : vector<2x128xf32>
    %124 = arith.addf %123, %11 : vector<2x128xf32>
    %125 = math.tanh %124 : vector<2x128xf32>
    %126 = vector.extract_strided_slice %125 {offsets = [0, 0], sizes = [2, 96], strides = [1, 1]} : vector<2x128xf32> to vector<2x96xf32>
    %cst_36 = arith.constant 5.000000e-01 : f32
    %127 = vector.broadcast %cst_36 : f32 to vector<2x96xf32>
    %128 = arith.mulf %127, %126 : vector<2x96xf32>
    %cst_37 = arith.constant 5.000000e-01 : f32
    %129 = vector.broadcast %cst_37 : f32 to vector<2x96xf32>
    %130 = arith.addf %128, %129 : vector<2x96xf32>
    %131 = vector.extract_strided_slice %130 {offsets = [0, 0], sizes = [2, 32], strides = [1, 1]} : vector<2x96xf32> to vector<2x32xf32>
    %132 = vector.extract_strided_slice %130 {offsets = [0, 32], sizes = [2, 32], strides = [1, 1]} : vector<2x96xf32> to vector<2x32xf32>
    %133 = vector.extract_strided_slice %130 {offsets = [0, 64], sizes = [2, 32], strides = [1, 1]} : vector<2x96xf32> to vector<2x32xf32>
    %134 = vector.extract_strided_slice %125 {offsets = [0, 96], sizes = [2, 32], strides = [1, 1]} : vector<2x128xf32> to vector<2x32xf32>
    %135 = arith.mulf %132, %100 : vector<2x32xf32>
    %136 = arith.mulf %131, %134 : vector<2x32xf32>
    %137 = arith.addf %135, %136 : vector<2x32xf32>
    %138 = math.tanh %137 : vector<2x32xf32>
    %139 = arith.mulf %133, %138 : vector<2x32xf32>
    %cst_38 = arith.constant dense<0.000000e+00> : vector<2x128xf32>
    %140 = tpu.matmul %139, %3, %cst_38 {dimension_numbers = #tpu.dot_dimension_numbers<[1], [0], [0], [1], [0, 0, 1, 1], [], []>} : vector<2x32xf32>, vector<32x128xf32>, vector<2x128xf32> -> vector<2x128xf32>
    %141 = vector.extract_strided_slice %29 {offsets = [6, 0], sizes = [2, 128], strides = [1, 1]} : vector<16x128xf32> to vector<2x128xf32>
    %142 = arith.addf %141, %121 : vector<2x128xf32>
    %143 = math.tanh %142 : vector<2x128xf32>
    %144 = vector.extract_strided_slice %143 {offsets = [0, 0], sizes = [2, 96], strides = [1, 1]} : vector<2x128xf32> to vector<2x96xf32>
    %cst_39 = arith.constant 5.000000e-01 : f32
    %145 = vector.broadcast %cst_39 : f32 to vector<2x96xf32>
    %146 = arith.mulf %145, %144 : vector<2x96xf32>
    %cst_40 = arith.constant 5.000000e-01 : f32
    %147 = vector.broadcast %cst_40 : f32 to vector<2x96xf32>
    %148 = arith.addf %146, %147 : vector<2x96xf32>
    %149 = vector.extract_strided_slice %148 {offsets = [0, 0], sizes = [2, 32], strides = [1, 1]} : vector<2x96xf32> to vector<2x32xf32>
    %150 = vector.extract_strided_slice %148 {offsets = [0, 32], sizes = [2, 32], strides = [1, 1]} : vector<2x96xf32> to vector<2x32xf32>
    %151 = vector.extract_strided_slice %148 {offsets = [0, 64], sizes = [2, 32], strides = [1, 1]} : vector<2x96xf32> to vector<2x32xf32>
    %152 = vector.extract_strided_slice %143 {offsets = [0, 96], sizes = [2, 32], strides = [1, 1]} : vector<2x128xf32> to vector<2x32xf32>
    %153 = arith.mulf %150, %118 : vector<2x32xf32>
    %154 = arith.mulf %149, %152 : vector<2x32xf32>
    %155 = arith.addf %153, %154 : vector<2x32xf32>
    %156 = math.tanh %155 : vector<2x32xf32>
    %157 = arith.mulf %151, %156 : vector<2x32xf32>
    %cst_41 = arith.constant dense<0.000000e+00> : vector<2x128xf32>
    %158 = tpu.matmul %157, %1, %cst_41 {dimension_numbers = #tpu.dot_dimension_numbers<[1], [0], [0], [1], [0, 0, 1, 1], [], []>} : vector<2x32xf32>, vector<32x128xf32>, vector<2x128xf32> -> vector<2x128xf32>
    %cst_42 = arith.constant dense<0.000000e+00> : vector<2x128xf32>
    %159 = tpu.matmul %157, %2, %cst_42 {dimension_numbers = #tpu.dot_dimension_numbers<[1], [0], [0], [1], [0, 0, 1, 1], [], []>} : vector<2x32xf32>, vector<32x128xf32>, vector<2x128xf32> -> vector<2x128xf32>
    %160 = arith.addf %159, %140 : vector<2x128xf32>
    %161 = arith.addf %160, %11 : vector<2x128xf32>
    %162 = math.tanh %161 : vector<2x128xf32>
    %163 = vector.extract_strided_slice %162 {offsets = [0, 0], sizes = [2, 96], strides = [1, 1]} : vector<2x128xf32> to vector<2x96xf32>
    %cst_43 = arith.constant 5.000000e-01 : f32
    %164 = vector.broadcast %cst_43 : f32 to vector<2x96xf32>
    %165 = arith.mulf %164, %163 : vector<2x96xf32>
    %cst_44 = arith.constant 5.000000e-01 : f32
    %166 = vector.broadcast %cst_44 : f32 to vector<2x96xf32>
    %167 = arith.addf %165, %166 : vector<2x96xf32>
    %168 = vector.extract_strided_slice %167 {offsets = [0, 0], sizes = [2, 32], strides = [1, 1]} : vector<2x96xf32> to vector<2x32xf32>
    %169 = vector.extract_strided_slice %167 {offsets = [0, 32], sizes = [2, 32], strides = [1, 1]} : vector<2x96xf32> to vector<2x32xf32>
    %170 = vector.extract_strided_slice %167 {offsets = [0, 64], sizes = [2, 32], strides = [1, 1]} : vector<2x96xf32> to vector<2x32xf32>
    %171 = vector.extract_strided_slice %162 {offsets = [0, 96], sizes = [2, 32], strides = [1, 1]} : vector<2x128xf32> to vector<2x32xf32>
    %172 = arith.mulf %169, %137 : vector<2x32xf32>
    %173 = arith.mulf %168, %171 : vector<2x32xf32>
    %174 = arith.addf %172, %173 : vector<2x32xf32>
    %175 = math.tanh %174 : vector<2x32xf32>
    %176 = arith.mulf %170, %175 : vector<2x32xf32>
    %cst_45 = arith.constant dense<0.000000e+00> : vector<2x128xf32>
    %177 = tpu.matmul %176, %3, %cst_45 {dimension_numbers = #tpu.dot_dimension_numbers<[1], [0], [0], [1], [0, 0, 1, 1], [], []>} : vector<2x32xf32>, vector<32x128xf32>, vector<2x128xf32> -> vector<2x128xf32>
    %178 = vector.extract_strided_slice %29 {offsets = [8, 0], sizes = [2, 128], strides = [1, 1]} : vector<16x128xf32> to vector<2x128xf32>
    %179 = arith.addf %178, %158 : vector<2x128xf32>
    %180 = math.tanh %179 : vector<2x128xf32>
    %181 = vector.extract_strided_slice %180 {offsets = [0, 0], sizes = [2, 96], strides = [1, 1]} : vector<2x128xf32> to vector<2x96xf32>
    %cst_46 = arith.constant 5.000000e-01 : f32
    %182 = vector.broadcast %cst_46 : f32 to vector<2x96xf32>
    %183 = arith.mulf %182, %181 : vector<2x96xf32>
    %cst_47 = arith.constant 5.000000e-01 : f32
    %184 = vector.broadcast %cst_47 : f32 to vector<2x96xf32>
    %185 = arith.addf %183, %184 : vector<2x96xf32>
    %186 = vector.extract_strided_slice %185 {offsets = [0, 0], sizes = [2, 32], strides = [1, 1]} : vector<2x96xf32> to vector<2x32xf32>
    %187 = vector.extract_strided_slice %185 {offsets = [0, 32], sizes = [2, 32], strides = [1, 1]} : vector<2x96xf32> to vector<2x32xf32>
    %188 = vector.extract_strided_slice %185 {offsets = [0, 64], sizes = [2, 32], strides = [1, 1]} : vector<2x96xf32> to vector<2x32xf32>
    %189 = vector.extract_strided_slice %180 {offsets = [0, 96], sizes = [2, 32], strides = [1, 1]} : vector<2x128xf32> to vector<2x32xf32>
    %190 = arith.mulf %187, %155 : vector<2x32xf32>
    %191 = arith.mulf %186, %189 : vector<2x32xf32>
    %192 = arith.addf %190, %191 : vector<2x32xf32>
    %193 = math.tanh %192 : vector<2x32xf32>
    %194 = arith.mulf %188, %193 : vector<2x32xf32>
    %cst_48 = arith.constant dense<0.000000e+00> : vector<2x128xf32>
    %195 = tpu.matmul %194, %1, %cst_48 {dimension_numbers = #tpu.dot_dimension_numbers<[1], [0], [0], [1], [0, 0, 1, 1], [], []>} : vector<2x32xf32>, vector<32x128xf32>, vector<2x128xf32> -> vector<2x128xf32>
    %cst_49 = arith.constant dense<0.000000e+00> : vector<2x128xf32>
    %196 = tpu.matmul %194, %2, %cst_49 {dimension_numbers = #tpu.dot_dimension_numbers<[1], [0], [0], [1], [0, 0, 1, 1], [], []>} : vector<2x32xf32>, vector<32x128xf32>, vector<2x128xf32> -> vector<2x128xf32>
    %197 = arith.addf %196, %177 : vector<2x128xf32>
    %198 = arith.addf %197, %11 : vector<2x128xf32>
    %199 = math.tanh %198 : vector<2x128xf32>
    %200 = vector.extract_strided_slice %199 {offsets = [0, 0], sizes = [2, 96], strides = [1, 1]} : vector<2x128xf32> to vector<2x96xf32>
    %cst_50 = arith.constant 5.000000e-01 : f32
    %201 = vector.broadcast %cst_50 : f32 to vector<2x96xf32>
    %202 = arith.mulf %201, %200 : vector<2x96xf32>
    %cst_51 = arith.constant 5.000000e-01 : f32
    %203 = vector.broadcast %cst_51 : f32 to vector<2x96xf32>
    %204 = arith.addf %202, %203 : vector<2x96xf32>
    %205 = vector.extract_strided_slice %204 {offsets = [0, 0], sizes = [2, 32], strides = [1, 1]} : vector<2x96xf32> to vector<2x32xf32>
    %206 = vector.extract_strided_slice %204 {offsets = [0, 32], sizes = [2, 32], strides = [1, 1]} : vector<2x96xf32> to vector<2x32xf32>
    %207 = vector.extract_strided_slice %204 {offsets = [0, 64], sizes = [2, 32], strides = [1, 1]} : vector<2x96xf32> to vector<2x32xf32>
    %208 = vector.extract_strided_slice %199 {offsets = [0, 96], sizes = [2, 32], strides = [1, 1]} : vector<2x128xf32> to vector<2x32xf32>
    %209 = arith.mulf %206, %174 : vector<2x32xf32>
    %210 = arith.mulf %205, %208 : vector<2x32xf32>
    %211 = arith.addf %209, %210 : vector<2x32xf32>
    %212 = math.tanh %211 : vector<2x32xf32>
    %213 = arith.mulf %207, %212 : vector<2x32xf32>
    %cst_52 = arith.constant dense<0.000000e+00> : vector<2x128xf32>
    %214 = tpu.matmul %213, %3, %cst_52 {dimension_numbers = #tpu.dot_dimension_numbers<[1], [0], [0], [1], [0, 0, 1, 1], [], []>} : vector<2x32xf32>, vector<32x128xf32>, vector<2x128xf32> -> vector<2x128xf32>
    %215 = vector.extract_strided_slice %29 {offsets = [10, 0], sizes = [2, 128], strides = [1, 1]} : vector<16x128xf32> to vector<2x128xf32>
    %216 = arith.addf %215, %195 : vector<2x128xf32>
    %217 = math.tanh %216 : vector<2x128xf32>
    %218 = vector.extract_strided_slice %217 {offsets = [0, 0], sizes = [2, 96], strides = [1, 1]} : vector<2x128xf32> to vector<2x96xf32>
    %cst_53 = arith.constant 5.000000e-01 : f32
    %219 = vector.broadcast %cst_53 : f32 to vector<2x96xf32>
    %220 = arith.mulf %219, %218 : vector<2x96xf32>
    %cst_54 = arith.constant 5.000000e-01 : f32
    %221 = vector.broadcast %cst_54 : f32 to vector<2x96xf32>
    %222 = arith.addf %220, %221 : vector<2x96xf32>
    %223 = vector.extract_strided_slice %222 {offsets = [0, 0], sizes = [2, 32], strides = [1, 1]} : vector<2x96xf32> to vector<2x32xf32>
    %224 = vector.extract_strided_slice %222 {offsets = [0, 32], sizes = [2, 32], strides = [1, 1]} : vector<2x96xf32> to vector<2x32xf32>
    %225 = vector.extract_strided_slice %222 {offsets = [0, 64], sizes = [2, 32], strides = [1, 1]} : vector<2x96xf32> to vector<2x32xf32>
    %226 = vector.extract_strided_slice %217 {offsets = [0, 96], sizes = [2, 32], strides = [1, 1]} : vector<2x128xf32> to vector<2x32xf32>
    %227 = arith.mulf %224, %192 : vector<2x32xf32>
    %228 = arith.mulf %223, %226 : vector<2x32xf32>
    %229 = arith.addf %227, %228 : vector<2x32xf32>
    %230 = math.tanh %229 : vector<2x32xf32>
    %231 = arith.mulf %225, %230 : vector<2x32xf32>
    %cst_55 = arith.constant dense<0.000000e+00> : vector<2x128xf32>
    %232 = tpu.matmul %231, %1, %cst_55 {dimension_numbers = #tpu.dot_dimension_numbers<[1], [0], [0], [1], [0, 0, 1, 1], [], []>} : vector<2x32xf32>, vector<32x128xf32>, vector<2x128xf32> -> vector<2x128xf32>
    %cst_56 = arith.constant dense<0.000000e+00> : vector<2x128xf32>
    %233 = tpu.matmul %231, %2, %cst_56 {dimension_numbers = #tpu.dot_dimension_numbers<[1], [0], [0], [1], [0, 0, 1, 1], [], []>} : vector<2x32xf32>, vector<32x128xf32>, vector<2x128xf32> -> vector<2x128xf32>
    %234 = arith.addf %233, %214 : vector<2x128xf32>
    %235 = arith.addf %234, %11 : vector<2x128xf32>
    %236 = math.tanh %235 : vector<2x128xf32>
    %237 = vector.extract_strided_slice %236 {offsets = [0, 0], sizes = [2, 96], strides = [1, 1]} : vector<2x128xf32> to vector<2x96xf32>
    %cst_57 = arith.constant 5.000000e-01 : f32
    %238 = vector.broadcast %cst_57 : f32 to vector<2x96xf32>
    %239 = arith.mulf %238, %237 : vector<2x96xf32>
    %cst_58 = arith.constant 5.000000e-01 : f32
    %240 = vector.broadcast %cst_58 : f32 to vector<2x96xf32>
    %241 = arith.addf %239, %240 : vector<2x96xf32>
    %242 = vector.extract_strided_slice %241 {offsets = [0, 0], sizes = [2, 32], strides = [1, 1]} : vector<2x96xf32> to vector<2x32xf32>
    %243 = vector.extract_strided_slice %241 {offsets = [0, 32], sizes = [2, 32], strides = [1, 1]} : vector<2x96xf32> to vector<2x32xf32>
    %244 = vector.extract_strided_slice %241 {offsets = [0, 64], sizes = [2, 32], strides = [1, 1]} : vector<2x96xf32> to vector<2x32xf32>
    %245 = vector.extract_strided_slice %236 {offsets = [0, 96], sizes = [2, 32], strides = [1, 1]} : vector<2x128xf32> to vector<2x32xf32>
    %246 = arith.mulf %243, %211 : vector<2x32xf32>
    %247 = arith.mulf %242, %245 : vector<2x32xf32>
    %248 = arith.addf %246, %247 : vector<2x32xf32>
    %249 = math.tanh %248 : vector<2x32xf32>
    %250 = arith.mulf %244, %249 : vector<2x32xf32>
    %cst_59 = arith.constant dense<0.000000e+00> : vector<2x128xf32>
    %251 = tpu.matmul %250, %3, %cst_59 {dimension_numbers = #tpu.dot_dimension_numbers<[1], [0], [0], [1], [0, 0, 1, 1], [], []>} : vector<2x32xf32>, vector<32x128xf32>, vector<2x128xf32> -> vector<2x128xf32>
    %252 = vector.extract_strided_slice %29 {offsets = [12, 0], sizes = [2, 128], strides = [1, 1]} : vector<16x128xf32> to vector<2x128xf32>
    %253 = arith.addf %252, %232 : vector<2x128xf32>
    %254 = math.tanh %253 : vector<2x128xf32>
    %255 = vector.extract_strided_slice %254 {offsets = [0, 0], sizes = [2, 96], strides = [1, 1]} : vector<2x128xf32> to vector<2x96xf32>
    %cst_60 = arith.constant 5.000000e-01 : f32
    %256 = vector.broadcast %cst_60 : f32 to vector<2x96xf32>
    %257 = arith.mulf %256, %255 : vector<2x96xf32>
    %cst_61 = arith.constant 5.000000e-01 : f32
    %258 = vector.broadcast %cst_61 : f32 to vector<2x96xf32>
    %259 = arith.addf %257, %258 : vector<2x96xf32>
    %260 = vector.extract_strided_slice %259 {offsets = [0, 0], sizes = [2, 32], strides = [1, 1]} : vector<2x96xf32> to vector<2x32xf32>
    %261 = vector.extract_strided_slice %259 {offsets = [0, 32], sizes = [2, 32], strides = [1, 1]} : vector<2x96xf32> to vector<2x32xf32>
    %262 = vector.extract_strided_slice %259 {offsets = [0, 64], sizes = [2, 32], strides = [1, 1]} : vector<2x96xf32> to vector<2x32xf32>
    %263 = vector.extract_strided_slice %254 {offsets = [0, 96], sizes = [2, 32], strides = [1, 1]} : vector<2x128xf32> to vector<2x32xf32>
    %264 = arith.mulf %261, %229 : vector<2x32xf32>
    %265 = arith.mulf %260, %263 : vector<2x32xf32>
    %266 = arith.addf %264, %265 : vector<2x32xf32>
    %267 = math.tanh %266 : vector<2x32xf32>
    %268 = arith.mulf %262, %267 : vector<2x32xf32>
    %cst_62 = arith.constant dense<0.000000e+00> : vector<2x128xf32>
    %269 = tpu.matmul %268, %1, %cst_62 {dimension_numbers = #tpu.dot_dimension_numbers<[1], [0], [0], [1], [0, 0, 1, 1], [], []>} : vector<2x32xf32>, vector<32x128xf32>, vector<2x128xf32> -> vector<2x128xf32>
    %cst_63 = arith.constant dense<0.000000e+00> : vector<2x128xf32>
    %270 = tpu.matmul %268, %2, %cst_63 {dimension_numbers = #tpu.dot_dimension_numbers<[1], [0], [0], [1], [0, 0, 1, 1], [], []>} : vector<2x32xf32>, vector<32x128xf32>, vector<2x128xf32> -> vector<2x128xf32>
    %271 = arith.addf %270, %251 : vector<2x128xf32>
    %272 = arith.addf %271, %11 : vector<2x128xf32>
    %273 = math.tanh %272 : vector<2x128xf32>
    %274 = vector.extract_strided_slice %273 {offsets = [0, 0], sizes = [2, 96], strides = [1, 1]} : vector<2x128xf32> to vector<2x96xf32>
    %cst_64 = arith.constant 5.000000e-01 : f32
    %275 = vector.broadcast %cst_64 : f32 to vector<2x96xf32>
    %276 = arith.mulf %275, %274 : vector<2x96xf32>
    %cst_65 = arith.constant 5.000000e-01 : f32
    %277 = vector.broadcast %cst_65 : f32 to vector<2x96xf32>
    %278 = arith.addf %276, %277 : vector<2x96xf32>
    %279 = vector.extract_strided_slice %278 {offsets = [0, 0], sizes = [2, 32], strides = [1, 1]} : vector<2x96xf32> to vector<2x32xf32>
    %280 = vector.extract_strided_slice %278 {offsets = [0, 32], sizes = [2, 32], strides = [1, 1]} : vector<2x96xf32> to vector<2x32xf32>
    %281 = vector.extract_strided_slice %278 {offsets = [0, 64], sizes = [2, 32], strides = [1, 1]} : vector<2x96xf32> to vector<2x32xf32>
    %282 = vector.extract_strided_slice %273 {offsets = [0, 96], sizes = [2, 32], strides = [1, 1]} : vector<2x128xf32> to vector<2x32xf32>
    %283 = arith.mulf %280, %248 : vector<2x32xf32>
    %284 = arith.mulf %279, %282 : vector<2x32xf32>
    %285 = arith.addf %283, %284 : vector<2x32xf32>
    %286 = math.tanh %285 : vector<2x32xf32>
    %287 = arith.mulf %281, %286 : vector<2x32xf32>
    %cst_66 = arith.constant dense<0.000000e+00> : vector<2x128xf32>
    %288 = tpu.matmul %287, %3, %cst_66 {dimension_numbers = #tpu.dot_dimension_numbers<[1], [0], [0], [1], [0, 0, 1, 1], [], []>} : vector<2x32xf32>, vector<32x128xf32>, vector<2x128xf32> -> vector<2x128xf32>
    %289 = vector.extract_strided_slice %29 {offsets = [14, 0], sizes = [2, 128], strides = [1, 1]} : vector<16x128xf32> to vector<2x128xf32>
    %290 = arith.addf %289, %269 : vector<2x128xf32>
    %291 = math.tanh %290 : vector<2x128xf32>
    %292 = vector.extract_strided_slice %291 {offsets = [0, 0], sizes = [2, 96], strides = [1, 1]} : vector<2x128xf32> to vector<2x96xf32>
    %cst_67 = arith.constant 5.000000e-01 : f32
    %293 = vector.broadcast %cst_67 : f32 to vector<2x96xf32>
    %294 = arith.mulf %293, %292 : vector<2x96xf32>
    %cst_68 = arith.constant 5.000000e-01 : f32
    %295 = vector.broadcast %cst_68 : f32 to vector<2x96xf32>
    %296 = arith.addf %294, %295 : vector<2x96xf32>
    %297 = vector.extract_strided_slice %296 {offsets = [0, 0], sizes = [2, 32], strides = [1, 1]} : vector<2x96xf32> to vector<2x32xf32>
    %298 = vector.extract_strided_slice %296 {offsets = [0, 32], sizes = [2, 32], strides = [1, 1]} : vector<2x96xf32> to vector<2x32xf32>
    %299 = vector.extract_strided_slice %296 {offsets = [0, 64], sizes = [2, 32], strides = [1, 1]} : vector<2x96xf32> to vector<2x32xf32>
    %300 = vector.extract_strided_slice %291 {offsets = [0, 96], sizes = [2, 32], strides = [1, 1]} : vector<2x128xf32> to vector<2x32xf32>
    %301 = arith.mulf %298, %266 : vector<2x32xf32>
    %302 = arith.mulf %297, %300 : vector<2x32xf32>
    %303 = arith.addf %301, %302 : vector<2x32xf32>
    %304 = math.tanh %303 : vector<2x32xf32>
    %305 = arith.mulf %299, %304 : vector<2x32xf32>
    %cst_69 = arith.constant dense<0.000000e+00> : vector<2x128xf32>
    %306 = tpu.matmul %305, %1, %cst_69 {dimension_numbers = #tpu.dot_dimension_numbers<[1], [0], [0], [1], [0, 0, 1, 1], [], []>} : vector<2x32xf32>, vector<32x128xf32>, vector<2x128xf32> -> vector<2x128xf32>
    %cst_70 = arith.constant dense<0.000000e+00> : vector<2x128xf32>
    %307 = tpu.matmul %305, %2, %cst_70 {dimension_numbers = #tpu.dot_dimension_numbers<[1], [0], [0], [1], [0, 0, 1, 1], [], []>} : vector<2x32xf32>, vector<32x128xf32>, vector<2x128xf32> -> vector<2x128xf32>
    %308 = arith.addf %307, %288 : vector<2x128xf32>
    %309 = arith.addf %308, %11 : vector<2x128xf32>
    %310 = math.tanh %309 : vector<2x128xf32>
    %311 = vector.extract_strided_slice %310 {offsets = [0, 0], sizes = [2, 96], strides = [1, 1]} : vector<2x128xf32> to vector<2x96xf32>
    %cst_71 = arith.constant 5.000000e-01 : f32
    %312 = vector.broadcast %cst_71 : f32 to vector<2x96xf32>
    %313 = arith.mulf %312, %311 : vector<2x96xf32>
    %cst_72 = arith.constant 5.000000e-01 : f32
    %314 = vector.broadcast %cst_72 : f32 to vector<2x96xf32>
    %315 = arith.addf %313, %314 : vector<2x96xf32>
    %316 = vector.extract_strided_slice %315 {offsets = [0, 0], sizes = [2, 32], strides = [1, 1]} : vector<2x96xf32> to vector<2x32xf32>
    %317 = vector.extract_strided_slice %315 {offsets = [0, 32], sizes = [2, 32], strides = [1, 1]} : vector<2x96xf32> to vector<2x32xf32>
    %318 = vector.extract_strided_slice %315 {offsets = [0, 64], sizes = [2, 32], strides = [1, 1]} : vector<2x96xf32> to vector<2x32xf32>
    %319 = vector.extract_strided_slice %310 {offsets = [0, 96], sizes = [2, 32], strides = [1, 1]} : vector<2x128xf32> to vector<2x32xf32>
    %320 = arith.mulf %317, %285 : vector<2x32xf32>
    %321 = arith.mulf %316, %319 : vector<2x32xf32>
    %322 = arith.addf %320, %321 : vector<2x32xf32>
    %323 = math.tanh %322 : vector<2x32xf32>
    %324 = arith.mulf %318, %323 : vector<2x32xf32>
    %cst_73 = arith.constant dense<0.000000e+00> : vector<2x128xf32>
    %325 = tpu.matmul %324, %3, %cst_73 {dimension_numbers = #tpu.dot_dimension_numbers<[1], [0], [0], [1], [0, 0, 1, 1], [], []>} : vector<2x32xf32>, vector<32x128xf32>, vector<2x128xf32> -> vector<2x128xf32>
    %cst_74 = arith.constant dense<0.000000e+00> : vector<2x64xf32>
    %326 = tpu.matmul %324, %5, %cst_74 {dimension_numbers = #tpu.dot_dimension_numbers<[1], [0], [0], [1], [0, 0, 1, 1], [], []>} : vector<2x32xf32>, vector<32x64xf32>, vector<2x64xf32> -> vector<2x64xf32>
    %327 = arith.addf %326, %17 : vector<2x64xf32>
    %328 = math.tanh %327 : vector<2x64xf32>
    %cst_75 = arith.constant dense<0.000000e+00> : vector<2x64xf32>
    %329 = tpu.matmul %328, %6, %cst_75 {dimension_numbers = #tpu.dot_dimension_numbers<[1], [0], [0], [1], [0, 0, 1, 1], [], []>} : vector<2x64xf32>, vector<64x64xf32>, vector<2x64xf32> -> vector<2x64xf32>
    %330 = arith.addf %329, %20 : vector<2x64xf32>
    %331 = math.tanh %330 : vector<2x64xf32>
    %cst_76 = arith.constant dense<0.000000e+00> : vector<2x128xf32>
    %332 = tpu.matmul %331, %4, %cst_76 {dimension_numbers = #tpu.dot_dimension_numbers<[1], [0], [0], [1], [0, 0, 1, 1], [], []>} : vector<2x64xf32>, vector<64x128xf32>, vector<2x128xf32> -> vector<2x128xf32>
    %333 = arith.addf %332, %306 : vector<2x128xf32>
    %334 = arith.addf %333, %14 : vector<2x128xf32>
    %335 = math.tanh %334 : vector<2x128xf32>
    %336 = vector.extract_strided_slice %335 {offsets = [0, 0], sizes = [2, 96], strides = [1, 1]} : vector<2x128xf32> to vector<2x96xf32>
    %cst_77 = arith.constant 5.000000e-01 : f32
    %337 = vector.broadcast %cst_77 : f32 to vector<2x96xf32>
    %338 = arith.mulf %337, %336 : vector<2x96xf32>
    %cst_78 = arith.constant 5.000000e-01 : f32
    %339 = vector.broadcast %cst_78 : f32 to vector<2x96xf32>
    %340 = arith.addf %338, %339 : vector<2x96xf32>
    %341 = vector.extract_strided_slice %340 {offsets = [0, 0], sizes = [2, 32], strides = [1, 1]} : vector<2x96xf32> to vector<2x32xf32>
    %342 = vector.extract_strided_slice %340 {offsets = [0, 32], sizes = [2, 32], strides = [1, 1]} : vector<2x96xf32> to vector<2x32xf32>
    %343 = vector.extract_strided_slice %340 {offsets = [0, 64], sizes = [2, 32], strides = [1, 1]} : vector<2x96xf32> to vector<2x32xf32>
    %344 = vector.extract_strided_slice %335 {offsets = [0, 96], sizes = [2, 32], strides = [1, 1]} : vector<2x128xf32> to vector<2x32xf32>
    %345 = arith.mulf %342, %303 : vector<2x32xf32>
    %346 = arith.mulf %341, %344 : vector<2x32xf32>
    %347 = arith.addf %345, %346 : vector<2x32xf32>
    %348 = math.tanh %347 : vector<2x32xf32>
    %349 = arith.mulf %343, %348 : vector<2x32xf32>
    %cst_79 = arith.constant dense<0.000000e+00> : vector<2x128xf32>
    %350 = tpu.matmul %349, %1, %cst_79 {dimension_numbers = #tpu.dot_dimension_numbers<[1], [0], [0], [1], [0, 0, 1, 1], [], []>} : vector<2x32xf32>, vector<32x128xf32>, vector<2x128xf32> -> vector<2x128xf32>
    %cst_80 = arith.constant dense<0.000000e+00> : vector<2x128xf32>
    %351 = tpu.matmul %349, %2, %cst_80 {dimension_numbers = #tpu.dot_dimension_numbers<[1], [0], [0], [1], [0, 0, 1, 1], [], []>} : vector<2x32xf32>, vector<32x128xf32>, vector<2x128xf32> -> vector<2x128xf32>
    %352 = arith.addf %351, %325 : vector<2x128xf32>
    %353 = arith.addf %352, %11 : vector<2x128xf32>
    %354 = math.tanh %353 : vector<2x128xf32>
    %355 = vector.extract_strided_slice %354 {offsets = [0, 0], sizes = [2, 96], strides = [1, 1]} : vector<2x128xf32> to vector<2x96xf32>
    %cst_81 = arith.constant 5.000000e-01 : f32
    %356 = vector.broadcast %cst_81 : f32 to vector<2x96xf32>
    %357 = arith.mulf %356, %355 : vector<2x96xf32>
    %cst_82 = arith.constant 5.000000e-01 : f32
    %358 = vector.broadcast %cst_82 : f32 to vector<2x96xf32>
    %359 = arith.addf %357, %358 : vector<2x96xf32>
    %360 = vector.extract_strided_slice %359 {offsets = [0, 0], sizes = [2, 32], strides = [1, 1]} : vector<2x96xf32> to vector<2x32xf32>
    %361 = vector.extract_strided_slice %359 {offsets = [0, 32], sizes = [2, 32], strides = [1, 1]} : vector<2x96xf32> to vector<2x32xf32>
    %362 = vector.extract_strided_slice %359 {offsets = [0, 64], sizes = [2, 32], strides = [1, 1]} : vector<2x96xf32> to vector<2x32xf32>
    %363 = vector.extract_strided_slice %354 {offsets = [0, 96], sizes = [2, 32], strides = [1, 1]} : vector<2x128xf32> to vector<2x32xf32>
    %364 = arith.mulf %361, %322 : vector<2x32xf32>
    %365 = arith.mulf %360, %363 : vector<2x32xf32>
    %366 = arith.addf %364, %365 : vector<2x32xf32>
    %367 = math.tanh %366 : vector<2x32xf32>
    %368 = arith.mulf %362, %367 : vector<2x32xf32>
    %cst_83 = arith.constant dense<0.000000e+00> : vector<2x128xf32>
    %369 = tpu.matmul %368, %3, %cst_83 {dimension_numbers = #tpu.dot_dimension_numbers<[1], [0], [0], [1], [0, 0, 1, 1], [], []>} : vector<2x32xf32>, vector<32x128xf32>, vector<2x128xf32> -> vector<2x128xf32>
    %cst_84 = arith.constant dense<0.000000e+00> : vector<2x64xf32>
    %370 = tpu.matmul %368, %5, %cst_84 {dimension_numbers = #tpu.dot_dimension_numbers<[1], [0], [0], [1], [0, 0, 1, 1], [], []>} : vector<2x32xf32>, vector<32x64xf32>, vector<2x64xf32> -> vector<2x64xf32>
    %371 = arith.addf %370, %17 : vector<2x64xf32>
    %372 = math.tanh %371 : vector<2x64xf32>
    %cst_85 = arith.constant dense<0.000000e+00> : vector<2x64xf32>
    %373 = tpu.matmul %372, %6, %cst_85 {dimension_numbers = #tpu.dot_dimension_numbers<[1], [0], [0], [1], [0, 0, 1, 1], [], []>} : vector<2x64xf32>, vector<64x64xf32>, vector<2x64xf32> -> vector<2x64xf32>
    %374 = arith.addf %373, %20 : vector<2x64xf32>
    %375 = math.tanh %374 : vector<2x64xf32>
    %cst_86 = arith.constant dense<0.000000e+00> : vector<2x4xf32>
    %376 = tpu.matmul %375, %7, %cst_86 {dimension_numbers = #tpu.dot_dimension_numbers<[1], [0], [0], [1], [0, 0, 1, 1], [], []>} : vector<2x64xf32>, vector<64x4xf32>, vector<2x4xf32> -> vector<2x4xf32>
    %377 = arith.addf %376, %23 : vector<2x4xf32>
    %cst_87 = arith.constant dense<0.000000e+00> : vector<2x128xf32>
    %378 = tpu.matmul %375, %4, %cst_87 {dimension_numbers = #tpu.dot_dimension_numbers<[1], [0], [0], [1], [0, 0, 1, 1], [], []>} : vector<2x64xf32>, vector<64x128xf32>, vector<2x128xf32> -> vector<2x128xf32>
    %379 = arith.addf %378, %350 : vector<2x128xf32>
    %380 = arith.addf %379, %14 : vector<2x128xf32>
    %381 = math.tanh %380 : vector<2x128xf32>
    %382 = vector.extract_strided_slice %381 {offsets = [0, 0], sizes = [2, 96], strides = [1, 1]} : vector<2x128xf32> to vector<2x96xf32>
    %cst_88 = arith.constant 5.000000e-01 : f32
    %383 = vector.broadcast %cst_88 : f32 to vector<2x96xf32>
    %384 = arith.mulf %383, %382 : vector<2x96xf32>
    %cst_89 = arith.constant 5.000000e-01 : f32
    %385 = vector.broadcast %cst_89 : f32 to vector<2x96xf32>
    %386 = arith.addf %384, %385 : vector<2x96xf32>
    %387 = vector.extract_strided_slice %386 {offsets = [0, 0], sizes = [2, 32], strides = [1, 1]} : vector<2x96xf32> to vector<2x32xf32>
    %388 = vector.extract_strided_slice %386 {offsets = [0, 32], sizes = [2, 32], strides = [1, 1]} : vector<2x96xf32> to vector<2x32xf32>
    %389 = vector.extract_strided_slice %386 {offsets = [0, 64], sizes = [2, 32], strides = [1, 1]} : vector<2x96xf32> to vector<2x32xf32>
    %390 = vector.extract_strided_slice %381 {offsets = [0, 96], sizes = [2, 32], strides = [1, 1]} : vector<2x128xf32> to vector<2x32xf32>
    %391 = arith.mulf %388, %347 : vector<2x32xf32>
    %392 = arith.mulf %387, %390 : vector<2x32xf32>
    %393 = arith.addf %391, %392 : vector<2x32xf32>
    %394 = math.tanh %393 : vector<2x32xf32>
    %395 = arith.mulf %389, %394 : vector<2x32xf32>
    %cst_90 = arith.constant dense<0.000000e+00> : vector<2x128xf32>
    %396 = tpu.matmul %395, %1, %cst_90 {dimension_numbers = #tpu.dot_dimension_numbers<[1], [0], [0], [1], [0, 0, 1, 1], [], []>} : vector<2x32xf32>, vector<32x128xf32>, vector<2x128xf32> -> vector<2x128xf32>
    %cst_91 = arith.constant dense<0.000000e+00> : vector<2x128xf32>
    %397 = tpu.matmul %395, %2, %cst_91 {dimension_numbers = #tpu.dot_dimension_numbers<[1], [0], [0], [1], [0, 0, 1, 1], [], []>} : vector<2x32xf32>, vector<32x128xf32>, vector<2x128xf32> -> vector<2x128xf32>
    %398 = arith.addf %397, %369 : vector<2x128xf32>
    %399 = arith.addf %398, %11 : vector<2x128xf32>
    %400 = math.tanh %399 : vector<2x128xf32>
    %401 = vector.extract_strided_slice %400 {offsets = [0, 0], sizes = [2, 96], strides = [1, 1]} : vector<2x128xf32> to vector<2x96xf32>
    %cst_92 = arith.constant 5.000000e-01 : f32
    %402 = vector.broadcast %cst_92 : f32 to vector<2x96xf32>
    %403 = arith.mulf %402, %401 : vector<2x96xf32>
    %cst_93 = arith.constant 5.000000e-01 : f32
    %404 = vector.broadcast %cst_93 : f32 to vector<2x96xf32>
    %405 = arith.addf %403, %404 : vector<2x96xf32>
    %406 = vector.extract_strided_slice %405 {offsets = [0, 0], sizes = [2, 32], strides = [1, 1]} : vector<2x96xf32> to vector<2x32xf32>
    %407 = vector.extract_strided_slice %405 {offsets = [0, 32], sizes = [2, 32], strides = [1, 1]} : vector<2x96xf32> to vector<2x32xf32>
    %408 = vector.extract_strided_slice %405 {offsets = [0, 64], sizes = [2, 32], strides = [1, 1]} : vector<2x96xf32> to vector<2x32xf32>
    %409 = vector.extract_strided_slice %400 {offsets = [0, 96], sizes = [2, 32], strides = [1, 1]} : vector<2x128xf32> to vector<2x32xf32>
    %410 = arith.mulf %407, %366 : vector<2x32xf32>
    %411 = arith.mulf %406, %409 : vector<2x32xf32>
    %412 = arith.addf %410, %411 : vector<2x32xf32>
    %413 = math.tanh %412 : vector<2x32xf32>
    %414 = arith.mulf %408, %413 : vector<2x32xf32>
    %cst_94 = arith.constant dense<0.000000e+00> : vector<2x128xf32>
    %415 = tpu.matmul %414, %3, %cst_94 {dimension_numbers = #tpu.dot_dimension_numbers<[1], [0], [0], [1], [0, 0, 1, 1], [], []>} : vector<2x32xf32>, vector<32x128xf32>, vector<2x128xf32> -> vector<2x128xf32>
    %cst_95 = arith.constant dense<0.000000e+00> : vector<2x64xf32>
    %416 = tpu.matmul %414, %5, %cst_95 {dimension_numbers = #tpu.dot_dimension_numbers<[1], [0], [0], [1], [0, 0, 1, 1], [], []>} : vector<2x32xf32>, vector<32x64xf32>, vector<2x64xf32> -> vector<2x64xf32>
    %417 = arith.addf %416, %17 : vector<2x64xf32>
    %418 = math.tanh %417 : vector<2x64xf32>
    %cst_96 = arith.constant dense<0.000000e+00> : vector<2x64xf32>
    %419 = tpu.matmul %418, %6, %cst_96 {dimension_numbers = #tpu.dot_dimension_numbers<[1], [0], [0], [1], [0, 0, 1, 1], [], []>} : vector<2x64xf32>, vector<64x64xf32>, vector<2x64xf32> -> vector<2x64xf32>
    %420 = arith.addf %419, %20 : vector<2x64xf32>
    %421 = math.tanh %420 : vector<2x64xf32>
    %cst_97 = arith.constant dense<0.000000e+00> : vector<2x4xf32>
    %422 = tpu.matmul %421, %7, %cst_97 {dimension_numbers = #tpu.dot_dimension_numbers<[1], [0], [0], [1], [0, 0, 1, 1], [], []>} : vector<2x64xf32>, vector<64x4xf32>, vector<2x4xf32> -> vector<2x4xf32>
    %423 = arith.addf %422, %23 : vector<2x4xf32>
    %cst_98 = arith.constant dense<0.000000e+00> : vector<2x128xf32>
    %424 = tpu.matmul %421, %4, %cst_98 {dimension_numbers = #tpu.dot_dimension_numbers<[1], [0], [0], [1], [0, 0, 1, 1], [], []>} : vector<2x64xf32>, vector<64x128xf32>, vector<2x128xf32> -> vector<2x128xf32>
    %425 = arith.addf %424, %396 : vector<2x128xf32>
    %426 = arith.addf %425, %14 : vector<2x128xf32>
    %427 = math.tanh %426 : vector<2x128xf32>
    %428 = vector.extract_strided_slice %427 {offsets = [0, 0], sizes = [2, 96], strides = [1, 1]} : vector<2x128xf32> to vector<2x96xf32>
    %cst_99 = arith.constant 5.000000e-01 : f32
    %429 = vector.broadcast %cst_99 : f32 to vector<2x96xf32>
    %430 = arith.mulf %429, %428 : vector<2x96xf32>
    %cst_100 = arith.constant 5.000000e-01 : f32
    %431 = vector.broadcast %cst_100 : f32 to vector<2x96xf32>
    %432 = arith.addf %430, %431 : vector<2x96xf32>
    %433 = vector.extract_strided_slice %432 {offsets = [0, 0], sizes = [2, 32], strides = [1, 1]} : vector<2x96xf32> to vector<2x32xf32>
    %434 = vector.extract_strided_slice %432 {offsets = [0, 32], sizes = [2, 32], strides = [1, 1]} : vector<2x96xf32> to vector<2x32xf32>
    %435 = vector.extract_strided_slice %432 {offsets = [0, 64], sizes = [2, 32], strides = [1, 1]} : vector<2x96xf32> to vector<2x32xf32>
    %436 = vector.extract_strided_slice %427 {offsets = [0, 96], sizes = [2, 32], strides = [1, 1]} : vector<2x128xf32> to vector<2x32xf32>
    %437 = arith.mulf %434, %393 : vector<2x32xf32>
    %438 = arith.mulf %433, %436 : vector<2x32xf32>
    %439 = arith.addf %437, %438 : vector<2x32xf32>
    %440 = math.tanh %439 : vector<2x32xf32>
    %441 = arith.mulf %435, %440 : vector<2x32xf32>
    %cst_101 = arith.constant dense<0.000000e+00> : vector<2x128xf32>
    %442 = tpu.matmul %441, %1, %cst_101 {dimension_numbers = #tpu.dot_dimension_numbers<[1], [0], [0], [1], [0, 0, 1, 1], [], []>} : vector<2x32xf32>, vector<32x128xf32>, vector<2x128xf32> -> vector<2x128xf32>
    %cst_102 = arith.constant dense<0.000000e+00> : vector<2x128xf32>
    %443 = tpu.matmul %441, %2, %cst_102 {dimension_numbers = #tpu.dot_dimension_numbers<[1], [0], [0], [1], [0, 0, 1, 1], [], []>} : vector<2x32xf32>, vector<32x128xf32>, vector<2x128xf32> -> vector<2x128xf32>
    %444 = arith.addf %443, %415 : vector<2x128xf32>
    %445 = arith.addf %444, %11 : vector<2x128xf32>
    %446 = math.tanh %445 : vector<2x128xf32>
    %447 = vector.extract_strided_slice %446 {offsets = [0, 0], sizes = [2, 96], strides = [1, 1]} : vector<2x128xf32> to vector<2x96xf32>
    %cst_103 = arith.constant 5.000000e-01 : f32
    %448 = vector.broadcast %cst_103 : f32 to vector<2x96xf32>
    %449 = arith.mulf %448, %447 : vector<2x96xf32>
    %cst_104 = arith.constant 5.000000e-01 : f32
    %450 = vector.broadcast %cst_104 : f32 to vector<2x96xf32>
    %451 = arith.addf %449, %450 : vector<2x96xf32>
    %452 = vector.extract_strided_slice %451 {offsets = [0, 0], sizes = [2, 32], strides = [1, 1]} : vector<2x96xf32> to vector<2x32xf32>
    %453 = vector.extract_strided_slice %451 {offsets = [0, 32], sizes = [2, 32], strides = [1, 1]} : vector<2x96xf32> to vector<2x32xf32>
    %454 = vector.extract_strided_slice %451 {offsets = [0, 64], sizes = [2, 32], strides = [1, 1]} : vector<2x96xf32> to vector<2x32xf32>
    %455 = vector.extract_strided_slice %446 {offsets = [0, 96], sizes = [2, 32], strides = [1, 1]} : vector<2x128xf32> to vector<2x32xf32>
    %456 = arith.mulf %453, %412 : vector<2x32xf32>
    %457 = arith.mulf %452, %455 : vector<2x32xf32>
    %458 = arith.addf %456, %457 : vector<2x32xf32>
    %459 = math.tanh %458 : vector<2x32xf32>
    %460 = arith.mulf %454, %459 : vector<2x32xf32>
    %cst_105 = arith.constant dense<0.000000e+00> : vector<2x128xf32>
    %461 = tpu.matmul %460, %3, %cst_105 {dimension_numbers = #tpu.dot_dimension_numbers<[1], [0], [0], [1], [0, 0, 1, 1], [], []>} : vector<2x32xf32>, vector<32x128xf32>, vector<2x128xf32> -> vector<2x128xf32>
    %cst_106 = arith.constant dense<0.000000e+00> : vector<2x64xf32>
    %462 = tpu.matmul %460, %5, %cst_106 {dimension_numbers = #tpu.dot_dimension_numbers<[1], [0], [0], [1], [0, 0, 1, 1], [], []>} : vector<2x32xf32>, vector<32x64xf32>, vector<2x64xf32> -> vector<2x64xf32>
    %463 = arith.addf %462, %17 : vector<2x64xf32>
    %464 = math.tanh %463 : vector<2x64xf32>
    %cst_107 = arith.constant dense<0.000000e+00> : vector<2x64xf32>
    %465 = tpu.matmul %464, %6, %cst_107 {dimension_numbers = #tpu.dot_dimension_numbers<[1], [0], [0], [1], [0, 0, 1, 1], [], []>} : vector<2x64xf32>, vector<64x64xf32>, vector<2x64xf32> -> vector<2x64xf32>
    %466 = arith.addf %465, %20 : vector<2x64xf32>
    %467 = math.tanh %466 : vector<2x64xf32>
    %cst_108 = arith.constant dense<0.000000e+00> : vector<2x4xf32>
    %468 = tpu.matmul %467, %7, %cst_108 {dimension_numbers = #tpu.dot_dimension_numbers<[1], [0], [0], [1], [0, 0, 1, 1], [], []>} : vector<2x64xf32>, vector<64x4xf32>, vector<2x4xf32> -> vector<2x4xf32>
    %469 = arith.addf %468, %23 : vector<2x4xf32>
    %cst_109 = arith.constant dense<0.000000e+00> : vector<2x128xf32>
    %470 = tpu.matmul %467, %4, %cst_109 {dimension_numbers = #tpu.dot_dimension_numbers<[1], [0], [0], [1], [0, 0, 1, 1], [], []>} : vector<2x64xf32>, vector<64x128xf32>, vector<2x128xf32> -> vector<2x128xf32>
    %471 = arith.addf %470, %442 : vector<2x128xf32>
    %472 = arith.addf %471, %14 : vector<2x128xf32>
    %473 = math.tanh %472 : vector<2x128xf32>
    %474 = vector.extract_strided_slice %473 {offsets = [0, 0], sizes = [2, 96], strides = [1, 1]} : vector<2x128xf32> to vector<2x96xf32>
    %cst_110 = arith.constant 5.000000e-01 : f32
    %475 = vector.broadcast %cst_110 : f32 to vector<2x96xf32>
    %476 = arith.mulf %475, %474 : vector<2x96xf32>
    %cst_111 = arith.constant 5.000000e-01 : f32
    %477 = vector.broadcast %cst_111 : f32 to vector<2x96xf32>
    %478 = arith.addf %476, %477 : vector<2x96xf32>
    %479 = vector.extract_strided_slice %478 {offsets = [0, 0], sizes = [2, 32], strides = [1, 1]} : vector<2x96xf32> to vector<2x32xf32>
    %480 = vector.extract_strided_slice %478 {offsets = [0, 32], sizes = [2, 32], strides = [1, 1]} : vector<2x96xf32> to vector<2x32xf32>
    %481 = vector.extract_strided_slice %478 {offsets = [0, 64], sizes = [2, 32], strides = [1, 1]} : vector<2x96xf32> to vector<2x32xf32>
    %482 = vector.extract_strided_slice %473 {offsets = [0, 96], sizes = [2, 32], strides = [1, 1]} : vector<2x128xf32> to vector<2x32xf32>
    %483 = arith.mulf %480, %439 : vector<2x32xf32>
    %484 = arith.mulf %479, %482 : vector<2x32xf32>
    %485 = arith.addf %483, %484 : vector<2x32xf32>
    %486 = math.tanh %485 : vector<2x32xf32>
    %487 = arith.mulf %481, %486 : vector<2x32xf32>
    %cst_112 = arith.constant dense<0.000000e+00> : vector<2x128xf32>
    %488 = tpu.matmul %487, %1, %cst_112 {dimension_numbers = #tpu.dot_dimension_numbers<[1], [0], [0], [1], [0, 0, 1, 1], [], []>} : vector<2x32xf32>, vector<32x128xf32>, vector<2x128xf32> -> vector<2x128xf32>
    %cst_113 = arith.constant dense<0.000000e+00> : vector<2x128xf32>
    %489 = tpu.matmul %487, %2, %cst_113 {dimension_numbers = #tpu.dot_dimension_numbers<[1], [0], [0], [1], [0, 0, 1, 1], [], []>} : vector<2x32xf32>, vector<32x128xf32>, vector<2x128xf32> -> vector<2x128xf32>
    %490 = arith.addf %489, %461 : vector<2x128xf32>
    %491 = arith.addf %490, %11 : vector<2x128xf32>
    %492 = math.tanh %491 : vector<2x128xf32>
    %493 = vector.extract_strided_slice %492 {offsets = [0, 0], sizes = [2, 96], strides = [1, 1]} : vector<2x128xf32> to vector<2x96xf32>
    %cst_114 = arith.constant 5.000000e-01 : f32
    %494 = vector.broadcast %cst_114 : f32 to vector<2x96xf32>
    %495 = arith.mulf %494, %493 : vector<2x96xf32>
    %cst_115 = arith.constant 5.000000e-01 : f32
    %496 = vector.broadcast %cst_115 : f32 to vector<2x96xf32>
    %497 = arith.addf %495, %496 : vector<2x96xf32>
    %498 = vector.extract_strided_slice %497 {offsets = [0, 0], sizes = [2, 32], strides = [1, 1]} : vector<2x96xf32> to vector<2x32xf32>
    %499 = vector.extract_strided_slice %497 {offsets = [0, 32], sizes = [2, 32], strides = [1, 1]} : vector<2x96xf32> to vector<2x32xf32>
    %500 = vector.extract_strided_slice %497 {offsets = [0, 64], sizes = [2, 32], strides = [1, 1]} : vector<2x96xf32> to vector<2x32xf32>
    %501 = vector.extract_strided_slice %492 {offsets = [0, 96], sizes = [2, 32], strides = [1, 1]} : vector<2x128xf32> to vector<2x32xf32>
    %502 = arith.mulf %499, %458 : vector<2x32xf32>
    %503 = arith.mulf %498, %501 : vector<2x32xf32>
    %504 = arith.addf %502, %503 : vector<2x32xf32>
    %505 = math.tanh %504 : vector<2x32xf32>
    %506 = arith.mulf %500, %505 : vector<2x32xf32>
    %cst_116 = arith.constant dense<0.000000e+00> : vector<2x128xf32>
    %507 = tpu.matmul %506, %3, %cst_116 {dimension_numbers = #tpu.dot_dimension_numbers<[1], [0], [0], [1], [0, 0, 1, 1], [], []>} : vector<2x32xf32>, vector<32x128xf32>, vector<2x128xf32> -> vector<2x128xf32>
    %cst_117 = arith.constant dense<0.000000e+00> : vector<2x64xf32>
    %508 = tpu.matmul %506, %5, %cst_117 {dimension_numbers = #tpu.dot_dimension_numbers<[1], [0], [0], [1], [0, 0, 1, 1], [], []>} : vector<2x32xf32>, vector<32x64xf32>, vector<2x64xf32> -> vector<2x64xf32>
    %509 = arith.addf %508, %17 : vector<2x64xf32>
    %510 = math.tanh %509 : vector<2x64xf32>
    %cst_118 = arith.constant dense<0.000000e+00> : vector<2x64xf32>
    %511 = tpu.matmul %510, %6, %cst_118 {dimension_numbers = #tpu.dot_dimension_numbers<[1], [0], [0], [1], [0, 0, 1, 1], [], []>} : vector<2x64xf32>, vector<64x64xf32>, vector<2x64xf32> -> vector<2x64xf32>
    %512 = arith.addf %511, %20 : vector<2x64xf32>
    %513 = math.tanh %512 : vector<2x64xf32>
    %cst_119 = arith.constant dense<0.000000e+00> : vector<2x4xf32>
    %514 = tpu.matmul %513, %7, %cst_119 {dimension_numbers = #tpu.dot_dimension_numbers<[1], [0], [0], [1], [0, 0, 1, 1], [], []>} : vector<2x64xf32>, vector<64x4xf32>, vector<2x4xf32> -> vector<2x4xf32>
    %515 = arith.addf %514, %23 : vector<2x4xf32>
    %cst_120 = arith.constant dense<0.000000e+00> : vector<2x128xf32>
    %516 = tpu.matmul %513, %4, %cst_120 {dimension_numbers = #tpu.dot_dimension_numbers<[1], [0], [0], [1], [0, 0, 1, 1], [], []>} : vector<2x64xf32>, vector<64x128xf32>, vector<2x128xf32> -> vector<2x128xf32>
    %517 = arith.addf %516, %488 : vector<2x128xf32>
    %518 = arith.addf %517, %14 : vector<2x128xf32>
    %519 = math.tanh %518 : vector<2x128xf32>
    %520 = vector.extract_strided_slice %519 {offsets = [0, 0], sizes = [2, 96], strides = [1, 1]} : vector<2x128xf32> to vector<2x96xf32>
    %cst_121 = arith.constant 5.000000e-01 : f32
    %521 = vector.broadcast %cst_121 : f32 to vector<2x96xf32>
    %522 = arith.mulf %521, %520 : vector<2x96xf32>
    %cst_122 = arith.constant 5.000000e-01 : f32
    %523 = vector.broadcast %cst_122 : f32 to vector<2x96xf32>
    %524 = arith.addf %522, %523 : vector<2x96xf32>
    %525 = vector.extract_strided_slice %524 {offsets = [0, 0], sizes = [2, 32], strides = [1, 1]} : vector<2x96xf32> to vector<2x32xf32>
    %526 = vector.extract_strided_slice %524 {offsets = [0, 32], sizes = [2, 32], strides = [1, 1]} : vector<2x96xf32> to vector<2x32xf32>
    %527 = vector.extract_strided_slice %524 {offsets = [0, 64], sizes = [2, 32], strides = [1, 1]} : vector<2x96xf32> to vector<2x32xf32>
    %528 = vector.extract_strided_slice %519 {offsets = [0, 96], sizes = [2, 32], strides = [1, 1]} : vector<2x128xf32> to vector<2x32xf32>
    %529 = arith.mulf %526, %485 : vector<2x32xf32>
    %530 = arith.mulf %525, %528 : vector<2x32xf32>
    %531 = arith.addf %529, %530 : vector<2x32xf32>
    %532 = math.tanh %531 : vector<2x32xf32>
    %533 = arith.mulf %527, %532 : vector<2x32xf32>
    %cst_123 = arith.constant dense<0.000000e+00> : vector<2x128xf32>
    %534 = tpu.matmul %533, %2, %cst_123 {dimension_numbers = #tpu.dot_dimension_numbers<[1], [0], [0], [1], [0, 0, 1, 1], [], []>} : vector<2x32xf32>, vector<32x128xf32>, vector<2x128xf32> -> vector<2x128xf32>
    %535 = arith.addf %534, %507 : vector<2x128xf32>
    %536 = arith.addf %535, %11 : vector<2x128xf32>
    %537 = math.tanh %536 : vector<2x128xf32>
    %538 = vector.extract_strided_slice %537 {offsets = [0, 0], sizes = [2, 96], strides = [1, 1]} : vector<2x128xf32> to vector<2x96xf32>
    %cst_124 = arith.constant 5.000000e-01 : f32
    %539 = vector.broadcast %cst_124 : f32 to vector<2x96xf32>
    %540 = arith.mulf %539, %538 : vector<2x96xf32>
    %cst_125 = arith.constant 5.000000e-01 : f32
    %541 = vector.broadcast %cst_125 : f32 to vector<2x96xf32>
    %542 = arith.addf %540, %541 : vector<2x96xf32>
    %543 = vector.extract_strided_slice %542 {offsets = [0, 0], sizes = [2, 32], strides = [1, 1]} : vector<2x96xf32> to vector<2x32xf32>
    %544 = vector.extract_strided_slice %542 {offsets = [0, 32], sizes = [2, 32], strides = [1, 1]} : vector<2x96xf32> to vector<2x32xf32>
    %545 = vector.extract_strided_slice %542 {offsets = [0, 64], sizes = [2, 32], strides = [1, 1]} : vector<2x96xf32> to vector<2x32xf32>
    %546 = vector.extract_strided_slice %537 {offsets = [0, 96], sizes = [2, 32], strides = [1, 1]} : vector<2x128xf32> to vector<2x32xf32>
    %547 = arith.mulf %544, %504 : vector<2x32xf32>
    %548 = arith.mulf %543, %546 : vector<2x32xf32>
    %549 = arith.addf %547, %548 : vector<2x32xf32>
    %550 = math.tanh %549 : vector<2x32xf32>
    %551 = arith.mulf %545, %550 : vector<2x32xf32>
    %cst_126 = arith.constant dense<0.000000e+00> : vector<2x64xf32>
    %552 = tpu.matmul %551, %5, %cst_126 {dimension_numbers = #tpu.dot_dimension_numbers<[1], [0], [0], [1], [0, 0, 1, 1], [], []>} : vector<2x32xf32>, vector<32x64xf32>, vector<2x64xf32> -> vector<2x64xf32>
    %553 = arith.addf %552, %17 : vector<2x64xf32>
    %554 = math.tanh %553 : vector<2x64xf32>
    %cst_127 = arith.constant dense<0.000000e+00> : vector<2x64xf32>
    %555 = tpu.matmul %554, %6, %cst_127 {dimension_numbers = #tpu.dot_dimension_numbers<[1], [0], [0], [1], [0, 0, 1, 1], [], []>} : vector<2x64xf32>, vector<64x64xf32>, vector<2x64xf32> -> vector<2x64xf32>
    %556 = arith.addf %555, %20 : vector<2x64xf32>
    %557 = math.tanh %556 : vector<2x64xf32>
    %cst_128 = arith.constant dense<0.000000e+00> : vector<2x4xf32>
    %558 = tpu.matmul %557, %7, %cst_128 {dimension_numbers = #tpu.dot_dimension_numbers<[1], [0], [0], [1], [0, 0, 1, 1], [], []>} : vector<2x64xf32>, vector<64x4xf32>, vector<2x4xf32> -> vector<2x4xf32>
    %559 = arith.addf %558, %23 : vector<2x4xf32>
    %560 = tpu.concatenate %377, %423, %469, %515, %559 in 0 : vector<2x4xf32>, vector<2x4xf32>, vector<2x4xf32>, vector<2x4xf32>, vector<2x4xf32> -> vector<10x4xf32>
    %c0_129 = arith.constant 0 : index
    %c0_130 = arith.constant 0 : index
    %561 = vector.load %arg2[%c0_129, %c0_130] : memref<10x4xf32, #tpu.memory_space<vmem>>, vector<10x4xf32>
    tpu.vector_store %arg2[%c0_129, %c0_130], %560 {strides = array<i32>} : memref<10x4xf32, #tpu.memory_space<vmem>>, vector<10x4xf32>,
    return
  }
}

</mosaic_0001>

<llo_original>
// kernel: tpu_custom_call.1
$region0: #{tpu_custom_call.1}
  #allocation0 [shape = 'u32[]', space=smem, size = 0x4, offset = 0x4, fixed_abs, tag = 'smem constant byte address 0x4 - core index']
  #allocation1 [shape = 'u32[144,128]{1,0:T(1,128)}', space=vmem, size = 0x12000, scoped, tag = 'internal scratch']
  %s0 = inlined_call_operand.vmem [shape: f32[16,4], index: 0, kind: input, shape index: {}]
  %s1 = inlined_call_operand.hbm [shape: f32[376,128], index: 1, kind: input, shape index: {}]
  %s2 = inlined_call_operand.vmem [shape: f32[10,4], index: 2, kind: output, shape index: {}]
  %s3 = sld [smem:[#allocation0]]
  $region22: #{tpu_custom_call.1} parent=0
    _
  %s5 = ssub.s32 1, %s3
  %s6 = scalar_select 0, %s5, %s3
  $region1: #{tpu_custom_call.1} parent=0
    #allocation2 [shape = 'u8[192512]{0}', space=vmem, size = 0x2f000, scoped, tag = 'input window, operand 1, single buffered']
    #allocation3 [shape = 's32[1]{0}', space=sflag, size = 0x4, scoped, tag = 'scoped memory for tpu_custom_call.1']
    %7 = vsyncpa [#allocation3], 0
    // Predicated region
    $region2: #{tpu_custom_call.1} parent=1 // pred_check
      _
    $region3: #{tpu_custom_call.1} parent=1 // pred_check_branch
      %9 = sbr.rel (0) target = $region5
    $region4: #{tpu_custom_call.1} parent=1 // pred_region
      _
    $region5: #{tpu_custom_call.1} parent=1 // pred_fallthru
      _
    // Predicated region
    $region6: #{tpu_custom_call.1} parent=1 // pred_check
      _
    $region7: #{tpu_custom_call.1} parent=1 // pred_check_branch
      %11 = sbr.rel (0) target = $region9
    $region8: #{tpu_custom_call.1} parent=1 // pred_region
      %s13 = ssub.s32 6016, 6016
      %14 = vsyncadd [#allocation3], %s13
      %s15 = sshll.u32 [#allocation2], 4
      %s16 = int_to_ptr.vmem [resolvable:$true] %s15
      %21 = dma.hbm_to_vmem [thread:$0]  %s1, 6016, %s16, [#allocation3], 128, 128, 8
    $region9: #{tpu_custom_call.1} parent=1 // pred_fallthru
      _
    // Predicated region
    $region10: #{tpu_custom_call.1} parent=1 // pred_check
      _
    $region11: #{tpu_custom_call.1} parent=1 // pred_check_branch
      %23 = sbr.rel (0) target = $region13
    $region12: #{tpu_custom_call.1} parent=1 // pred_region
      %24 = dma.done [#allocation3], 6016
    $region13: #{tpu_custom_call.1} parent=1 // pred_fallthru
      _
    %v25 = vld [vmem:[#allocation2] sm:$0xf]
    %v26 = vld [vmem:[#allocation2 + $0x8] sm:$0xff]
    %v27 = vld [vmem:[#allocation2 + $0x10] sm:$0xff]
    %v28 = vld [vmem:[#allocation2 + $0x18] sm:$0xff]
    %v29 = vld [vmem:[#allocation2 + $0x20] sm:$0xff]
    %v30 = vld [vmem:[#allocation2 + $0x28] sm:$0xff]
    %v31 = vld [vmem:[#allocation2 + $0x30] sm:$0xff]
    %v32 = vld [vmem:[#allocation2 + $0x38] sm:$0xff]
    %v33 = vld [vmem:[#allocation2 + $0x40] sm:$0xff]
    %v34 = vld [vmem:[#allocation2 + $0x48] sm:$0xff]
    %v35 = vld [vmem:[#allocation2 + $0x50] sm:$0xff]
    %v36 = vld [vmem:[#allocation2 + $0x58] sm:$0xff]
    %v37 = vld [vmem:[#allocation2 + $0x60] sm:$0xff]
    %v38 = vld [vmem:[#allocation2 + $0x68] sm:$0xff]
    %v39 = vld [vmem:[#allocation2 + $0x70] sm:$0xff]
    %v40 = vld [vmem:[#allocation2 + $0x78] sm:$0xff]
    %v41 = vld [vmem:[#allocation2 + $0x80] sm:$0xff]
    %v42 = vld [vmem:[#allocation2 + $0x88] sm:$0xff]
    %v43 = vld [vmem:[#allocation2 + $0x90] sm:$0xff]
    %v44 = vld [vmem:[#allocation2 + $0x98] sm:$0xff]
    %v45 = vld [vmem:[#allocation2 + $0xa0] sm:$0xff]
    %v46 = vld [vmem:[#allocation2 + $0xa8] sm:$0xff]
    %v47 = vld [vmem:[#allocation2 + $0xb0] sm:$0xff]
    %v48 = vld [vmem:[#allocation2 + $0xb8] sm:$0xff]
    %v49 = vld [vmem:[#allocation2 + $0xc0] sm:$0xff]
    %v50 = vld [vmem:[#allocation2 + $0xc8] sm:$0xff]
    %v51 = vld [vmem:[#allocation2 + $0xd0] sm:$0xff]
    %v52 = vld [vmem:[#allocation2 + $0xd8] sm:$0xff]
    %v53 = vld [vmem:[#allocation2 + $0xe0] sm:$0xff]
    %v54 = vld [vmem:[#allocation2 + $0xe8] sm:$0xff]
    %v55 = vld [vmem:[#allocation2 + $0xf0] sm:$0xff]
    %v56 = vld [vmem:[#allocation2 + $0xf8] sm:$0xff]
    %v57 = vld [vmem:[#allocation2 + $0x100] sm:$0xff]
    %v58 = vld [vmem:[#allocation2 + $0x108] sm:$0xff]
    %v59 = vld [vmem:[#allocation2 + $0x110] sm:$0xff]
    %v60 = vld [vmem:[#allocation2 + $0x118] sm:$0xff]
    %v61 = vld [vmem:[#allocation2 + $0x120] sm:$0xff]
    %v62 = vld [vmem:[#allocation2 + $0x128] sm:$0xff]
    %v63 = vld [vmem:[#allocation2 + $0x130] sm:$0xff]
    %v64 = vld [vmem:[#allocation2 + $0x138] sm:$0xff]
    %v65 = vld [vmem:[#allocation2 + $0x140] sm:$0xff]
    %v66 = vld [vmem:[#allocation2 + $0x148] sm:$0x1]
    %v67 = vld [vmem:[#allocation2 + $0x150] sm:$0x1]
    %v68 = vlaneseq
    %v69 = vshrl.u32 %v68, 7
    %v70 = vsub.s32 0, %v69
    %v71 = vrot.slane %v67, %v70
    %v72 = vld [vmem:[#allocation2 + $0x158] sm:$0x1]
    %v73 = vlaneseq
    %v74 = vshrl.u32 %v73, 7
    %v75 = vsub.s32 0, %v74
    %v76 = vrot.slane %v72, %v75
    %v77 = vld [vmem:[#allocation2 + $0x160] sm:$0x1]
    %v78 = vlaneseq
    %v79 = vshrl.u32 %v78, 7
    %v80 = vsub.s32 0, %v79
    %v81 = vrot.slane %v77, %v80
    %v82 = vld [vmem:[#allocation2 + $0x168] sm:$0x1]
    %v83 = vlaneseq
    %v84 = vshrl.u32 %v83, 7
    %v85 = vsub.s32 0, %v84
    %v86 = vrot.slane %v82, %v85
    %v87 = vld [vmem:[#allocation2 + $0x170] sm:$0x1]
    %v88 = vlaneseq
    %v89 = vshrl.u32 %v88, 7
    %v90 = vsub.s32 0, %v89
    %v91 = vrot.slane %v87, %v90
    %v92 = vld [vmem:[%s0] sm:$0xff]
    %v93 = vld [vmem:[%s0 + $0x8] sm:$0xff]
    %v94 = vlaneseq
    %v95 = vshrl.u32 %v94, 7
    %v96 = vsub.s32 0, %v95
    %v97 = vrot.slane %v66, %v96
    %vm98 = vcmask 31744
    %v100 = vsel %vm98, %v92, 0
    %v103 = vsel %vm98, %v93, 0
    %vm105 = vcmask 1043456
    %v107 = vsel %vm105, %v25, 0
    %109 = vmatprep.subr.mxu0 0.0
    %110 = vmatpush1.msra.mxu0 %v107
    %111 = vmatprep.subr.mxu0 0.0
    %112 = vmatpush1.msra.mxu0 0.0
    %113 = vmatprep.subr.mxu0 0.0
    %114 = vmatpush1.msra.mxu0 0.0
    %115 = vmatprep.subr.mxu0 0.0
    %116 = vmatpush1.msra.mxu0 0.0
    %117 = vmatprep.subr.mxu0 0.0
    %118 = vmatpush1.msra.mxu0 0.0
    %119 = vmatprep.subr.mxu0 0.0
    %120 = vmatpush1.msra.mxu0 0.0
    %121 = vmatprep.subr.mxu0 0.0
    %122 = vmatpush1.msra.mxu0 0.0
    %123 = vmatprep.subr.mxu0 0.0
    %124 = vmatpush1.msra.mxu0 0.0
    %125 = vmatprep.subr.mxu0 0.0
    %126 = vmatpush1.msra.mxu0 0.0
    %127 = vmatprep.subr.mxu0 0.0
    %128 = vmatpush1.msra.mxu0 0.0
    %129 = vmatprep.subr.mxu0 0.0
    %130 = vmatpush1.msra.mxu0 0.0
    %131 = vmatprep.subr.mxu0 0.0
    %132 = vmatpush1.msra.mxu0 0.0
    %133 = vmatprep.subr.mxu0 0.0
    %134 = vmatpush1.msra.mxu0 0.0
    %135 = vmatprep.subr.mxu0 0.0
    %136 = vmatpush1.msra.mxu0 0.0
    %137 = vmatprep.subr.mxu0 0.0
    %138 = vmatpush1.msra.mxu0 0.0
    %139 = vmatprep.subr.mxu0 0.0
    %140 = vmatpush1.msra.mxu0 0.0
    %141 = vmatprep.subr.mxu0 0.0
    %142 = vmatpush1.msra.mxu0 0.0
    %143 = vmatprep.subr.mxu0 0.0
    %144 = vmatpush1.msra.mxu0 0.0
    %145 = vmatprep.subr.mxu0 0.0
    %146 = vmatpush1.msra.mxu0 0.0
    %147 = vmatprep.subr.mxu0 0.0
    %148 = vmatpush1.msra.mxu0 0.0
    %149 = vmatprep.subr.mxu0 0.0
    %150 = vmatpush1.msra.mxu0 0.0
    %151 = vmatprep.subr.mxu0 0.0
    %152 = vmatpush1.msra.mxu0 0.0
    %153 = vmatprep.subr.mxu0 0.0
    %154 = vmatpush1.msra.mxu0 0.0
    %155 = vmatprep.subr.mxu0 0.0
    %156 = vmatpush1.msra.mxu0 0.0
    %157 = vmatprep.subr.mxu0 0.0
    %158 = vmatpush1.msra.mxu0 0.0
    %159 = vmatprep.subr.mxu0 0.0
    %160 = vmatpush1.msra.mxu0 0.0
    %161 = vmatprep.subr.mxu0 0.0
    %162 = vmatpush1.msra.mxu0 0.0
    %163 = vmatprep.subr.mxu0 0.0
    %164 = vmatpush1.msra.mxu0 0.0
    %165 = vmatprep.subr.mxu0 0.0
    %166 = vmatpush1.msra.mxu0 0.0
    %167 = vmatprep.subr.mxu0 0.0
    %168 = vmatpush1.msra.mxu0 0.0
    %169 = vmatprep.subr.mxu0 0.0
    %170 = vmatpush1.msra.mxu0 0.0
    %171 = vmatprep.subr.mxu0 0.0
    %172 = vmatpush1.msra.mxu0 0.0
    %173 = vmatprep.mubr.f32.mxu0 0.0
    %174 = vmatmul.mubr.f32.gmra.mrb[0].mxu0 %v100
    %v175 = vpop.f32.mrb[0].mxu0
    %v176 = vadd.f32 %v97, %v175
    %v177 = vpop.f32.mrb[0].mxu0
    %178 = vmatprep.mubr.f32.mxu0 0.0
    %179 = vmatmul.mubr.f32.gmra.mrb[0].mxu0 %v103
    %v180 = vpop.f32.mrb[0].mxu0
    %v181 = vadd.f32 %v97, %v180
    %v182 = vpop.f32.mrb[0].mxu0
    %183 = vdwg.mxu0
    %v184 = vadd.f32 %v176, 0.0
    %v185 = vtanh.pop %v184
    %v186 = vmul.f32 %v185, 0.5
    %v187 = vadd.f32 %v186, 0.5
    %v188 = vmul.f32 %v187, 0.0
    %190 = vrot.lane.b32.xlu0 %v185, 32
    %v191 = vpop.permute.xlu0 %190
    %v193 = vmul.f32 %v187, %v191
    %195 = vrot.lane.b32.xlu0 %v193, 32
    %v196 = vpop.permute.xlu0 %195
    %v198 = vadd.f32 %v188, %v196
    %v199 = vtanh.pop %v198
    %201 = vrot.lane.b32.xlu0 %v199, 32
    %v202 = vpop.permute.xlu0 %201
    %v204 = vmul.f32 %v187, %v202
    %206 = vrot.lane.b32.xlu0 %v204, 64
    %v207 = vpop.permute.xlu0 %206
    %vm208 = vcmask 261120
    %v209 = vsel %vm208, %v207, 0
    %211 = vmatprep.subr.mxu0 0.0
    %212 = vmatpush1.msra.mxu0 %v26
    %213 = vmatprep.subr.mxu0 0.0
    %214 = vmatpush1.msra.mxu0 %v27
    %215 = vmatprep.subr.mxu0 0.0
    %216 = vmatpush1.msra.mxu0 %v28
    %217 = vmatprep.subr.mxu0 0.0
    %218 = vmatpush1.msra.mxu0 %v29
    %219 = vmatprep.subr.mxu0 0.0
    %220 = vmatpush1.msra.mxu0 0.0
    %221 = vmatprep.subr.mxu0 0.0
    %222 = vmatpush1.msra.mxu0 0.0
    %223 = vmatprep.subr.mxu0 0.0
    %224 = vmatpush1.msra.mxu0 0.0
    %225 = vmatprep.subr.mxu0 0.0
    %226 = vmatpush1.msra.mxu0 0.0
    %227 = vmatprep.subr.mxu0 0.0
    %228 = vmatpush1.msra.mxu0 0.0
    %229 = vmatprep.subr.mxu0 0.0
    %230 = vmatpush1.msra.mxu0 0.0
    %231 = vmatprep.subr.mxu0 0.0
    %232 = vmatpush1.msra.mxu0 0.0
    %233 = vmatprep.subr.mxu0 0.0
    %234 = vmatpush1.msra.mxu0 0.0
    %235 = vmatprep.subr.mxu0 0.0
    %236 = vmatpush1.msra.mxu0 0.0
    %237 = vmatprep.subr.mxu0 0.0
    %238 = vmatpush1.msra.mxu0 0.0
    %239 = vmatprep.subr.mxu0 0.0
    %240 = vmatpush1.msra.mxu0 0.0
    %241 = vmatprep.subr.mxu0 0.0
    %242 = vmatpush1.msra.mxu0 0.0
    %243 = vmatprep.subr.mxu0 0.0
    %244 = vmatpush1.msra.mxu0 0.0
    %245 = vmatprep.subr.mxu0 0.0
    %246 = vmatpush1.msra.mxu0 0.0
    %247 = vmatprep.subr.mxu0 0.0
    %248 = vmatpush1.msra.mxu0 0.0
    %249 = vmatprep.subr.mxu0 0.0
    %250 = vmatpush1.msra.mxu0 0.0
    %251 = vmatprep.subr.mxu0 0.0
    %252 = vmatpush1.msra.mxu0 0.0
    %253 = vmatprep.subr.mxu0 0.0
    %254 = vmatpush1.msra.mxu0 0.0
    %255 = vmatprep.subr.mxu0 0.0
    %256 = vmatpush1.msra.mxu0 0.0
    %257 = vmatprep.subr.mxu0 0.0
    %258 = vmatpush1.msra.mxu0 0.0
    %259 = vmatprep.subr.mxu0 0.0
    %260 = vmatpush1.msra.mxu0 0.0
    %261 = vmatprep.subr.mxu0 0.0
    %262 = vmatpush1.msra.mxu0 0.0
    %263 = vmatprep.subr.mxu0 0.0
    %264 = vmatpush1.msra.mxu0 0.0
    %265 = vmatprep.subr.mxu0 0.0
    %266 = vmatpush1.msra.mxu0 0.0
    %267 = vmatprep.subr.mxu0 0.0
    %268 = vmatpush1.msra.mxu0 0.0
    %269 = vmatprep.subr.mxu0 0.0
    %270 = vmatpush1.msra.mxu0 0.0
    %271 = vmatprep.subr.mxu0 0.0
    %272 = vmatpush1.msra.mxu0 0.0
    %273 = vmatprep.subr.mxu0 0.0
    %274 = vmatpush1.msra.mxu0 0.0
    %275 = vmatprep.mubr.f32.mxu0 0.0
    %276 = vmatmul.mubr.f32.gmra.mrb[0].mxu0 %v209
    %v277 = vpop.f32.mrb[0].mxu0
    %v278 = vadd.f32 0.0, %v277
    %v279 = vpop.f32.mrb[0].mxu0
    %280 = vdwg.mxu0
    %281 = vmatprep.subr.mxu0 0.0
    %282 = vmatpush1.msra.mxu0 %v30
    %283 = vmatprep.subr.mxu0 0.0
    %284 = vmatpush1.msra.mxu0 %v31
    %285 = vmatprep.subr.mxu0 0.0
    %286 = vmatpush1.msra.mxu0 %v32
    %287 = vmatprep.subr.mxu0 0.0
    %288 = vmatpush1.msra.mxu0 %v33
    %289 = vmatprep.subr.mxu0 0.0
    %290 = vmatpush1.msra.mxu0 0.0
    %291 = vmatprep.subr.mxu0 0.0
    %292 = vmatpush1.msra.mxu0 0.0
    %293 = vmatprep.subr.mxu0 0.0
    %294 = vmatpush1.msra.mxu0 0.0
    %295 = vmatprep.subr.mxu0 0.0
    %296 = vmatpush1.msra.mxu0 0.0
    %297 = vmatprep.subr.mxu0 0.0
    %298 = vmatpush1.msra.mxu0 0.0
    %299 = vmatprep.subr.mxu0 0.0
    %300 = vmatpush1.msra.mxu0 0.0
    %301 = vmatprep.subr.mxu0 0.0
    %302 = vmatpush1.msra.mxu0 0.0
    %303 = vmatprep.subr.mxu0 0.0
    %304 = vmatpush1.msra.mxu0 0.0
    %305 = vmatprep.subr.mxu0 0.0
    %306 = vmatpush1.msra.mxu0 0.0
    %307 = vmatprep.subr.mxu0 0.0
    %308 = vmatpush1.msra.mxu0 0.0
    %309 = vmatprep.subr.mxu0 0.0
    %310 = vmatpush1.msra.mxu0 0.0
    %311 = vmatprep.subr.mxu0 0.0
    %312 = vmatpush1.msra.mxu0 0.0
    %313 = vmatprep.subr.mxu0 0.0
    %314 = vmatpush1.msra.mxu0 0.0
    %315 = vmatprep.subr.mxu0 0.0
    %316 = vmatpush1.msra.mxu0 0.0
    %317 = vmatprep.subr.mxu0 0.0
    %318 = vmatpush1.msra.mxu0 0.0
    %319 = vmatprep.subr.mxu0 0.0
    %320 = vmatpush1.msra.mxu0 0.0
    %321 = vmatprep.subr.mxu0 0.0
    %322 = vmatpush1.msra.mxu0 0.0
    %323 = vmatprep.subr.mxu0 0.0
    %324 = vmatpush1.msra.mxu0 0.0
    %325 = vmatprep.subr.mxu0 0.0
    %326 = vmatpush1.msra.mxu0 0.0
    %327 = vmatprep.subr.mxu0 0.0
    %328 = vmatpush1.msra.mxu0 0.0
    %329 = vmatprep.subr.mxu0 0.0
    %330 = vmatpush1.msra.mxu0 0.0
    %331 = vmatprep.subr.mxu0 0.0
    %332 = vmatpush1.msra.mxu0 0.0
    %333 = vmatprep.subr.mxu0 0.0
    %334 = vmatpush1.msra.mxu0 0.0
    %335 = vmatprep.subr.mxu0 0.0
    %336 = vmatpush1.msra.mxu0 0.0
    %337 = vmatprep.subr.mxu0 0.0
    %338 = vmatpush1.msra.mxu0 0.0
    %339 = vmatprep.subr.mxu0 0.0
    %340 = vmatpush1.msra.mxu0 0.0
    %341 = vmatprep.subr.mxu0 0.0
    %342 = vmatpush1.msra.mxu0 0.0
    %343 = vmatprep.subr.mxu0 0.0
    %344 = vmatpush1.msra.mxu0 0.0
    %345 = vmatprep.mubr.f32.mxu0 0.0
    %346 = vmatmul.mubr.f32.gmra.mrb[0].mxu0 %v209
    %v347 = vpop.f32.mrb[0].mxu0
    %v348 = vadd.f32 %v71, %v347
    %v349 = vpop.f32.mrb[0].mxu0
    %350 = vdwg.mxu0
    %v351 = vtanh.pop %v348
    %v352 = vmul.f32 %v351, 0.5
    %v353 = vadd.f32 %v352, 0.5
    %v354 = vmul.f32 %v353, 0.0
    %356 = vrot.lane.b32.xlu0 %v351, 32
    %v357 = vpop.permute.xlu0 %356
    %v359 = vmul.f32 %v353, %v357
    %361 = vrot.lane.b32.xlu0 %v359, 32
    %v362 = vpop.permute.xlu0 %361
    %v364 = vadd.f32 %v354, %v362
    %v365 = vtanh.pop %v364
    %367 = vrot.lane.b32.xlu0 %v365, 32
    %v368 = vpop.permute.xlu0 %367
    %v370 = vmul.f32 %v353, %v368
    %372 = vrot.lane.b32.xlu0 %v370, 64
    %v373 = vpop.permute.xlu0 %372
    %v374 = vsel %vm208, %v373, 0
    %376 = vmatprep.subr.mxu0 0.0
    %377 = vmatpush1.msra.mxu0 %v34
    %378 = vmatprep.subr.mxu0 0.0
    %379 = vmatpush1.msra.mxu0 %v35
    %380 = vmatprep.subr.mxu0 0.0
    %381 = vmatpush1.msra.mxu0 %v36
    %382 = vmatprep.subr.mxu0 0.0
    %383 = vmatpush1.msra.mxu0 %v37
    %384 = vmatprep.subr.mxu0 0.0
    %385 = vmatpush1.msra.mxu0 0.0
    %386 = vmatprep.subr.mxu0 0.0
    %387 = vmatpush1.msra.mxu0 0.0
    %388 = vmatprep.subr.mxu0 0.0
    %389 = vmatpush1.msra.mxu0 0.0
    %390 = vmatprep.subr.mxu0 0.0
    %391 = vmatpush1.msra.mxu0 0.0
    %392 = vmatprep.subr.mxu0 0.0
    %393 = vmatpush1.msra.mxu0 0.0
    %394 = vmatprep.subr.mxu0 0.0
    %395 = vmatpush1.msra.mxu0 0.0
    %396 = vmatprep.subr.mxu0 0.0
    %397 = vmatpush1.msra.mxu0 0.0
    %398 = vmatprep.subr.mxu0 0.0
    %399 = vmatpush1.msra.mxu0 0.0
    %400 = vmatprep.subr.mxu0 0.0
    %401 = vmatpush1.msra.mxu0 0.0
    %402 = vmatprep.subr.mxu0 0.0
    %403 = vmatpush1.msra.mxu0 0.0
    %404 = vmatprep.subr.mxu0 0.0
    %405 = vmatpush1.msra.mxu0 0.0
    %406 = vmatprep.subr.mxu0 0.0
    %407 = vmatpush1.msra.mxu0 0.0
    %408 = vmatprep.subr.mxu0 0.0
    %409 = vmatpush1.msra.mxu0 0.0
    %410 = vmatprep.subr.mxu0 0.0
    %411 = vmatpush1.msra.mxu0 0.0
    %412 = vmatprep.subr.mxu0 0.0
    %413 = vmatpush1.msra.mxu0 0.0
    %414 = vmatprep.subr.mxu0 0.0
    %415 = vmatpush1.msra.mxu0 0.0
    %416 = vmatprep.subr.mxu0 0.0
    %417 = vmatpush1.msra.mxu0 0.0
    %418 = vmatprep.subr.mxu0 0.0
    %419 = vmatpush1.msra.mxu0 0.0
    %420 = vmatprep.subr.mxu0 0.0
    %421 = vmatpush1.msra.mxu0 0.0
    %422 = vmatprep.subr.mxu0 0.0
    %423 = vmatpush1.msra.mxu0 0.0
    %424 = vmatprep.subr.mxu0 0.0
    %425 = vmatpush1.msra.mxu0 0.0
    %426 = vmatprep.subr.mxu0 0.0
    %427 = vmatpush1.msra.mxu0 0.0
    %428 = vmatprep.subr.mxu0 0.0
    %429 = vmatpush1.msra.mxu0 0.0
    %430 = vmatprep.subr.mxu0 0.0
    %431 = vmatpush1.msra.mxu0 0.0
    %432 = vmatprep.subr.mxu0 0.0
    %433 = vmatpush1.msra.mxu0 0.0
    %434 = vmatprep.subr.mxu0 0.0
    %435 = vmatpush1.msra.mxu0 0.0
    %436 = vmatprep.subr.mxu0 0.0
    %437 = vmatpush1.msra.mxu0 0.0
    %438 = vmatprep.subr.mxu0 0.0
    %439 = vmatpush1.msra.mxu0 0.0
    %440 = vmatprep.mubr.f32.mxu0 0.0
    %441 = vmatmul.mubr.f32.gmra.mrb[0].mxu0 %v374
    %v442 = vpop.f32.mrb[0].mxu0
    %v443 = vadd.f32 0.0, %v442
    %v444 = vpop.f32.mrb[0].mxu0
    %445 = vdwg.mxu0
    %v447 = vrot.slane %v278, 6
    %v449 = vadd.f32 %v176, %v447
    %v450 = vtanh.pop %v449
    %v451 = vmul.f32 %v450, 0.5
    %v452 = vadd.f32 %v451, 0.5
    %v454 = vrot.slane %v198, 6
    %v456 = vmul.f32 %v452, %v454
    %458 = vrot.lane.b32.xlu0 %v450, 32
    %v459 = vpop.permute.xlu0 %458
    %v461 = vmul.f32 %v452, %v459
    %463 = vrot.lane.b32.xlu0 %v461, 32
    %v464 = vpop.permute.xlu0 %463
    %v466 = vadd.f32 %v456, %v464
    %v467 = vtanh.pop %v466
    %469 = vrot.lane.b32.xlu0 %v467, 32
    %v470 = vpop.permute.xlu0 %469
    %v472 = vmul.f32 %v452, %v470
    %v474 = vrot.slane %v472, 2
    %475 = vrot.lane.b32.xlu0 %v474, 64
    %v476 = vpop.permute.xlu0 %475
    %v477 = vsel %vm208, %v476, 0
    %479 = vmatprep.subr.mxu0 0.0
    %480 = vmatpush1.msra.mxu0 %v26
    %481 = vmatprep.subr.mxu0 0.0
    %482 = vmatpush1.msra.mxu0 %v27
    %483 = vmatprep.subr.mxu0 0.0
    %484 = vmatpush1.msra.mxu0 %v28
    %485 = vmatprep.subr.mxu0 0.0
    %486 = vmatpush1.msra.mxu0 %v29
    %487 = vmatprep.subr.mxu0 0.0
    %488 = vmatpush1.msra.mxu0 0.0
    %489 = vmatprep.subr.mxu0 0.0
    %490 = vmatpush1.msra.mxu0 0.0
    %491 = vmatprep.subr.mxu0 0.0
    %492 = vmatpush1.msra.mxu0 0.0
    %493 = vmatprep.subr.mxu0 0.0
    %494 = vmatpush1.msra.mxu0 0.0
    %495 = vmatprep.subr.mxu0 0.0
    %496 = vmatpush1.msra.mxu0 0.0
    %497 = vmatprep.subr.mxu0 0.0
    %498 = vmatpush1.msra.mxu0 0.0
    %499 = vmatprep.subr.mxu0 0.0
    %500 = vmatpush1.msra.mxu0 0.0
    %501 = vmatprep.subr.mxu0 0.0
    %502 = vmatpush1.msra.mxu0 0.0
    %503 = vmatprep.subr.mxu0 0.0
    %504 = vmatpush1.msra.mxu0 0.0
    %505 = vmatprep.subr.mxu0 0.0
    %506 = vmatpush1.msra.mxu0 0.0
    %507 = vmatprep.subr.mxu0 0.0
    %508 = vmatpush1.msra.mxu0 0.0
    %509 = vmatprep.subr.mxu0 0.0
    %510 = vmatpush1.msra.mxu0 0.0
    %511 = vmatprep.subr.mxu0 0.0
    %512 = vmatpush1.msra.mxu0 0.0
    %513 = vmatprep.subr.mxu0 0.0
    %514 = vmatpush1.msra.mxu0 0.0
    %515 = vmatprep.subr.mxu0 0.0
    %516 = vmatpush1.msra.mxu0 0.0
    %517 = vmatprep.subr.mxu0 0.0
    %518 = vmatpush1.msra.mxu0 0.0
    %519 = vmatprep.subr.mxu0 0.0
    %520 = vmatpush1.msra.mxu0 0.0
    %521 = vmatprep.subr.mxu0 0.0
    %522 = vmatpush1.msra.mxu0 0.0
    %523 = vmatprep.subr.mxu0 0.0
    %524 = vmatpush1.msra.mxu0 0.0
    %525 = vmatprep.subr.mxu0 0.0
    %526 = vmatpush1.msra.mxu0 0.0
    %527 = vmatprep.subr.mxu0 0.0
    %528 = vmatpush1.msra.mxu0 0.0
    %529 = vmatprep.subr.mxu0 0.0
    %530 = vmatpush1.msra.mxu0 0.0
    %531 = vmatprep.subr.mxu0 0.0
    %532 = vmatpush1.msra.mxu0 0.0
    %533 = vmatprep.subr.mxu0 0.0
    %534 = vmatpush1.msra.mxu0 0.0
    %535 = vmatprep.subr.mxu0 0.0
    %536 = vmatpush1.msra.mxu0 0.0
    %537 = vmatprep.subr.mxu0 0.0
    %538 = vmatpush1.msra.mxu0 0.0
    %539 = vmatprep.subr.mxu0 0.0
    %540 = vmatpush1.msra.mxu0 0.0
    %541 = vmatprep.subr.mxu0 0.0
    %542 = vmatpush1.msra.mxu0 0.0
    %543 = vmatprep.mubr.f32.mxu0 0.0
    %544 = vmatmul.mubr.f32.gmra.mrb[0].mxu0 %v477
    %v545 = vpop.f32.mrb[0].mxu0
    %v546 = vadd.f32 0.0, %v545
    %v547 = vpop.f32.mrb[0].mxu0
    %548 = vdwg.mxu0
    %549 = vmatprep.subr.mxu0 0.0
    %550 = vmatpush1.msra.mxu0 %v30
    %551 = vmatprep.subr.mxu0 0.0
    %552 = vmatpush1.msra.mxu0 %v31
    %553 = vmatprep.subr.mxu0 0.0
    %554 = vmatpush1.msra.mxu0 %v32
    %555 = vmatprep.subr.mxu0 0.0
    %556 = vmatpush1.msra.mxu0 %v33
    %557 = vmatprep.subr.mxu0 0.0
    %558 = vmatpush1.msra.mxu0 0.0
    %559 = vmatprep.subr.mxu0 0.0
    %560 = vmatpush1.msra.mxu0 0.0
    %561 = vmatprep.subr.mxu0 0.0
    %562 = vmatpush1.msra.mxu0 0.0
    %563 = vmatprep.subr.mxu0 0.0
    %564 = vmatpush1.msra.mxu0 0.0
    %565 = vmatprep.subr.mxu0 0.0
    %566 = vmatpush1.msra.mxu0 0.0
    %567 = vmatprep.subr.mxu0 0.0
    %568 = vmatpush1.msra.mxu0 0.0
    %569 = vmatprep.subr.mxu0 0.0
    %570 = vmatpush1.msra.mxu0 0.0
    %571 = vmatprep.subr.mxu0 0.0
    %572 = vmatpush1.msra.mxu0 0.0
    %573 = vmatprep.subr.mxu0 0.0
    %574 = vmatpush1.msra.mxu0 0.0
    %575 = vmatprep.subr.mxu0 0.0
    %576 = vmatpush1.msra.mxu0 0.0
    %577 = vmatprep.subr.mxu0 0.0
    %578 = vmatpush1.msra.mxu0 0.0
    %579 = vmatprep.subr.mxu0 0.0
    %580 = vmatpush1.msra.mxu0 0.0
    %581 = vmatprep.subr.mxu0 0.0
    %582 = vmatpush1.msra.mxu0 0.0
    %583 = vmatprep.subr.mxu0 0.0
    %584 = vmatpush1.msra.mxu0 0.0
    %585 = vmatprep.subr.mxu0 0.0
    %586 = vmatpush1.msra.mxu0 0.0
    %587 = vmatprep.subr.mxu0 0.0
    %588 = vmatpush1.msra.mxu0 0.0
    %589 = vmatprep.subr.mxu0 0.0
    %590 = vmatpush1.msra.mxu0 0.0
    %591 = vmatprep.subr.mxu0 0.0
    %592 = vmatpush1.msra.mxu0 0.0
    %593 = vmatprep.subr.mxu0 0.0
    %594 = vmatpush1.msra.mxu0 0.0
    %595 = vmatprep.subr.mxu0 0.0
    %596 = vmatpush1.msra.mxu0 0.0
    %597 = vmatprep.subr.mxu0 0.0
    %598 = vmatpush1.msra.mxu0 0.0
    %599 = vmatprep.subr.mxu0 0.0
    %600 = vmatpush1.msra.mxu0 0.0
    %601 = vmatprep.subr.mxu0 0.0
    %602 = vmatpush1.msra.mxu0 0.0
    %603 = vmatprep.subr.mxu0 0.0
    %604 = vmatpush1.msra.mxu0 0.0
    %605 = vmatprep.subr.mxu0 0.0
    %606 = vmatpush1.msra.mxu0 0.0
    %607 = vmatprep.subr.mxu0 0.0
    %608 = vmatpush1.msra.mxu0 0.0
    %609 = vmatprep.subr.mxu0 0.0
    %610 = vmatpush1.msra.mxu0 0.0
    %611 = vmatprep.subr.mxu0 0.0
    %612 = vmatpush1.msra.mxu0 0.0
    %613 = vmatprep.mubr.f32.mxu0 0.0
    %614 = vmatmul.mubr.f32.gmra.mrb[0].mxu0 %v477
    %v615 = vpop.f32.mrb[0].mxu0
    %v616 = vadd.f32 %v443, %v615
    %v617 = vpop.f32.mrb[0].mxu0
    %618 = vdwg.mxu0
    %v619 = vadd.f32 %v616, %v71
    %v620 = vtanh.pop %v619
    %v621 = vmul.f32 %v620, 0.5
    %v622 = vadd.f32 %v621, 0.5
    %v623 = vmul.f32 %v622, %v364
    %625 = vrot.lane.b32.xlu0 %v620, 32
    %v626 = vpop.permute.xlu0 %625
    %v628 = vmul.f32 %v622, %v626
    %630 = vrot.lane.b32.xlu0 %v628, 32
    %v631 = vpop.permute.xlu0 %630
    %v633 = vadd.f32 %v623, %v631
    %v634 = vtanh.pop %v633
    %636 = vrot.lane.b32.xlu0 %v634, 32
    %v637 = vpop.permute.xlu0 %636
    %v639 = vmul.f32 %v622, %v637
    %641 = vrot.lane.b32.xlu0 %v639, 64
    %v642 = vpop.permute.xlu0 %641
    %v643 = vsel %vm208, %v642, 0
    %645 = vmatprep.subr.mxu0 0.0
    %646 = vmatpush1.msra.mxu0 %v34
    %647 = vmatprep.subr.mxu0 0.0
    %648 = vmatpush1.msra.mxu0 %v35
    %649 = vmatprep.subr.mxu0 0.0
    %650 = vmatpush1.msra.mxu0 %v36
    %651 = vmatprep.subr.mxu0 0.0
    %652 = vmatpush1.msra.mxu0 %v37
    %653 = vmatprep.subr.mxu0 0.0
    %654 = vmatpush1.msra.mxu0 0.0
    %655 = vmatprep.subr.mxu0 0.0
    %656 = vmatpush1.msra.mxu0 0.0
    %657 = vmatprep.subr.mxu0 0.0
    %658 = vmatpush1.msra.mxu0 0.0
    %659 = vmatprep.subr.mxu0 0.0
    %660 = vmatpush1.msra.mxu0 0.0
    %661 = vmatprep.subr.mxu0 0.0
    %662 = vmatpush1.msra.mxu0 0.0
    %663 = vmatprep.subr.mxu0 0.0
    %664 = vmatpush1.msra.mxu0 0.0
    %665 = vmatprep.subr.mxu0 0.0
    %666 = vmatpush1.msra.mxu0 0.0
    %667 = vmatprep.subr.mxu0 0.0
    %668 = vmatpush1.msra.mxu0 0.0
    %669 = vmatprep.subr.mxu0 0.0
    %670 = vmatpush1.msra.mxu0 0.0
    %671 = vmatprep.subr.mxu0 0.0
    %672 = vmatpush1.msra.mxu0 0.0
    %673 = vmatprep.subr.mxu0 0.0
    %674 = vmatpush1.msra.mxu0 0.0
    %675 = vmatprep.subr.mxu0 0.0
    %676 = vmatpush1.msra.mxu0 0.0
    %677 = vmatprep.subr.mxu0 0.0
    %678 = vmatpush1.msra.mxu0 0.0
    %679 = vmatprep.subr.mxu0 0.0
    %680 = vmatpush1.msra.mxu0 0.0
    %681 = vmatprep.subr.mxu0 0.0
    %682 = vmatpush1.msra.mxu0 0.0
    %683 = vmatprep.subr.mxu0 0.0
    %684 = vmatpush1.msra.mxu0 0.0
    %685 = vmatprep.subr.mxu0 0.0
    %686 = vmatpush1.msra.mxu0 0.0
    %687 = vmatprep.subr.mxu0 0.0
    %688 = vmatpush1.msra.mxu0 0.0
    %689 = vmatprep.subr.mxu0 0.0
    %690 = vmatpush1.msra.mxu0 0.0
    %691 = vmatprep.subr.mxu0 0.0
    %692 = vmatpush1.msra.mxu0 0.0
    %693 = vmatprep.subr.mxu0 0.0
    %694 = vmatpush1.msra.mxu0 0.0
    %695 = vmatprep.subr.mxu0 0.0
    %696 = vmatpush1.msra.mxu0 0.0
    %697 = vmatprep.subr.mxu0 0.0
    %698 = vmatpush1.msra.mxu0 0.0
    %699 = vmatprep.subr.mxu0 0.0
    %700 = vmatpush1.msra.mxu0 0.0
    %701 = vmatprep.subr.mxu0 0.0
    %702 = vmatpush1.msra.mxu0 0.0
    %703 = vmatprep.subr.mxu0 0.0
    %704 = vmatpush1.msra.mxu0 0.0
    %705 = vmatprep.subr.mxu0 0.0
    %706 = vmatpush1.msra.mxu0 0.0
    %707 = vmatprep.subr.mxu0 0.0
    %708 = vmatpush1.msra.mxu0 0.0
    %709 = vmatprep.mubr.f32.mxu0 0.0
    %710 = vmatmul.mubr.f32.gmra.mrb[0].mxu0 %v643
    %v711 = vpop.f32.mrb[0].mxu0
    %v712 = vadd.f32 0.0, %v711
    %v713 = vpop.f32.mrb[0].mxu0
    %714 = vdwg.mxu0
    %v716 = vrot.slane %v546, 4
    %v718 = vadd.f32 %v176, %v716
    %v719 = vtanh.pop %v718
    %v720 = vmul.f32 %v719, 0.5
    %v721 = vadd.f32 %v720, 0.5
    %v723 = vrot.slane %v466, 6
    %v725 = vmul.f32 %v721, %v723
    %727 = vrot.lane.b32.xlu0 %v719, 32
    %v728 = vpop.permute.xlu0 %727
    %v730 = vmul.f32 %v721, %v728
    %732 = vrot.lane.b32.xlu0 %v730, 32
    %v733 = vpop.permute.xlu0 %732
    %v735 = vadd.f32 %v725, %v733
    %v736 = vtanh.pop %v735
    %738 = vrot.lane.b32.xlu0 %v736, 32
    %v739 = vpop.permute.xlu0 %738
    %v741 = vmul.f32 %v721, %v739
    %v743 = vrot.slane %v741, 4
    %744 = vrot.lane.b32.xlu0 %v743, 64
    %v745 = vpop.permute.xlu0 %744
    %v746 = vsel %vm208, %v745, 0
    %748 = vmatprep.subr.mxu0 0.0
    %749 = vmatpush1.msra.mxu0 %v26
    %750 = vmatprep.subr.mxu0 0.0
    %751 = vmatpush1.msra.mxu0 %v27
    %752 = vmatprep.subr.mxu0 0.0
    %753 = vmatpush1.msra.mxu0 %v28
    %754 = vmatprep.subr.mxu0 0.0
    %755 = vmatpush1.msra.mxu0 %v29
    %756 = vmatprep.subr.mxu0 0.0
    %757 = vmatpush1.msra.mxu0 0.0
    %758 = vmatprep.subr.mxu0 0.0
    %759 = vmatpush1.msra.mxu0 0.0
    %760 = vmatprep.subr.mxu0 0.0
    %761 = vmatpush1.msra.mxu0 0.0
    %762 = vmatprep.subr.mxu0 0.0
    %763 = vmatpush1.msra.mxu0 0.0
    %764 = vmatprep.subr.mxu0 0.0
    %765 = vmatpush1.msra.mxu0 0.0
    %766 = vmatprep.subr.mxu0 0.0
    %767 = vmatpush1.msra.mxu0 0.0
    %768 = vmatprep.subr.mxu0 0.0
    %769 = vmatpush1.msra.mxu0 0.0
    %770 = vmatprep.subr.mxu0 0.0
    %771 = vmatpush1.msra.mxu0 0.0
    %772 = vmatprep.subr.mxu0 0.0
    %773 = vmatpush1.msra.mxu0 0.0
    %774 = vmatprep.subr.mxu0 0.0
    %775 = vmatpush1.msra.mxu0 0.0
    %776 = vmatprep.subr.mxu0 0.0
    %777 = vmatpush1.msra.mxu0 0.0
    %778 = vmatprep.subr.mxu0 0.0
    %779 = vmatpush1.msra.mxu0 0.0
    %780 = vmatprep.subr.mxu0 0.0
    %781 = vmatpush1.msra.mxu0 0.0
    %782 = vmatprep.subr.mxu0 0.0
    %783 = vmatpush1.msra.mxu0 0.0
    %784 = vmatprep.subr.mxu0 0.0
    %785 = vmatpush1.msra.mxu0 0.0
    %786 = vmatprep.subr.mxu0 0.0
    %787 = vmatpush1.msra.mxu0 0.0
    %788 = vmatprep.subr.mxu0 0.0
    %789 = vmatpush1.msra.mxu0 0.0
    %790 = vmatprep.subr.mxu0 0.0
    %791 = vmatpush1.msra.mxu0 0.0
    %792 = vmatprep.subr.mxu0 0.0
    %793 = vmatpush1.msra.mxu0 0.0
    %794 = vmatprep.subr.mxu0 0.0
    %795 = vmatpush1.msra.mxu0 0.0
    %796 = vmatprep.subr.mxu0 0.0
    %797 = vmatpush1.msra.mxu0 0.0
    %798 = vmatprep.subr.mxu0 0.0
    %799 = vmatpush1.msra.mxu0 0.0
    %800 = vmatprep.subr.mxu0 0.0
    %801 = vmatpush1.msra.mxu0 0.0
    %802 = vmatprep.subr.mxu0 0.0
    %803 = vmatpush1.msra.mxu0 0.0
    %804 = vmatprep.subr.mxu0 0.0
    %805 = vmatpush1.msra.mxu0 0.0
    %806 = vmatprep.subr.mxu0 0.0
    %807 = vmatpush1.msra.mxu0 0.0
    %808 = vmatprep.subr.mxu0 0.0
    %809 = vmatpush1.msra.mxu0 0.0
    %810 = vmatprep.subr.mxu0 0.0
    %811 = vmatpush1.msra.mxu0 0.0
    %812 = vmatprep.mubr.f32.mxu0 0.0
    %813 = vmatmul.mubr.f32.gmra.mrb[0].mxu0 %v746
    %v814 = vpop.f32.mrb[0].mxu0
    %v815 = vadd.f32 0.0, %v814
    %v816 = vpop.f32.mrb[0].mxu0
    %817 = vdwg.mxu0
    %818 = vmatprep.subr.mxu0 0.0
    %819 = vmatpush1.msra.mxu0 %v30
    %820 = vmatprep.subr.mxu0 0.0
    %821 = vmatpush1.msra.mxu0 %v31
    %822 = vmatprep.subr.mxu0 0.0
    %823 = vmatpush1.msra.mxu0 %v32
    %824 = vmatprep.subr.mxu0 0.0
    %825 = vmatpush1.msra.mxu0 %v33
    %826 = vmatprep.subr.mxu0 0.0
    %827 = vmatpush1.msra.mxu0 0.0
    %828 = vmatprep.subr.mxu0 0.0
    %829 = vmatpush1.msra.mxu0 0.0
    %830 = vmatprep.subr.mxu0 0.0
    %831 = vmatpush1.msra.mxu0 0.0
    %832 = vmatprep.subr.mxu0 0.0
    %833 = vmatpush1.msra.mxu0 0.0
    %834 = vmatprep.subr.mxu0 0.0
    %835 = vmatpush1.msra.mxu0 0.0
    %836 = vmatprep.subr.mxu0 0.0
    %837 = vmatpush1.msra.mxu0 0.0
    %838 = vmatprep.subr.mxu0 0.0
    %839 = vmatpush1.msra.mxu0 0.0
    %840 = vmatprep.subr.mxu0 0.0
    %841 = vmatpush1.msra.mxu0 0.0
    %842 = vmatprep.subr.mxu0 0.0
    %843 = vmatpush1.msra.mxu0 0.0
    %844 = vmatprep.subr.mxu0 0.0
    %845 = vmatpush1.msra.mxu0 0.0
    %846 = vmatprep.subr.mxu0 0.0
    %847 = vmatpush1.msra.mxu0 0.0
    %848 = vmatprep.subr.mxu0 0.0
    %849 = vmatpush1.msra.mxu0 0.0
    %850 = vmatprep.subr.mxu0 0.0
    %851 = vmatpush1.msra.mxu0 0.0
    %852 = vmatprep.subr.mxu0 0.0
    %853 = vmatpush1.msra.mxu0 0.0
    %854 = vmatprep.subr.mxu0 0.0
    %855 = vmatpush1.msra.mxu0 0.0
    %856 = vmatprep.subr.mxu0 0.0
    %857 = vmatpush1.msra.mxu0 0.0
    %858 = vmatprep.subr.mxu0 0.0
    %859 = vmatpush1.msra.mxu0 0.0
    %860 = vmatprep.subr.mxu0 0.0
    %861 = vmatpush1.msra.mxu0 0.0
    %862 = vmatprep.subr.mxu0 0.0
    %863 = vmatpush1.msra.mxu0 0.0
    %864 = vmatprep.subr.mxu0 0.0
    %865 = vmatpush1.msra.mxu0 0.0
    %866 = vmatprep.subr.mxu0 0.0
    %867 = vmatpush1.msra.mxu0 0.0
    %868 = vmatprep.subr.mxu0 0.0
    %869 = vmatpush1.msra.mxu0 0.0
    %870 = vmatprep.subr.mxu0 0.0
    %871 = vmatpush1.msra.mxu0 0.0
    %872 = vmatprep.subr.mxu0 0.0
    %873 = vmatpush1.msra.mxu0 0.0
    %874 = vmatprep.subr.mxu0 0.0
    %875 = vmatpush1.msra.mxu0 0.0
    %876 = vmatprep.subr.mxu0 0.0
    %877 = vmatpush1.msra.mxu0 0.0
    %878 = vmatprep.subr.mxu0 0.0
    %879 = vmatpush1.msra.mxu0 0.0
    %880 = vmatprep.subr.mxu0 0.0
    %881 = vmatpush1.msra.mxu0 0.0
    %882 = vmatprep.mubr.f32.mxu0 0.0
    %883 = vmatmul.mubr.f32.gmra.mrb[0].mxu0 %v746
    %v884 = vpop.f32.mrb[0].mxu0
    %v885 = vadd.f32 %v712, %v884
    %v886 = vpop.f32.mrb[0].mxu0
    %887 = vdwg.mxu0
    %v888 = vadd.f32 %v885, %v71
    %v889 = vtanh.pop %v888
    %v890 = vmul.f32 %v889, 0.5
    %v891 = vadd.f32 %v890, 0.5
    %v892 = vmul.f32 %v891, %v633
    %894 = vrot.lane.b32.xlu0 %v889, 32
    %v895 = vpop.permute.xlu0 %894
    %v897 = vmul.f32 %v891, %v895
    %899 = vrot.lane.b32.xlu0 %v897, 32
    %v900 = vpop.permute.xlu0 %899
    %v902 = vadd.f32 %v892, %v900
    %v903 = vtanh.pop %v902
    %905 = vrot.lane.b32.xlu0 %v903, 32
    %v906 = vpop.permute.xlu0 %905
    %v908 = vmul.f32 %v891, %v906
    %910 = vrot.lane.b32.xlu0 %v908, 64
    %v911 = vpop.permute.xlu0 %910
    %v912 = vsel %vm208, %v911, 0
    %914 = vmatprep.subr.mxu0 0.0
    %915 = vmatpush1.msra.mxu0 %v34
    %916 = vmatprep.subr.mxu0 0.0
    %917 = vmatpush1.msra.mxu0 %v35
    %918 = vmatprep.subr.mxu0 0.0
    %919 = vmatpush1.msra.mxu0 %v36
    %920 = vmatprep.subr.mxu0 0.0
    %921 = vmatpush1.msra.mxu0 %v37
    %922 = vmatprep.subr.mxu0 0.0
    %923 = vmatpush1.msra.mxu0 0.0
    %924 = vmatprep.subr.mxu0 0.0
    %925 = vmatpush1.msra.mxu0 0.0
    %926 = vmatprep.subr.mxu0 0.0
    %927 = vmatpush1.msra.mxu0 0.0
    %928 = vmatprep.subr.mxu0 0.0
    %929 = vmatpush1.msra.mxu0 0.0
    %930 = vmatprep.subr.mxu0 0.0
    %931 = vmatpush1.msra.mxu0 0.0
    %932 = vmatprep.subr.mxu0 0.0
    %933 = vmatpush1.msra.mxu0 0.0
    %934 = vmatprep.subr.mxu0 0.0
    %935 = vmatpush1.msra.mxu0 0.0
    %936 = vmatprep.subr.mxu0 0.0
    %937 = vmatpush1.msra.mxu0 0.0
    %938 = vmatprep.subr.mxu0 0.0
    %939 = vmatpush1.msra.mxu0 0.0
    %940 = vmatprep.subr.mxu0 0.0
    %941 = vmatpush1.msra.mxu0 0.0
    %942 = vmatprep.subr.mxu0 0.0
    %943 = vmatpush1.msra.mxu0 0.0
    %944 = vmatprep.subr.mxu0 0.0
    %945 = vmatpush1.msra.mxu0 0.0
    %946 = vmatprep.subr.mxu0 0.0
    %947 = vmatpush1.msra.mxu0 0.0
    %948 = vmatprep.subr.mxu0 0.0
    %949 = vmatpush1.msra.mxu0 0.0
    %950 = vmatprep.subr.mxu0 0.0
    %951 = vmatpush1.msra.mxu0 0.0
    %952 = vmatprep.subr.mxu0 0.0
    %953 = vmatpush1.msra.mxu0 0.0
    %954 = vmatprep.subr.mxu0 0.0
    %955 = vmatpush1.msra.mxu0 0.0
    %956 = vmatprep.subr.mxu0 0.0
    %957 = vmatpush1.msra.mxu0 0.0
    %958 = vmatprep.subr.mxu0 0.0
    %959 = vmatpush1.msra.mxu0 0.0
    %960 = vmatprep.subr.mxu0 0.0
    %961 = vmatpush1.msra.mxu0 0.0
    %962 = vmatprep.subr.mxu0 0.0
    %963 = vmatpush1.msra.mxu0 0.0
    %964 = vmatprep.subr.mxu0 0.0
    %965 = vmatpush1.msra.mxu0 0.0
    %966 = vmatprep.subr.mxu0 0.0
    %967 = vmatpush1.msra.mxu0 0.0
    %968 = vmatprep.subr.mxu0 0.0
    %969 = vmatpush1.msra.mxu0 0.0
    %970 = vmatprep.subr.mxu0 0.0
    %971 = vmatpush1.msra.mxu0 0.0
    %972 = vmatprep.subr.mxu0 0.0
    %973 = vmatpush1.msra.mxu0 0.0
    %974 = vmatprep.subr.mxu0 0.0
    %975 = vmatpush1.msra.mxu0 0.0
    %976 = vmatprep.subr.mxu0 0.0
    %977 = vmatpush1.msra.mxu0 0.0
    %978 = vmatprep.mubr.f32.mxu0 0.0
    %979 = vmatmul.mubr.f32.gmra.mrb[0].mxu0 %v912
    %v980 = vpop.f32.mrb[0].mxu0
    %v981 = vadd.f32 0.0, %v980
    %v982 = vpop.f32.mrb[0].mxu0
    %983 = vdwg.mxu0
    %v985 = vrot.slane %v815, 2
    %v987 = vadd.f32 %v176, %v985
    %v988 = vtanh.pop %v987
    %v989 = vmul.f32 %v988, 0.5
    %v990 = vadd.f32 %v989, 0.5
    %v992 = vrot.slane %v735, 6
    %v994 = vmul.f32 %v990, %v992
    %996 = vrot.lane.b32.xlu0 %v988, 32
    %v997 = vpop.permute.xlu0 %996
    %v999 = vmul.f32 %v990, %v997
    %1001 = vrot.lane.b32.xlu0 %v999, 32
    %v1002 = vpop.permute.xlu0 %1001
    %v1004 = vadd.f32 %v994, %v1002
    %v1005 = vtanh.pop %v1004
    %1007 = vrot.lane.b32.xlu0 %v1005, 32
    %v1008 = vpop.permute.xlu0 %1007
    %v1010 = vmul.f32 %v990, %v1008
    %v1012 = vrot.slane %v1010, 6
    %1013 = vrot.lane.b32.xlu0 %v1012, 64
    %v1014 = vpop.permute.xlu0 %1013
    %v1015 = vsel %vm208, %v1014, 0
    %1017 = vmatprep.subr.mxu0 0.0
    %1018 = vmatpush1.msra.mxu0 %v26
    %1019 = vmatprep.subr.mxu0 0.0
    %1020 = vmatpush1.msra.mxu0 %v27
    %1021 = vmatprep.subr.mxu0 0.0
    %1022 = vmatpush1.msra.mxu0 %v28
    %1023 = vmatprep.subr.mxu0 0.0
    %1024 = vmatpush1.msra.mxu0 %v29
    %1025 = vmatprep.subr.mxu0 0.0
    %1026 = vmatpush1.msra.mxu0 0.0
    %1027 = vmatprep.subr.mxu0 0.0
    %1028 = vmatpush1.msra.mxu0 0.0
    %1029 = vmatprep.subr.mxu0 0.0
    %1030 = vmatpush1.msra.mxu0 0.0
    %1031 = vmatprep.subr.mxu0 0.0
    %1032 = vmatpush1.msra.mxu0 0.0
    %1033 = vmatprep.subr.mxu0 0.0
    %1034 = vmatpush1.msra.mxu0 0.0
    %1035 = vmatprep.subr.mxu0 0.0
    %1036 = vmatpush1.msra.mxu0 0.0
    %1037 = vmatprep.subr.mxu0 0.0
    %1038 = vmatpush1.msra.mxu0 0.0
    %1039 = vmatprep.subr.mxu0 0.0
    %1040 = vmatpush1.msra.mxu0 0.0
    %1041 = vmatprep.subr.mxu0 0.0
    %1042 = vmatpush1.msra.mxu0 0.0
    %1043 = vmatprep.subr.mxu0 0.0
    %1044 = vmatpush1.msra.mxu0 0.0
    %1045 = vmatprep.subr.mxu0 0.0
    %1046 = vmatpush1.msra.mxu0 0.0
    %1047 = vmatprep.subr.mxu0 0.0
    %1048 = vmatpush1.msra.mxu0 0.0
    %1049 = vmatprep.subr.mxu0 0.0
    %1050 = vmatpush1.msra.mxu0 0.0
    %1051 = vmatprep.subr.mxu0 0.0
    %1052 = vmatpush1.msra.mxu0 0.0
    %1053 = vmatprep.subr.mxu0 0.0
    %1054 = vmatpush1.msra.mxu0 0.0
    %1055 = vmatprep.subr.mxu0 0.0
    %1056 = vmatpush1.msra.mxu0 0.0
    %1057 = vmatprep.subr.mxu0 0.0
    %1058 = vmatpush1.msra.mxu0 0.0
    %1059 = vmatprep.subr.mxu0 0.0
    %1060 = vmatpush1.msra.mxu0 0.0
    %1061 = vmatprep.subr.mxu0 0.0
    %1062 = vmatpush1.msra.mxu0 0.0
    %1063 = vmatprep.subr.mxu0 0.0
    %1064 = vmatpush1.msra.mxu0 0.0
    %1065 = vmatprep.subr.mxu0 0.0
    %1066 = vmatpush1.msra.mxu0 0.0
    %1067 = vmatprep.subr.mxu0 0.0
    %1068 = vmatpush1.msra.mxu0 0.0
    %1069 = vmatprep.subr.mxu0 0.0
    %1070 = vmatpush1.msra.mxu0 0.0
    %1071 = vmatprep.subr.mxu0 0.0
    %1072 = vmatpush1.msra.mxu0 0.0
    %1073 = vmatprep.subr.mxu0 0.0
    %1074 = vmatpush1.msra.mxu0 0.0
    %1075 = vmatprep.subr.mxu0 0.0
    %1076 = vmatpush1.msra.mxu0 0.0
    %1077 = vmatprep.subr.mxu0 0.0
    %1078 = vmatpush1.msra.mxu0 0.0
    %1079 = vmatprep.subr.mxu0 0.0
    %1080 = vmatpush1.msra.mxu0 0.0
    %1081 = vmatprep.mubr.f32.mxu0 0.0
    %1082 = vmatmul.mubr.f32.gmra.mrb[0].mxu0 %v1015
    %v1083 = vpop.f32.mrb[0].mxu0
    %v1084 = vadd.f32 0.0, %v1083
    %v1085 = vpop.f32.mrb[0].mxu0
    %1086 = vdwg.mxu0
    %1087 = vmatprep.subr.mxu0 0.0
    %1088 = vmatpush1.msra.mxu0 %v30
    %1089 = vmatprep.subr.mxu0 0.0
    %1090 = vmatpush1.msra.mxu0 %v31
    %1091 = vmatprep.subr.mxu0 0.0
    %1092 = vmatpush1.msra.mxu0 %v32
    %1093 = vmatprep.subr.mxu0 0.0
    %1094 = vmatpush1.msra.mxu0 %v33
    %1095 = vmatprep.subr.mxu0 0.0
    %1096 = vmatpush1.msra.mxu0 0.0
    %1097 = vmatprep.subr.mxu0 0.0
    %1098 = vmatpush1.msra.mxu0 0.0
    %1099 = vmatprep.subr.mxu0 0.0
    %1100 = vmatpush1.msra.mxu0 0.0
    %1101 = vmatprep.subr.mxu0 0.0
    %1102 = vmatpush1.msra.mxu0 0.0
    %1103 = vmatprep.subr.mxu0 0.0
    %1104 = vmatpush1.msra.mxu0 0.0
    %1105 = vmatprep.subr.mxu0 0.0
    %1106 = vmatpush1.msra.mxu0 0.0
    %1107 = vmatprep.subr.mxu0 0.0
    %1108 = vmatpush1.msra.mxu0 0.0
    %1109 = vmatprep.subr.mxu0 0.0
    %1110 = vmatpush1.msra.mxu0 0.0
    %1111 = vmatprep.subr.mxu0 0.0
    %1112 = vmatpush1.msra.mxu0 0.0
    %1113 = vmatprep.subr.mxu0 0.0
    %1114 = vmatpush1.msra.mxu0 0.0
    %1115 = vmatprep.subr.mxu0 0.0
    %1116 = vmatpush1.msra.mxu0 0.0
    %1117 = vmatprep.subr.mxu0 0.0
    %1118 = vmatpush1.msra.mxu0 0.0
    %1119 = vmatprep.subr.mxu0 0.0
    %1120 = vmatpush1.msra.mxu0 0.0
    %1121 = vmatprep.subr.mxu0 0.0
    %1122 = vmatpush1.msra.mxu0 0.0
    %1123 = vmatprep.subr.mxu0 0.0
    %1124 = vmatpush1.msra.mxu0 0.0
    %1125 = vmatprep.subr.mxu0 0.0
    %1126 = vmatpush1.msra.mxu0 0.0
    %1127 = vmatprep.subr.mxu0 0.0
    %1128 = vmatpush1.msra.mxu0 0.0
    %1129 = vmatprep.subr.mxu0 0.0
    %1130 = vmatpush1.msra.mxu0 0.0
    %1131 = vmatprep.subr.mxu0 0.0
    %1132 = vmatpush1.msra.mxu0 0.0
    %1133 = vmatprep.subr.mxu0 0.0
    %1134 = vmatpush1.msra.mxu0 0.0
    %1135 = vmatprep.subr.mxu0 0.0
    %1136 = vmatpush1.msra.mxu0 0.0
    %1137 = vmatprep.subr.mxu0 0.0
    %1138 = vmatpush1.msra.mxu0 0.0
    %1139 = vmatprep.subr.mxu0 0.0
    %1140 = vmatpush1.msra.mxu0 0.0
    %1141 = vmatprep.subr.mxu0 0.0
    %1142 = vmatpush1.msra.mxu0 0.0
    %1143 = vmatprep.subr.mxu0 0.0
    %1144 = vmatpush1.msra.mxu0 0.0
    %1145 = vmatprep.subr.mxu0 0.0
    %1146 = vmatpush1.msra.mxu0 0.0
    %1147 = vmatprep.subr.mxu0 0.0
    %1148 = vmatpush1.msra.mxu0 0.0
    %1149 = vmatprep.subr.mxu0 0.0
    %1150 = vmatpush1.msra.mxu0 0.0
    %1151 = vmatprep.mubr.f32.mxu0 0.0
    %1152 = vmatmul.mubr.f32.gmra.mrb[0].mxu0 %v1015
    %v1153 = vpop.f32.mrb[0].mxu0
    %v1154 = vadd.f32 %v981, %v1153
    %v1155 = vpop.f32.mrb[0].mxu0
    %1156 = vdwg.mxu0
    %v1157 = vadd.f32 %v1154, %v71
    %v1158 = vtanh.pop %v1157
    %v1159 = vmul.f32 %v1158, 0.5
    %v1160 = vadd.f32 %v1159, 0.5
    %v1161 = vmul.f32 %v1160, %v902
    %1163 = vrot.lane.b32.xlu0 %v1158, 32
    %v1164 = vpop.permute.xlu0 %1163
    %v1166 = vmul.f32 %v1160, %v1164
    %1168 = vrot.lane.b32.xlu0 %v1166, 32
    %v1169 = vpop.permute.xlu0 %1168
    %v1171 = vadd.f32 %v1161, %v1169
    %v1172 = vtanh.pop %v1171
    %1174 = vrot.lane.b32.xlu0 %v1172, 32
    %v1175 = vpop.permute.xlu0 %1174
    %v1177 = vmul.f32 %v1160, %v1175
    %1179 = vrot.lane.b32.xlu0 %v1177, 64
    %v1180 = vpop.permute.xlu0 %1179
    %v1181 = vsel %vm208, %v1180, 0
    %1183 = vmatprep.subr.mxu0 0.0
    %1184 = vmatpush1.msra.mxu0 %v34
    %1185 = vmatprep.subr.mxu0 0.0
    %1186 = vmatpush1.msra.mxu0 %v35
    %1187 = vmatprep.subr.mxu0 0.0
    %1188 = vmatpush1.msra.mxu0 %v36
    %1189 = vmatprep.subr.mxu0 0.0
    %1190 = vmatpush1.msra.mxu0 %v37
    %1191 = vmatprep.subr.mxu0 0.0
    %1192 = vmatpush1.msra.mxu0 0.0
    %1193 = vmatprep.subr.mxu0 0.0
    %1194 = vmatpush1.msra.mxu0 0.0
    %1195 = vmatprep.subr.mxu0 0.0
    %1196 = vmatpush1.msra.mxu0 0.0
    %1197 = vmatprep.subr.mxu0 0.0
    %1198 = vmatpush1.msra.mxu0 0.0
    %1199 = vmatprep.subr.mxu0 0.0
    %1200 = vmatpush1.msra.mxu0 0.0
    %1201 = vmatprep.subr.mxu0 0.0
    %1202 = vmatpush1.msra.mxu0 0.0
    %1203 = vmatprep.subr.mxu0 0.0
    %1204 = vmatpush1.msra.mxu0 0.0
    %1205 = vmatprep.subr.mxu0 0.0
    %1206 = vmatpush1.msra.mxu0 0.0
    %1207 = vmatprep.subr.mxu0 0.0
    %1208 = vmatpush1.msra.mxu0 0.0
    %1209 = vmatprep.subr.mxu0 0.0
    %1210 = vmatpush1.msra.mxu0 0.0
    %1211 = vmatprep.subr.mxu0 0.0
    %1212 = vmatpush1.msra.mxu0 0.0
    %1213 = vmatprep.subr.mxu0 0.0
    %1214 = vmatpush1.msra.mxu0 0.0
    %1215 = vmatprep.subr.mxu0 0.0
    %1216 = vmatpush1.msra.mxu0 0.0
    %1217 = vmatprep.subr.mxu0 0.0
    %1218 = vmatpush1.msra.mxu0 0.0
    %1219 = vmatprep.subr.mxu0 0.0
    %1220 = vmatpush1.msra.mxu0 0.0
    %1221 = vmatprep.subr.mxu0 0.0
    %1222 = vmatpush1.msra.mxu0 0.0
    %1223 = vmatprep.subr.mxu0 0.0
    %1224 = vmatpush1.msra.mxu0 0.0
    %1225 = vmatprep.subr.mxu0 0.0
    %1226 = vmatpush1.msra.mxu0 0.0
    %1227 = vmatprep.subr.mxu0 0.0
    %1228 = vmatpush1.msra.mxu0 0.0
    %1229 = vmatprep.subr.mxu0 0.0
    %1230 = vmatpush1.msra.mxu0 0.0
    %1231 = vmatprep.subr.mxu0 0.0
    %1232 = vmatpush1.msra.mxu0 0.0
    %1233 = vmatprep.subr.mxu0 0.0
    %1234 = vmatpush1.msra.mxu0 0.0
    %1235 = vmatprep.subr.mxu0 0.0
    %1236 = vmatpush1.msra.mxu0 0.0
    %1237 = vmatprep.subr.mxu0 0.0
    %1238 = vmatpush1.msra.mxu0 0.0
    %1239 = vmatprep.subr.mxu0 0.0
    %1240 = vmatpush1.msra.mxu0 0.0
    %1241 = vmatprep.subr.mxu0 0.0
    %1242 = vmatpush1.msra.mxu0 0.0
    %1243 = vmatprep.subr.mxu0 0.0
    %1244 = vmatpush1.msra.mxu0 0.0
    %1245 = vmatprep.subr.mxu0 0.0
    %1246 = vmatpush1.msra.mxu0 0.0
    %1247 = vmatprep.mubr.f32.mxu0 0.0
    %1248 = vmatmul.mubr.f32.gmra.mrb[0].mxu0 %v1181
    %v1249 = vpop.f32.mrb[0].mxu0
    %v1250 = vadd.f32 0.0, %v1249
    %v1251 = vpop.f32.mrb[0].mxu0
    %1252 = vdwg.mxu0
    %v1253 = vadd.f32 %v181, %v1084
    %v1254 = vtanh.pop %v1253
    %v1255 = vmul.f32 %v1254, 0.5
    %v1256 = vadd.f32 %v1255, 0.5
    %v1258 = vrot.slane %v1004, 6
    %v1260 = vmul.f32 %v1256, %v1258
    %1262 = vrot.lane.b32.xlu0 %v1254, 32
    %v1263 = vpop.permute.xlu0 %1262
    %v1265 = vmul.f32 %v1256, %v1263
    %1267 = vrot.lane.b32.xlu0 %v1265, 32
    %v1268 = vpop.permute.xlu0 %1267
    %v1270 = vadd.f32 %v1260, %v1268
    %v1271 = vtanh.pop %v1270
    %1273 = vrot.lane.b32.xlu0 %v1271, 32
    %v1274 = vpop.permute.xlu0 %1273
    %v1276 = vmul.f32 %v1256, %v1274
    %1278 = vrot.lane.b32.xlu0 %v1276, 64
    %v1279 = vpop.permute.xlu0 %1278
    %v1280 = vsel %vm208, %v1279, 0
    %1282 = vmatprep.subr.mxu0 0.0
    %1283 = vmatpush1.msra.mxu0 %v26
    %1284 = vmatprep.subr.mxu0 0.0
    %1285 = vmatpush1.msra.mxu0 %v27
    %1286 = vmatprep.subr.mxu0 0.0
    %1287 = vmatpush1.msra.mxu0 %v28
    %1288 = vmatprep.subr.mxu0 0.0
    %1289 = vmatpush1.msra.mxu0 %v29
    %1290 = vmatprep.subr.mxu0 0.0
    %1291 = vmatpush1.msra.mxu0 0.0
    %1292 = vmatprep.subr.mxu0 0.0
    %1293 = vmatpush1.msra.mxu0 0.0
    %1294 = vmatprep.subr.mxu0 0.0
    %1295 = vmatpush1.msra.mxu0 0.0
    %1296 = vmatprep.subr.mxu0 0.0
    %1297 = vmatpush1.msra.mxu0 0.0
    %1298 = vmatprep.subr.mxu0 0.0
    %1299 = vmatpush1.msra.mxu0 0.0
    %1300 = vmatprep.subr.mxu0 0.0
    %1301 = vmatpush1.msra.mxu0 0.0
    %1302 = vmatprep.subr.mxu0 0.0
    %1303 = vmatpush1.msra.mxu0 0.0
    %1304 = vmatprep.subr.mxu0 0.0
    %1305 = vmatpush1.msra.mxu0 0.0
    %1306 = vmatprep.subr.mxu0 0.0
    %1307 = vmatpush1.msra.mxu0 0.0
    %1308 = vmatprep.subr.mxu0 0.0
    %1309 = vmatpush1.msra.mxu0 0.0
    %1310 = vmatprep.subr.mxu0 0.0
    %1311 = vmatpush1.msra.mxu0 0.0
    %1312 = vmatprep.subr.mxu0 0.0
    %1313 = vmatpush1.msra.mxu0 0.0
    %1314 = vmatprep.subr.mxu0 0.0
    %1315 = vmatpush1.msra.mxu0 0.0
    %1316 = vmatprep.subr.mxu0 0.0
    %1317 = vmatpush1.msra.mxu0 0.0
    %1318 = vmatprep.subr.mxu0 0.0
    %1319 = vmatpush1.msra.mxu0 0.0
    %1320 = vmatprep.subr.mxu0 0.0
    %1321 = vmatpush1.msra.mxu0 0.0
    %1322 = vmatprep.subr.mxu0 0.0
    %1323 = vmatpush1.msra.mxu0 0.0
    %1324 = vmatprep.subr.mxu0 0.0
    %1325 = vmatpush1.msra.mxu0 0.0
    %1326 = vmatprep.subr.mxu0 0.0
    %1327 = vmatpush1.msra.mxu0 0.0
    %1328 = vmatprep.subr.mxu0 0.0
    %1329 = vmatpush1.msra.mxu0 0.0
    %1330 = vmatprep.subr.mxu0 0.0
    %1331 = vmatpush1.msra.mxu0 0.0
    %1332 = vmatprep.subr.mxu0 0.0
    %1333 = vmatpush1.msra.mxu0 0.0
    %1334 = vmatprep.subr.mxu0 0.0
    %1335 = vmatpush1.msra.mxu0 0.0
    %1336 = vmatprep.subr.mxu0 0.0
    %1337 = vmatpush1.msra.mxu0 0.0
    %1338 = vmatprep.subr.mxu0 0.0
    %1339 = vmatpush1.msra.mxu0 0.0
    %1340 = vmatprep.subr.mxu0 0.0
    %1341 = vmatpush1.msra.mxu0 0.0
    %1342 = vmatprep.subr.mxu0 0.0
    %1343 = vmatpush1.msra.mxu0 0.0
    %1344 = vmatprep.subr.mxu0 0.0
    %1345 = vmatpush1.msra.mxu0 0.0
    %1346 = vmatprep.mubr.f32.mxu0 0.0
    %1347 = vmatmul.mubr.f32.gmra.mrb[0].mxu0 %v1280
    %v1348 = vpop.f32.mrb[0].mxu0
    %v1349 = vadd.f32 0.0, %v1348
    %v1350 = vpop.f32.mrb[0].mxu0
    %1351 = vdwg.mxu0
    %1352 = vmatprep.subr.mxu0 0.0
    %1353 = vmatpush1.msra.mxu0 %v30
    %1354 = vmatprep.subr.mxu0 0.0
    %1355 = vmatpush1.msra.mxu0 %v31
    %1356 = vmatprep.subr.mxu0 0.0
    %1357 = vmatpush1.msra.mxu0 %v32
    %1358 = vmatprep.subr.mxu0 0.0
    %1359 = vmatpush1.msra.mxu0 %v33
    %1360 = vmatprep.subr.mxu0 0.0
    %1361 = vmatpush1.msra.mxu0 0.0
    %1362 = vmatprep.subr.mxu0 0.0
    %1363 = vmatpush1.msra.mxu0 0.0
    %1364 = vmatprep.subr.mxu0 0.0
    %1365 = vmatpush1.msra.mxu0 0.0
    %1366 = vmatprep.subr.mxu0 0.0
    %1367 = vmatpush1.msra.mxu0 0.0
    %1368 = vmatprep.subr.mxu0 0.0
    %1369 = vmatpush1.msra.mxu0 0.0
    %1370 = vmatprep.subr.mxu0 0.0
    %1371 = vmatpush1.msra.mxu0 0.0
    %1372 = vmatprep.subr.mxu0 0.0
    %1373 = vmatpush1.msra.mxu0 0.0
    %1374 = vmatprep.subr.mxu0 0.0
    %1375 = vmatpush1.msra.mxu0 0.0
    %1376 = vmatprep.subr.mxu0 0.0
    %1377 = vmatpush1.msra.mxu0 0.0
    %1378 = vmatprep.subr.mxu0 0.0
    %1379 = vmatpush1.msra.mxu0 0.0
    %1380 = vmatprep.subr.mxu0 0.0
    %1381 = vmatpush1.msra.mxu0 0.0
    %1382 = vmatprep.subr.mxu0 0.0
    %1383 = vmatpush1.msra.mxu0 0.0
    %1384 = vmatprep.subr.mxu0 0.0
    %1385 = vmatpush1.msra.mxu0 0.0
    %1386 = vmatprep.subr.mxu0 0.0
    %1387 = vmatpush1.msra.mxu0 0.0
    %1388 = vmatprep.subr.mxu0 0.0
    %1389 = vmatpush1.msra.mxu0 0.0
    %1390 = vmatprep.subr.mxu0 0.0
    %1391 = vmatpush1.msra.mxu0 0.0
    %1392 = vmatprep.subr.mxu0 0.0
    %1393 = vmatpush1.msra.mxu0 0.0
    %1394 = vmatprep.subr.mxu0 0.0
    %1395 = vmatpush1.msra.mxu0 0.0
    %1396 = vmatprep.subr.mxu0 0.0
    %1397 = vmatpush1.msra.mxu0 0.0
    %1398 = vmatprep.subr.mxu0 0.0
    %1399 = vmatpush1.msra.mxu0 0.0
    %1400 = vmatprep.subr.mxu0 0.0
    %1401 = vmatpush1.msra.mxu0 0.0
    %1402 = vmatprep.subr.mxu0 0.0
    %1403 = vmatpush1.msra.mxu0 0.0
    %1404 = vmatprep.subr.mxu0 0.0
    %1405 = vmatpush1.msra.mxu0 0.0
    %1406 = vmatprep.subr.mxu0 0.0
    %1407 = vmatpush1.msra.mxu0 0.0
    %1408 = vmatprep.subr.mxu0 0.0
    %1409 = vmatpush1.msra.mxu0 0.0
    %1410 = vmatprep.subr.mxu0 0.0
    %1411 = vmatpush1.msra.mxu0 0.0
    %1412 = vmatprep.subr.mxu0 0.0
    %1413 = vmatpush1.msra.mxu0 0.0
    %1414 = vmatprep.subr.mxu0 0.0
    %1415 = vmatpush1.msra.mxu0 0.0
    %1416 = vmatprep.mubr.f32.mxu0 0.0
    %1417 = vmatmul.mubr.f32.gmra.mrb[0].mxu0 %v1280
    %v1418 = vpop.f32.mrb[0].mxu0
    %v1419 = vadd.f32 %v1250, %v1418
    %v1420 = vpop.f32.mrb[0].mxu0
    %1421 = vdwg.mxu0
    %v1422 = vadd.f32 %v1419, %v71
    %v1423 = vtanh.pop %v1422
    %v1424 = vmul.f32 %v1423, 0.5
    %v1425 = vadd.f32 %v1424, 0.5
    %v1426 = vmul.f32 %v1425, %v1171
    %1428 = vrot.lane.b32.xlu0 %v1423, 32
    %v1429 = vpop.permute.xlu0 %1428
    %v1431 = vmul.f32 %v1425, %v1429
    %1433 = vrot.lane.b32.xlu0 %v1431, 32
    %v1434 = vpop.permute.xlu0 %1433
    %v1436 = vadd.f32 %v1426, %v1434
    %v1437 = vtanh.pop %v1436
    %1439 = vrot.lane.b32.xlu0 %v1437, 32
    %v1440 = vpop.permute.xlu0 %1439
    %v1442 = vmul.f32 %v1425, %v1440
    %1444 = vrot.lane.b32.xlu0 %v1442, 64
    %v1445 = vpop.permute.xlu0 %1444
    %v1446 = vsel %vm208, %v1445, 0
    %1448 = vmatprep.subr.mxu0 0.0
    %1449 = vmatpush1.msra.mxu0 %v34
    %1450 = vmatprep.subr.mxu0 0.0
    %1451 = vmatpush1.msra.mxu0 %v35
    %1452 = vmatprep.subr.mxu0 0.0
    %1453 = vmatpush1.msra.mxu0 %v36
    %1454 = vmatprep.subr.mxu0 0.0
    %1455 = vmatpush1.msra.mxu0 %v37
    %1456 = vmatprep.subr.mxu0 0.0
    %1457 = vmatpush1.msra.mxu0 0.0
    %1458 = vmatprep.subr.mxu0 0.0
    %1459 = vmatpush1.msra.mxu0 0.0
    %1460 = vmatprep.subr.mxu0 0.0
    %1461 = vmatpush1.msra.mxu0 0.0
    %1462 = vmatprep.subr.mxu0 0.0
    %1463 = vmatpush1.msra.mxu0 0.0
    %1464 = vmatprep.subr.mxu0 0.0
    %1465 = vmatpush1.msra.mxu0 0.0
    %1466 = vmatprep.subr.mxu0 0.0
    %1467 = vmatpush1.msra.mxu0 0.0
    %1468 = vmatprep.subr.mxu0 0.0
    %1469 = vmatpush1.msra.mxu0 0.0
    %1470 = vmatprep.subr.mxu0 0.0
    %1471 = vmatpush1.msra.mxu0 0.0
    %1472 = vmatprep.subr.mxu0 0.0
    %1473 = vmatpush1.msra.mxu0 0.0
    %1474 = vmatprep.subr.mxu0 0.0
    %1475 = vmatpush1.msra.mxu0 0.0
    %1476 = vmatprep.subr.mxu0 0.0
    %1477 = vmatpush1.msra.mxu0 0.0
    %1478 = vmatprep.subr.mxu0 0.0
    %1479 = vmatpush1.msra.mxu0 0.0
    %1480 = vmatprep.subr.mxu0 0.0
    %1481 = vmatpush1.msra.mxu0 0.0
    %1482 = vmatprep.subr.mxu0 0.0
    %1483 = vmatpush1.msra.mxu0 0.0
    %1484 = vmatprep.subr.mxu0 0.0
    %1485 = vmatpush1.msra.mxu0 0.0
    %1486 = vmatprep.subr.mxu0 0.0
    %1487 = vmatpush1.msra.mxu0 0.0
    %1488 = vmatprep.subr.mxu0 0.0
    %1489 = vmatpush1.msra.mxu0 0.0
    %1490 = vmatprep.subr.mxu0 0.0
    %1491 = vmatpush1.msra.mxu0 0.0
    %1492 = vmatprep.subr.mxu0 0.0
    %1493 = vmatpush1.msra.mxu0 0.0
    %1494 = vmatprep.subr.mxu0 0.0
    %1495 = vmatpush1.msra.mxu0 0.0
    %1496 = vmatprep.subr.mxu0 0.0
    %1497 = vmatpush1.msra.mxu0 0.0
    %1498 = vmatprep.subr.mxu0 0.0
    %1499 = vmatpush1.msra.mxu0 0.0
    %1500 = vmatprep.subr.mxu0 0.0
    %1501 = vmatpush1.msra.mxu0 0.0
    %1502 = vmatprep.subr.mxu0 0.0
    %1503 = vmatpush1.msra.mxu0 0.0
    %1504 = vmatprep.subr.mxu0 0.0
    %1505 = vmatpush1.msra.mxu0 0.0
    %1506 = vmatprep.subr.mxu0 0.0
    %1507 = vmatpush1.msra.mxu0 0.0
    %1508 = vmatprep.subr.mxu0 0.0
    %1509 = vmatpush1.msra.mxu0 0.0
    %1510 = vmatprep.subr.mxu0 0.0
    %1511 = vmatpush1.msra.mxu0 0.0
    %1512 = vmatprep.mubr.f32.mxu0 0.0
    %1513 = vmatmul.mubr.f32.gmra.mrb[0].mxu0 %v1446
    %v1514 = vpop.f32.mrb[0].mxu0
    %v1515 = vadd.f32 0.0, %v1514
    %v1516 = vpop.f32.mrb[0].mxu0
    %1517 = vdwg.mxu0
    %v1519 = vrot.slane %v1349, 6
    %v1521 = vadd.f32 %v181, %v1519
    %v1522 = vtanh.pop %v1521
    %v1523 = vmul.f32 %v1522, 0.5
    %v1524 = vadd.f32 %v1523, 0.5
    %v1526 = vrot.slane %v1270, 6
    %v1528 = vmul.f32 %v1524, %v1526
    %1530 = vrot.lane.b32.xlu0 %v1522, 32
    %v1531 = vpop.permute.xlu0 %1530
    %v1533 = vmul.f32 %v1524, %v1531
    %1535 = vrot.lane.b32.xlu0 %v1533, 32
    %v1536 = vpop.permute.xlu0 %1535
    %v1538 = vadd.f32 %v1528, %v1536
    %v1539 = vtanh.pop %v1538
    %1541 = vrot.lane.b32.xlu0 %v1539, 32
    %v1542 = vpop.permute.xlu0 %1541
    %v1544 = vmul.f32 %v1524, %v1542
    %v1546 = vrot.slane %v1544, 2
    %1547 = vrot.lane.b32.xlu0 %v1546, 64
    %v1548 = vpop.permute.xlu0 %1547
    %v1549 = vsel %vm208, %v1548, 0
    %1551 = vmatprep.subr.mxu0 0.0
    %1552 = vmatpush1.msra.mxu0 %v26
    %1553 = vmatprep.subr.mxu0 0.0
    %1554 = vmatpush1.msra.mxu0 %v27
    %1555 = vmatprep.subr.mxu0 0.0
    %1556 = vmatpush1.msra.mxu0 %v28
    %1557 = vmatprep.subr.mxu0 0.0
    %1558 = vmatpush1.msra.mxu0 %v29
    %1559 = vmatprep.subr.mxu0 0.0
    %1560 = vmatpush1.msra.mxu0 0.0
    %1561 = vmatprep.subr.mxu0 0.0
    %1562 = vmatpush1.msra.mxu0 0.0
    %1563 = vmatprep.subr.mxu0 0.0
    %1564 = vmatpush1.msra.mxu0 0.0
    %1565 = vmatprep.subr.mxu0 0.0
    %1566 = vmatpush1.msra.mxu0 0.0
    %1567 = vmatprep.subr.mxu0 0.0
    %1568 = vmatpush1.msra.mxu0 0.0
    %1569 = vmatprep.subr.mxu0 0.0
    %1570 = vmatpush1.msra.mxu0 0.0
    %1571 = vmatprep.subr.mxu0 0.0
    %1572 = vmatpush1.msra.mxu0 0.0
    %1573 = vmatprep.subr.mxu0 0.0
    %1574 = vmatpush1.msra.mxu0 0.0
    %1575 = vmatprep.subr.mxu0 0.0
    %1576 = vmatpush1.msra.mxu0 0.0
    %1577 = vmatprep.subr.mxu0 0.0
    %1578 = vmatpush1.msra.mxu0 0.0
    %1579 = vmatprep.subr.mxu0 0.0
    %1580 = vmatpush1.msra.mxu0 0.0
    %1581 = vmatprep.subr.mxu0 0.0
    %1582 = vmatpush1.msra.mxu0 0.0
    %1583 = vmatprep.subr.mxu0 0.0
    %1584 = vmatpush1.msra.mxu0 0.0
    %1585 = vmatprep.subr.mxu0 0.0
    %1586 = vmatpush1.msra.mxu0 0.0
    %1587 = vmatprep.subr.mxu0 0.0
    %1588 = vmatpush1.msra.mxu0 0.0
    %1589 = vmatprep.subr.mxu0 0.0
    %1590 = vmatpush1.msra.mxu0 0.0
    %1591 = vmatprep.subr.mxu0 0.0
    %1592 = vmatpush1.msra.mxu0 0.0
    %1593 = vmatprep.subr.mxu0 0.0
    %1594 = vmatpush1.msra.mxu0 0.0
    %1595 = vmatprep.subr.mxu0 0.0
    %1596 = vmatpush1.msra.mxu0 0.0
    %1597 = vmatprep.subr.mxu0 0.0
    %1598 = vmatpush1.msra.mxu0 0.0
    %1599 = vmatprep.subr.mxu0 0.0
    %1600 = vmatpush1.msra.mxu0 0.0
    %1601 = vmatprep.subr.mxu0 0.0
    %1602 = vmatpush1.msra.mxu0 0.0
    %1603 = vmatprep.subr.mxu0 0.0
    %1604 = vmatpush1.msra.mxu0 0.0
    %1605 = vmatprep.subr.mxu0 0.0
    %1606 = vmatpush1.msra.mxu0 0.0
    %1607 = vmatprep.subr.mxu0 0.0
    %1608 = vmatpush1.msra.mxu0 0.0
    %1609 = vmatprep.subr.mxu0 0.0
    %1610 = vmatpush1.msra.mxu0 0.0
    %1611 = vmatprep.subr.mxu0 0.0
    %1612 = vmatpush1.msra.mxu0 0.0
    %1613 = vmatprep.subr.mxu0 0.0
    %1614 = vmatpush1.msra.mxu0 0.0
    %1615 = vmatprep.mubr.f32.mxu0 0.0
    %1616 = vmatmul.mubr.f32.gmra.mrb[0].mxu0 %v1549
    %v1617 = vpop.f32.mrb[0].mxu0
    %v1618 = vadd.f32 0.0, %v1617
    %v1619 = vpop.f32.mrb[0].mxu0
    %1620 = vdwg.mxu0
    %1621 = vmatprep.subr.mxu0 0.0
    %1622 = vmatpush1.msra.mxu0 %v30
    %1623 = vmatprep.subr.mxu0 0.0
    %1624 = vmatpush1.msra.mxu0 %v31
    %1625 = vmatprep.subr.mxu0 0.0
    %1626 = vmatpush1.msra.mxu0 %v32
    %1627 = vmatprep.subr.mxu0 0.0
    %1628 = vmatpush1.msra.mxu0 %v33
    %1629 = vmatprep.subr.mxu0 0.0
    %1630 = vmatpush1.msra.mxu0 0.0
    %1631 = vmatprep.subr.mxu0 0.0
    %1632 = vmatpush1.msra.mxu0 0.0
    %1633 = vmatprep.subr.mxu0 0.0
    %1634 = vmatpush1.msra.mxu0 0.0
    %1635 = vmatprep.subr.mxu0 0.0
    %1636 = vmatpush1.msra.mxu0 0.0
    %1637 = vmatprep.subr.mxu0 0.0
    %1638 = vmatpush1.msra.mxu0 0.0
    %1639 = vmatprep.subr.mxu0 0.0
    %1640 = vmatpush1.msra.mxu0 0.0
    %1641 = vmatprep.subr.mxu0 0.0
    %1642 = vmatpush1.msra.mxu0 0.0
    %1643 = vmatprep.subr.mxu0 0.0
    %1644 = vmatpush1.msra.mxu0 0.0
    %1645 = vmatprep.subr.mxu0 0.0
    %1646 = vmatpush1.msra.mxu0 0.0
    %1647 = vmatprep.subr.mxu0 0.0
    %1648 = vmatpush1.msra.mxu0 0.0
    %1649 = vmatprep.subr.mxu0 0.0
    %1650 = vmatpush1.msra.mxu0 0.0
    %1651 = vmatprep.subr.mxu0 0.0
    %1652 = vmatpush1.msra.mxu0 0.0
    %1653 = vmatprep.subr.mxu0 0.0
    %1654 = vmatpush1.msra.mxu0 0.0
    %1655 = vmatprep.subr.mxu0 0.0
    %1656 = vmatpush1.msra.mxu0 0.0
    %1657 = vmatprep.subr.mxu0 0.0
    %1658 = vmatpush1.msra.mxu0 0.0
    %1659 = vmatprep.subr.mxu0 0.0
    %1660 = vmatpush1.msra.mxu0 0.0
    %1661 = vmatprep.subr.mxu0 0.0
    %1662 = vmatpush1.msra.mxu0 0.0
    %1663 = vmatprep.subr.mxu0 0.0
    %1664 = vmatpush1.msra.mxu0 0.0
    %1665 = vmatprep.subr.mxu0 0.0
    %1666 = vmatpush1.msra.mxu0 0.0
    %1667 = vmatprep.subr.mxu0 0.0
    %1668 = vmatpush1.msra.mxu0 0.0
    %1669 = vmatprep.subr.mxu0 0.0
    %1670 = vmatpush1.msra.mxu0 0.0
    %1671 = vmatprep.subr.mxu0 0.0
    %1672 = vmatpush1.msra.mxu0 0.0
    %1673 = vmatprep.subr.mxu0 0.0
    %1674 = vmatpush1.msra.mxu0 0.0
    %1675 = vmatprep.subr.mxu0 0.0
    %1676 = vmatpush1.msra.mxu0 0.0
    %1677 = vmatprep.subr.mxu0 0.0
    %1678 = vmatpush1.msra.mxu0 0.0
    %1679 = vmatprep.subr.mxu0 0.0
    %1680 = vmatpush1.msra.mxu0 0.0
    %1681 = vmatprep.subr.mxu0 0.0
    %1682 = vmatpush1.msra.mxu0 0.0
    %1683 = vmatprep.subr.mxu0 0.0
    %1684 = vmatpush1.msra.mxu0 0.0
    %1685 = vmatprep.mubr.f32.mxu0 0.0
    %1686 = vmatmul.mubr.f32.gmra.mrb[0].mxu0 %v1549
    %v1687 = vpop.f32.mrb[0].mxu0
    %v1688 = vadd.f32 %v1515, %v1687
    %v1689 = vpop.f32.mrb[0].mxu0
    %1690 = vdwg.mxu0
    %v1691 = vadd.f32 %v1688, %v71
    %v1692 = vtanh.pop %v1691
    %v1693 = vmul.f32 %v1692, 0.5
    %v1694 = vadd.f32 %v1693, 0.5
    %v1695 = vmul.f32 %v1694, %v1436
    %1697 = vrot.lane.b32.xlu0 %v1692, 32
    %v1698 = vpop.permute.xlu0 %1697
    %v1700 = vmul.f32 %v1694, %v1698
    %1702 = vrot.lane.b32.xlu0 %v1700, 32
    %v1703 = vpop.permute.xlu0 %1702
    %v1705 = vadd.f32 %v1695, %v1703
    %v1706 = vtanh.pop %v1705
    %1708 = vrot.lane.b32.xlu0 %v1706, 32
    %v1709 = vpop.permute.xlu0 %1708
    %v1711 = vmul.f32 %v1694, %v1709
    %1713 = vrot.lane.b32.xlu0 %v1711, 64
    %v1714 = vpop.permute.xlu0 %1713
    %v1715 = vsel %vm208, %v1714, 0
    %1717 = vmatprep.subr.mxu0 0.0
    %1718 = vmatpush1.msra.mxu0 %v34
    %1719 = vmatprep.subr.mxu0 0.0
    %1720 = vmatpush1.msra.mxu0 %v35
    %1721 = vmatprep.subr.mxu0 0.0
    %1722 = vmatpush1.msra.mxu0 %v36
    %1723 = vmatprep.subr.mxu0 0.0
    %1724 = vmatpush1.msra.mxu0 %v37
    %1725 = vmatprep.subr.mxu0 0.0
    %1726 = vmatpush1.msra.mxu0 0.0
    %1727 = vmatprep.subr.mxu0 0.0
    %1728 = vmatpush1.msra.mxu0 0.0
    %1729 = vmatprep.subr.mxu0 0.0
    %1730 = vmatpush1.msra.mxu0 0.0
    %1731 = vmatprep.subr.mxu0 0.0
    %1732 = vmatpush1.msra.mxu0 0.0
    %1733 = vmatprep.subr.mxu0 0.0
    %1734 = vmatpush1.msra.mxu0 0.0
    %1735 = vmatprep.subr.mxu0 0.0
    %1736 = vmatpush1.msra.mxu0 0.0
    %1737 = vmatprep.subr.mxu0 0.0
    %1738 = vmatpush1.msra.mxu0 0.0
    %1739 = vmatprep.subr.mxu0 0.0
    %1740 = vmatpush1.msra.mxu0 0.0
    %1741 = vmatprep.subr.mxu0 0.0
    %1742 = vmatpush1.msra.mxu0 0.0
    %1743 = vmatprep.subr.mxu0 0.0
    %1744 = vmatpush1.msra.mxu0 0.0
    %1745 = vmatprep.subr.mxu0 0.0
    %1746 = vmatpush1.msra.mxu0 0.0
    %1747 = vmatprep.subr.mxu0 0.0
    %1748 = vmatpush1.msra.mxu0 0.0
    %1749 = vmatprep.subr.mxu0 0.0
    %1750 = vmatpush1.msra.mxu0 0.0
    %1751 = vmatprep.subr.mxu0 0.0
    %1752 = vmatpush1.msra.mxu0 0.0
    %1753 = vmatprep.subr.mxu0 0.0
    %1754 = vmatpush1.msra.mxu0 0.0
    %1755 = vmatprep.subr.mxu0 0.0
    %1756 = vmatpush1.msra.mxu0 0.0
    %1757 = vmatprep.subr.mxu0 0.0
    %1758 = vmatpush1.msra.mxu0 0.0
    %1759 = vmatprep.subr.mxu0 0.0
    %1760 = vmatpush1.msra.mxu0 0.0
    %1761 = vmatprep.subr.mxu0 0.0
    %1762 = vmatpush1.msra.mxu0 0.0
    %1763 = vmatprep.subr.mxu0 0.0
    %1764 = vmatpush1.msra.mxu0 0.0
    %1765 = vmatprep.subr.mxu0 0.0
    %1766 = vmatpush1.msra.mxu0 0.0
    %1767 = vmatprep.subr.mxu0 0.0
    %1768 = vmatpush1.msra.mxu0 0.0
    %1769 = vmatprep.subr.mxu0 0.0
    %1770 = vmatpush1.msra.mxu0 0.0
    %1771 = vmatprep.subr.mxu0 0.0
    %1772 = vmatpush1.msra.mxu0 0.0
    %1773 = vmatprep.subr.mxu0 0.0
    %1774 = vmatpush1.msra.mxu0 0.0
    %1775 = vmatprep.subr.mxu0 0.0
    %1776 = vmatpush1.msra.mxu0 0.0
    %1777 = vmatprep.subr.mxu0 0.0
    %1778 = vmatpush1.msra.mxu0 0.0
    %1779 = vmatprep.subr.mxu0 0.0
    %1780 = vmatpush1.msra.mxu0 0.0
    %1781 = vmatprep.mubr.f32.mxu0 0.0
    %1782 = vmatmul.mubr.f32.gmra.mrb[0].mxu0 %v1715
    %v1783 = vpop.f32.mrb[0].mxu0
    %v1784 = vadd.f32 0.0, %v1783
    %v1785 = vpop.f32.mrb[0].mxu0
    %1786 = vdwg.mxu0
    %v1788 = vrot.slane %v1618, 4
    %v1790 = vadd.f32 %v181, %v1788
    %v1791 = vtanh.pop %v1790
    %v1792 = vmul.f32 %v1791, 0.5
    %v1793 = vadd.f32 %v1792, 0.5
    %v1795 = vrot.slane %v1538, 6
    %v1797 = vmul.f32 %v1793, %v1795
    %1799 = vrot.lane.b32.xlu0 %v1791, 32
    %v1800 = vpop.permute.xlu0 %1799
    %v1802 = vmul.f32 %v1793, %v1800
    %1804 = vrot.lane.b32.xlu0 %v1802, 32
    %v1805 = vpop.permute.xlu0 %1804
    %v1807 = vadd.f32 %v1797, %v1805
    %v1808 = vtanh.pop %v1807
    %1810 = vrot.lane.b32.xlu0 %v1808, 32
    %v1811 = vpop.permute.xlu0 %1810
    %v1813 = vmul.f32 %v1793, %v1811
    %v1815 = vrot.slane %v1813, 4
    %1816 = vrot.lane.b32.xlu0 %v1815, 64
    %v1817 = vpop.permute.xlu0 %1816
    %v1818 = vsel %vm208, %v1817, 0
    %1820 = vmatprep.subr.mxu0 0.0
    %1821 = vmatpush1.msra.mxu0 %v26
    %1822 = vmatprep.subr.mxu0 0.0
    %1823 = vmatpush1.msra.mxu0 %v27
    %1824 = vmatprep.subr.mxu0 0.0
    %1825 = vmatpush1.msra.mxu0 %v28
    %1826 = vmatprep.subr.mxu0 0.0
    %1827 = vmatpush1.msra.mxu0 %v29
    %1828 = vmatprep.subr.mxu0 0.0
    %1829 = vmatpush1.msra.mxu0 0.0
    %1830 = vmatprep.subr.mxu0 0.0
    %1831 = vmatpush1.msra.mxu0 0.0
    %1832 = vmatprep.subr.mxu0 0.0
    %1833 = vmatpush1.msra.mxu0 0.0
    %1834 = vmatprep.subr.mxu0 0.0
    %1835 = vmatpush1.msra.mxu0 0.0
    %1836 = vmatprep.subr.mxu0 0.0
    %1837 = vmatpush1.msra.mxu0 0.0
    %1838 = vmatprep.subr.mxu0 0.0
    %1839 = vmatpush1.msra.mxu0 0.0
    %1840 = vmatprep.subr.mxu0 0.0
    %1841 = vmatpush1.msra.mxu0 0.0
    %1842 = vmatprep.subr.mxu0 0.0
    %1843 = vmatpush1.msra.mxu0 0.0
    %1844 = vmatprep.subr.mxu0 0.0
    %1845 = vmatpush1.msra.mxu0 0.0
    %1846 = vmatprep.subr.mxu0 0.0
    %1847 = vmatpush1.msra.mxu0 0.0
    %1848 = vmatprep.subr.mxu0 0.0
    %1849 = vmatpush1.msra.mxu0 0.0
    %1850 = vmatprep.subr.mxu0 0.0
    %1851 = vmatpush1.msra.mxu0 0.0
    %1852 = vmatprep.subr.mxu0 0.0
    %1853 = vmatpush1.msra.mxu0 0.0
    %1854 = vmatprep.subr.mxu0 0.0
    %1855 = vmatpush1.msra.mxu0 0.0
    %1856 = vmatprep.subr.mxu0 0.0
    %1857 = vmatpush1.msra.mxu0 0.0
    %1858 = vmatprep.subr.mxu0 0.0
    %1859 = vmatpush1.msra.mxu0 0.0
    %1860 = vmatprep.subr.mxu0 0.0
    %1861 = vmatpush1.msra.mxu0 0.0
    %1862 = vmatprep.subr.mxu0 0.0
    %1863 = vmatpush1.msra.mxu0 0.0
    %1864 = vmatprep.subr.mxu0 0.0
    %1865 = vmatpush1.msra.mxu0 0.0
    %1866 = vmatprep.subr.mxu0 0.0
    %1867 = vmatpush1.msra.mxu0 0.0
    %1868 = vmatprep.subr.mxu0 0.0
    %1869 = vmatpush1.msra.mxu0 0.0
    %1870 = vmatprep.subr.mxu0 0.0
    %1871 = vmatpush1.msra.mxu0 0.0
    %1872 = vmatprep.subr.mxu0 0.0
    %1873 = vmatpush1.msra.mxu0 0.0
    %1874 = vmatprep.subr.mxu0 0.0
    %1875 = vmatpush1.msra.mxu0 0.0
    %1876 = vmatprep.subr.mxu0 0.0
    %1877 = vmatpush1.msra.mxu0 0.0
    %1878 = vmatprep.subr.mxu0 0.0
    %1879 = vmatpush1.msra.mxu0 0.0
    %1880 = vmatprep.subr.mxu0 0.0
    %1881 = vmatpush1.msra.mxu0 0.0
    %1882 = vmatprep.subr.mxu0 0.0
    %1883 = vmatpush1.msra.mxu0 0.0
    %1884 = vmatprep.mubr.f32.mxu0 0.0
    %1885 = vmatmul.mubr.f32.gmra.mrb[0].mxu0 %v1818
    %v1886 = vpop.f32.mrb[0].mxu0
    %v1887 = vadd.f32 0.0, %v1886
    %v1888 = vpop.f32.mrb[0].mxu0
    %1889 = vdwg.mxu0
    %1890 = vmatprep.subr.mxu0 0.0
    %1891 = vmatpush1.msra.mxu0 %v30
    %1892 = vmatprep.subr.mxu0 0.0
    %1893 = vmatpush1.msra.mxu0 %v31
    %1894 = vmatprep.subr.mxu0 0.0
    %1895 = vmatpush1.msra.mxu0 %v32
    %1896 = vmatprep.subr.mxu0 0.0
    %1897 = vmatpush1.msra.mxu0 %v33
    %1898 = vmatprep.subr.mxu0 0.0
    %1899 = vmatpush1.msra.mxu0 0.0
    %1900 = vmatprep.subr.mxu0 0.0
    %1901 = vmatpush1.msra.mxu0 0.0
    %1902 = vmatprep.subr.mxu0 0.0
    %1903 = vmatpush1.msra.mxu0 0.0
    %1904 = vmatprep.subr.mxu0 0.0
    %1905 = vmatpush1.msra.mxu0 0.0
    %1906 = vmatprep.subr.mxu0 0.0
    %1907 = vmatpush1.msra.mxu0 0.0
    %1908 = vmatprep.subr.mxu0 0.0
    %1909 = vmatpush1.msra.mxu0 0.0
    %1910 = vmatprep.subr.mxu0 0.0
    %1911 = vmatpush1.msra.mxu0 0.0
    %1912 = vmatprep.subr.mxu0 0.0
    %1913 = vmatpush1.msra.mxu0 0.0
    %1914 = vmatprep.subr.mxu0 0.0
    %1915 = vmatpush1.msra.mxu0 0.0
    %1916 = vmatprep.subr.mxu0 0.0
    %1917 = vmatpush1.msra.mxu0 0.0
    %1918 = vmatprep.subr.mxu0 0.0
    %1919 = vmatpush1.msra.mxu0 0.0
    %1920 = vmatprep.subr.mxu0 0.0
    %1921 = vmatpush1.msra.mxu0 0.0
    %1922 = vmatprep.subr.mxu0 0.0
    %1923 = vmatpush1.msra.mxu0 0.0
    %1924 = vmatprep.subr.mxu0 0.0
    %1925 = vmatpush1.msra.mxu0 0.0
    %1926 = vmatprep.subr.mxu0 0.0
    %1927 = vmatpush1.msra.mxu0 0.0
    %1928 = vmatprep.subr.mxu0 0.0
    %1929 = vmatpush1.msra.mxu0 0.0
    %1930 = vmatprep.subr.mxu0 0.0
    %1931 = vmatpush1.msra.mxu0 0.0
    %1932 = vmatprep.subr.mxu0 0.0
    %1933 = vmatpush1.msra.mxu0 0.0
    %1934 = vmatprep.subr.mxu0 0.0
    %1935 = vmatpush1.msra.mxu0 0.0
    %1936 = vmatprep.subr.mxu0 0.0
    %1937 = vmatpush1.msra.mxu0 0.0
    %1938 = vmatprep.subr.mxu0 0.0
    %1939 = vmatpush1.msra.mxu0 0.0
    %1940 = vmatprep.subr.mxu0 0.0
    %1941 = vmatpush1.msra.mxu0 0.0
    %1942 = vmatprep.subr.mxu0 0.0
    %1943 = vmatpush1.msra.mxu0 0.0
    %1944 = vmatprep.subr.mxu0 0.0
    %1945 = vmatpush1.msra.mxu0 0.0
    %1946 = vmatprep.subr.mxu0 0.0
    %1947 = vmatpush1.msra.mxu0 0.0
    %1948 = vmatprep.subr.mxu0 0.0
    %1949 = vmatpush1.msra.mxu0 0.0
    %1950 = vmatprep.subr.mxu0 0.0
    %1951 = vmatpush1.msra.mxu0 0.0
    %1952 = vmatprep.subr.mxu0 0.0
    %1953 = vmatpush1.msra.mxu0 0.0
    %1954 = vmatprep.mubr.f32.mxu0 0.0
    %1955 = vmatmul.mubr.f32.gmra.mrb[0].mxu0 %v1818
    %v1956 = vpop.f32.mrb[0].mxu0
    %v1957 = vadd.f32 %v1784, %v1956
    %v1958 = vpop.f32.mrb[0].mxu0
    %1959 = vdwg.mxu0
    %v1960 = vadd.f32 %v1957, %v71
    %v1961 = vtanh.pop %v1960
    %v1962 = vmul.f32 %v1961, 0.5
    %v1963 = vadd.f32 %v1962, 0.5
    %v1964 = vmul.f32 %v1963, %v1705
    %1966 = vrot.lane.b32.xlu0 %v1961, 32
    %v1967 = vpop.permute.xlu0 %1966
    %v1969 = vmul.f32 %v1963, %v1967
    %1971 = vrot.lane.b32.xlu0 %v1969, 32
    %v1972 = vpop.permute.xlu0 %1971
    %v1974 = vadd.f32 %v1964, %v1972
    %v1975 = vtanh.pop %v1974
    %1977 = vrot.lane.b32.xlu0 %v1975, 32
    %v1978 = vpop.permute.xlu0 %1977
    %v1980 = vmul.f32 %v1963, %v1978
    %1982 = vrot.lane.b32.xlu0 %v1980, 64
    %v1983 = vpop.permute.xlu0 %1982
    %v1984 = vsel %vm208, %v1983, 0
    %1986 = vmatprep.subr.mxu0 0.0
    %1987 = vmatpush1.msra.mxu0 %v34
    %1988 = vmatprep.subr.mxu0 0.0
    %1989 = vmatpush1.msra.mxu0 %v35
    %1990 = vmatprep.subr.mxu0 0.0
    %1991 = vmatpush1.msra.mxu0 %v36
    %1992 = vmatprep.subr.mxu0 0.0
    %1993 = vmatpush1.msra.mxu0 %v37
    %1994 = vmatprep.subr.mxu0 0.0
    %1995 = vmatpush1.msra.mxu0 0.0
    %1996 = vmatprep.subr.mxu0 0.0
    %1997 = vmatpush1.msra.mxu0 0.0
    %1998 = vmatprep.subr.mxu0 0.0
    %1999 = vmatpush1.msra.mxu0 0.0
    %2000 = vmatprep.subr.mxu0 0.0
    %2001 = vmatpush1.msra.mxu0 0.0
    %2002 = vmatprep.subr.mxu0 0.0
    %2003 = vmatpush1.msra.mxu0 0.0
    %2004 = vmatprep.subr.mxu0 0.0
    %2005 = vmatpush1.msra.mxu0 0.0
    %2006 = vmatprep.subr.mxu0 0.0
    %2007 = vmatpush1.msra.mxu0 0.0
    %2008 = vmatprep.subr.mxu0 0.0
    %2009 = vmatpush1.msra.mxu0 0.0
    %2010 = vmatprep.subr.mxu0 0.0
    %2011 = vmatpush1.msra.mxu0 0.0
    %2012 = vmatprep.subr.mxu0 0.0
    %2013 = vmatpush1.msra.mxu0 0.0
    %2014 = vmatprep.subr.mxu0 0.0
    %2015 = vmatpush1.msra.mxu0 0.0
    %2016 = vmatprep.subr.mxu0 0.0
    %2017 = vmatpush1.msra.mxu0 0.0
    %2018 = vmatprep.subr.mxu0 0.0
    %2019 = vmatpush1.msra.mxu0 0.0
    %2020 = vmatprep.subr.mxu0 0.0
    %2021 = vmatpush1.msra.mxu0 0.0
    %2022 = vmatprep.subr.mxu0 0.0
    %2023 = vmatpush1.msra.mxu0 0.0
    %2024 = vmatprep.subr.mxu0 0.0
    %2025 = vmatpush1.msra.mxu0 0.0
    %2026 = vmatprep.subr.mxu0 0.0
    %2027 = vmatpush1.msra.mxu0 0.0
    %2028 = vmatprep.subr.mxu0 0.0
    %2029 = vmatpush1.msra.mxu0 0.0
    %2030 = vmatprep.subr.mxu0 0.0
    %2031 = vmatpush1.msra.mxu0 0.0
    %2032 = vmatprep.subr.mxu0 0.0
    %2033 = vmatpush1.msra.mxu0 0.0
    %2034 = vmatprep.subr.mxu0 0.0
    %2035 = vmatpush1.msra.mxu0 0.0
    %2036 = vmatprep.subr.mxu0 0.0
    %2037 = vmatpush1.msra.mxu0 0.0
    %2038 = vmatprep.subr.mxu0 0.0
    %2039 = vmatpush1.msra.mxu0 0.0
    %2040 = vmatprep.subr.mxu0 0.0
    %2041 = vmatpush1.msra.mxu0 0.0
    %2042 = vmatprep.subr.mxu0 0.0
    %2043 = vmatpush1.msra.mxu0 0.0
    %2044 = vmatprep.subr.mxu0 0.0
    %2045 = vmatpush1.msra.mxu0 0.0
    %2046 = vmatprep.subr.mxu0 0.0
    %2047 = vmatpush1.msra.mxu0 0.0
    %2048 = vmatprep.subr.mxu0 0.0
    %2049 = vmatpush1.msra.mxu0 0.0
    %2050 = vmatprep.mubr.f32.mxu0 0.0
    %2051 = vmatmul.mubr.f32.gmra.mrb[0].mxu0 %v1984
    %v2052 = vpop.f32.mrb[0].mxu0
    %v2053 = vadd.f32 0.0, %v2052
    %v2054 = vpop.f32.mrb[0].mxu0
    %2055 = vdwg.mxu0
    %v2057 = vrot.slane %v1887, 2
    %v2059 = vadd.f32 %v181, %v2057
    %v2060 = vtanh.pop %v2059
    %v2061 = vmul.f32 %v2060, 0.5
    %v2062 = vadd.f32 %v2061, 0.5
    %v2064 = vrot.slane %v1807, 6
    %v2066 = vmul.f32 %v2062, %v2064
    %2068 = vrot.lane.b32.xlu0 %v2060, 32
    %v2069 = vpop.permute.xlu0 %2068
    %v2071 = vmul.f32 %v2062, %v2069
    %2073 = vrot.lane.b32.xlu0 %v2071, 32
    %v2074 = vpop.permute.xlu0 %2073
    %v2076 = vadd.f32 %v2066, %v2074
    %v2077 = vtanh.pop %v2076
    %2079 = vrot.lane.b32.xlu0 %v2077, 32
    %v2080 = vpop.permute.xlu0 %2079
    %v2082 = vmul.f32 %v2062, %v2080
    %v2084 = vrot.slane %v2082, 6
    %2085 = vrot.lane.b32.xlu0 %v2084, 64
    %v2086 = vpop.permute.xlu0 %2085
    %v2087 = vsel %vm208, %v2086, 0
    %2089 = vmatprep.subr.mxu0 0.0
    %2090 = vmatpush1.msra.mxu0 %v26
    %2091 = vmatprep.subr.mxu0 0.0
    %2092 = vmatpush1.msra.mxu0 %v27
    %2093 = vmatprep.subr.mxu0 0.0
    %2094 = vmatpush1.msra.mxu0 %v28
    %2095 = vmatprep.subr.mxu0 0.0
    %2096 = vmatpush1.msra.mxu0 %v29
    %2097 = vmatprep.subr.mxu0 0.0
    %2098 = vmatpush1.msra.mxu0 0.0
    %2099 = vmatprep.subr.mxu0 0.0
    %2100 = vmatpush1.msra.mxu0 0.0
    %2101 = vmatprep.subr.mxu0 0.0
    %2102 = vmatpush1.msra.mxu0 0.0
    %2103 = vmatprep.subr.mxu0 0.0
    %2104 = vmatpush1.msra.mxu0 0.0
    %2105 = vmatprep.subr.mxu0 0.0
    %2106 = vmatpush1.msra.mxu0 0.0
    %2107 = vmatprep.subr.mxu0 0.0
    %2108 = vmatpush1.msra.mxu0 0.0
    %2109 = vmatprep.subr.mxu0 0.0
    %2110 = vmatpush1.msra.mxu0 0.0
    %2111 = vmatprep.subr.mxu0 0.0
    %2112 = vmatpush1.msra.mxu0 0.0
    %2113 = vmatprep.subr.mxu0 0.0
    %2114 = vmatpush1.msra.mxu0 0.0
    %2115 = vmatprep.subr.mxu0 0.0
    %2116 = vmatpush1.msra.mxu0 0.0
    %2117 = vmatprep.subr.mxu0 0.0
    %2118 = vmatpush1.msra.mxu0 0.0
    %2119 = vmatprep.subr.mxu0 0.0
    %2120 = vmatpush1.msra.mxu0 0.0
    %2121 = vmatprep.subr.mxu0 0.0
    %2122 = vmatpush1.msra.mxu0 0.0
    %2123 = vmatprep.subr.mxu0 0.0
    %2124 = vmatpush1.msra.mxu0 0.0
    %2125 = vmatprep.subr.mxu0 0.0
    %2126 = vmatpush1.msra.mxu0 0.0
    %2127 = vmatprep.subr.mxu0 0.0
    %2128 = vmatpush1.msra.mxu0 0.0
    %2129 = vmatprep.subr.mxu0 0.0
    %2130 = vmatpush1.msra.mxu0 0.0
    %2131 = vmatprep.subr.mxu0 0.0
    %2132 = vmatpush1.msra.mxu0 0.0
    %2133 = vmatprep.subr.mxu0 0.0
    %2134 = vmatpush1.msra.mxu0 0.0
    %2135 = vmatprep.subr.mxu0 0.0
    %2136 = vmatpush1.msra.mxu0 0.0
    %2137 = vmatprep.subr.mxu0 0.0
    %2138 = vmatpush1.msra.mxu0 0.0
    %2139 = vmatprep.subr.mxu0 0.0
    %2140 = vmatpush1.msra.mxu0 0.0
    %2141 = vmatprep.subr.mxu0 0.0
    %2142 = vmatpush1.msra.mxu0 0.0
    %2143 = vmatprep.subr.mxu0 0.0
    %2144 = vmatpush1.msra.mxu0 0.0
    %2145 = vmatprep.subr.mxu0 0.0
    %2146 = vmatpush1.msra.mxu0 0.0
    %2147 = vmatprep.subr.mxu0 0.0
    %2148 = vmatpush1.msra.mxu0 0.0
    %2149 = vmatprep.subr.mxu0 0.0
    %2150 = vmatpush1.msra.mxu0 0.0
    %2151 = vmatprep.subr.mxu0 0.0
    %2152 = vmatpush1.msra.mxu0 0.0
    %2153 = vmatprep.mubr.f32.mxu0 0.0
    %2154 = vmatmul.mubr.f32.gmra.mrb[0].mxu0 %v2087
    %v2155 = vpop.f32.mrb[0].mxu0
    %v2156 = vadd.f32 0.0, %v2155
    %v2157 = vpop.f32.mrb[0].mxu0
    %2158 = vdwg.mxu0
    %2159 = vmatprep.subr.mxu0 0.0
    %2160 = vmatpush1.msra.mxu0 %v30
    %2161 = vmatprep.subr.mxu0 0.0
    %2162 = vmatpush1.msra.mxu0 %v31
    %2163 = vmatprep.subr.mxu0 0.0
    %2164 = vmatpush1.msra.mxu0 %v32
    %2165 = vmatprep.subr.mxu0 0.0
    %2166 = vmatpush1.msra.mxu0 %v33
    %2167 = vmatprep.subr.mxu0 0.0
    %2168 = vmatpush1.msra.mxu0 0.0
    %2169 = vmatprep.subr.mxu0 0.0
    %2170 = vmatpush1.msra.mxu0 0.0
    %2171 = vmatprep.subr.mxu0 0.0
    %2172 = vmatpush1.msra.mxu0 0.0
    %2173 = vmatprep.subr.mxu0 0.0
    %2174 = vmatpush1.msra.mxu0 0.0
    %2175 = vmatprep.subr.mxu0 0.0
    %2176 = vmatpush1.msra.mxu0 0.0
    %2177 = vmatprep.subr.mxu0 0.0
    %2178 = vmatpush1.msra.mxu0 0.0
    %2179 = vmatprep.subr.mxu0 0.0
    %2180 = vmatpush1.msra.mxu0 0.0
    %2181 = vmatprep.subr.mxu0 0.0
    %2182 = vmatpush1.msra.mxu0 0.0
    %2183 = vmatprep.subr.mxu0 0.0
    %2184 = vmatpush1.msra.mxu0 0.0
    %2185 = vmatprep.subr.mxu0 0.0
    %2186 = vmatpush1.msra.mxu0 0.0
    %2187 = vmatprep.subr.mxu0 0.0
    %2188 = vmatpush1.msra.mxu0 0.0
    %2189 = vmatprep.subr.mxu0 0.0
    %2190 = vmatpush1.msra.mxu0 0.0
    %2191 = vmatprep.subr.mxu0 0.0
    %2192 = vmatpush1.msra.mxu0 0.0
    %2193 = vmatprep.subr.mxu0 0.0
    %2194 = vmatpush1.msra.mxu0 0.0
    %2195 = vmatprep.subr.mxu0 0.0
    %2196 = vmatpush1.msra.mxu0 0.0
    %2197 = vmatprep.subr.mxu0 0.0
    %2198 = vmatpush1.msra.mxu0 0.0
    %2199 = vmatprep.subr.mxu0 0.0
    %2200 = vmatpush1.msra.mxu0 0.0
    %2201 = vmatprep.subr.mxu0 0.0
    %2202 = vmatpush1.msra.mxu0 0.0
    %2203 = vmatprep.subr.mxu0 0.0
    %2204 = vmatpush1.msra.mxu0 0.0
    %2205 = vmatprep.subr.mxu0 0.0
    %2206 = vmatpush1.msra.mxu0 0.0
    %2207 = vmatprep.subr.mxu0 0.0
    %2208 = vmatpush1.msra.mxu0 0.0
    %2209 = vmatprep.subr.mxu0 0.0
    %2210 = vmatpush1.msra.mxu0 0.0
    %2211 = vmatprep.subr.mxu0 0.0
    %2212 = vmatpush1.msra.mxu0 0.0
    %2213 = vmatprep.subr.mxu0 0.0
    %2214 = vmatpush1.msra.mxu0 0.0
    %2215 = vmatprep.subr.mxu0 0.0
    %2216 = vmatpush1.msra.mxu0 0.0
    %2217 = vmatprep.subr.mxu0 0.0
    %2218 = vmatpush1.msra.mxu0 0.0
    %2219 = vmatprep.subr.mxu0 0.0
    %2220 = vmatpush1.msra.mxu0 0.0
    %2221 = vmatprep.subr.mxu0 0.0
    %2222 = vmatpush1.msra.mxu0 0.0
    %2223 = vmatprep.mubr.f32.mxu0 0.0
    %2224 = vmatmul.mubr.f32.gmra.mrb[0].mxu0 %v2087
    %v2225 = vpop.f32.mrb[0].mxu0
    %v2226 = vadd.f32 %v2053, %v2225
    %v2227 = vpop.f32.mrb[0].mxu0
    %2228 = vdwg.mxu0
    %v2229 = vadd.f32 %v2226, %v71
    %v2230 = vtanh.pop %v2229
    %v2231 = vmul.f32 %v2230, 0.5
    %v2232 = vadd.f32 %v2231, 0.5
    %v2233 = vmul.f32 %v2232, %v1974
    %2235 = vrot.lane.b32.xlu0 %v2230, 32
    %v2236 = vpop.permute.xlu0 %2235
    %v2238 = vmul.f32 %v2232, %v2236
    %2240 = vrot.lane.b32.xlu0 %v2238, 32
    %v2241 = vpop.permute.xlu0 %2240
    %v2243 = vadd.f32 %v2233, %v2241
    %v2244 = vtanh.pop %v2243
    %2246 = vrot.lane.b32.xlu0 %v2244, 32
    %v2247 = vpop.permute.xlu0 %2246
    %v2249 = vmul.f32 %v2232, %v2247
    %2251 = vrot.lane.b32.xlu0 %v2249, 64
    %v2252 = vpop.permute.xlu0 %2251
    %v2253 = vsel %vm208, %v2252, 0
    %2255 = vmatprep.subr.mxu0 0.0
    %2256 = vmatpush1.msra.mxu0 %v34
    %2257 = vmatprep.subr.mxu0 0.0
    %2258 = vmatpush1.msra.mxu0 %v35
    %2259 = vmatprep.subr.mxu0 0.0
    %2260 = vmatpush1.msra.mxu0 %v36
    %2261 = vmatprep.subr.mxu0 0.0
    %2262 = vmatpush1.msra.mxu0 %v37
    %2263 = vmatprep.subr.mxu0 0.0
    %2264 = vmatpush1.msra.mxu0 0.0
    %2265 = vmatprep.subr.mxu0 0.0
    %2266 = vmatpush1.msra.mxu0 0.0
    %2267 = vmatprep.subr.mxu0 0.0
    %2268 = vmatpush1.msra.mxu0 0.0
    %2269 = vmatprep.subr.mxu0 0.0
    %2270 = vmatpush1.msra.mxu0 0.0
    %2271 = vmatprep.subr.mxu0 0.0
    %2272 = vmatpush1.msra.mxu0 0.0
    %2273 = vmatprep.subr.mxu0 0.0
    %2274 = vmatpush1.msra.mxu0 0.0
    %2275 = vmatprep.subr.mxu0 0.0
    %2276 = vmatpush1.msra.mxu0 0.0
    %2277 = vmatprep.subr.mxu0 0.0
    %2278 = vmatpush1.msra.mxu0 0.0
    %2279 = vmatprep.subr.mxu0 0.0
    %2280 = vmatpush1.msra.mxu0 0.0
    %2281 = vmatprep.subr.mxu0 0.0
    %2282 = vmatpush1.msra.mxu0 0.0
    %2283 = vmatprep.subr.mxu0 0.0
    %2284 = vmatpush1.msra.mxu0 0.0
    %2285 = vmatprep.subr.mxu0 0.0
    %2286 = vmatpush1.msra.mxu0 0.0
    %2287 = vmatprep.subr.mxu0 0.0
    %2288 = vmatpush1.msra.mxu0 0.0
    %2289 = vmatprep.subr.mxu0 0.0
    %2290 = vmatpush1.msra.mxu0 0.0
    %2291 = vmatprep.subr.mxu0 0.0
    %2292 = vmatpush1.msra.mxu0 0.0
    %2293 = vmatprep.subr.mxu0 0.0
    %2294 = vmatpush1.msra.mxu0 0.0
    %2295 = vmatprep.subr.mxu0 0.0
    %2296 = vmatpush1.msra.mxu0 0.0
    %2297 = vmatprep.subr.mxu0 0.0
    %2298 = vmatpush1.msra.mxu0 0.0
    %2299 = vmatprep.subr.mxu0 0.0
    %2300 = vmatpush1.msra.mxu0 0.0
    %2301 = vmatprep.subr.mxu0 0.0
    %2302 = vmatpush1.msra.mxu0 0.0
    %2303 = vmatprep.subr.mxu0 0.0
    %2304 = vmatpush1.msra.mxu0 0.0
    %2305 = vmatprep.subr.mxu0 0.0
    %2306 = vmatpush1.msra.mxu0 0.0
    %2307 = vmatprep.subr.mxu0 0.0
    %2308 = vmatpush1.msra.mxu0 0.0
    %2309 = vmatprep.subr.mxu0 0.0
    %2310 = vmatpush1.msra.mxu0 0.0
    %2311 = vmatprep.subr.mxu0 0.0
    %2312 = vmatpush1.msra.mxu0 0.0
    %2313 = vmatprep.subr.mxu0 0.0
    %2314 = vmatpush1.msra.mxu0 0.0
    %2315 = vmatprep.subr.mxu0 0.0
    %2316 = vmatpush1.msra.mxu0 0.0
    %2317 = vmatprep.subr.mxu0 0.0
    %2318 = vmatpush1.msra.mxu0 0.0
    %2319 = vmatprep.mubr.f32.mxu0 0.0
    %2320 = vmatmul.mubr.f32.gmra.mrb[0].mxu0 %v2253
    %v2321 = vpop.f32.mrb[0].mxu0
    %v2322 = vadd.f32 0.0, %v2321
    %v2323 = vpop.f32.mrb[0].mxu0
    %2324 = vdwg.mxu0
    %2325 = vmatprep.subr.mxu0 0.0
    %2326 = vmatpush1.msra.mxu0 %v46
    %2327 = vmatprep.subr.mxu0 0.0
    %2328 = vmatpush1.msra.mxu0 %v47
    %2329 = vmatprep.subr.mxu0 0.0
    %2330 = vmatpush1.msra.mxu0 %v48
    %2331 = vmatprep.subr.mxu0 0.0
    %2332 = vmatpush1.msra.mxu0 %v49
    %2333 = vmatprep.subr.mxu0 0.0
    %2334 = vmatpush1.msra.mxu0 0.0
    %2335 = vmatprep.subr.mxu0 0.0
    %2336 = vmatpush1.msra.mxu0 0.0
    %2337 = vmatprep.subr.mxu0 0.0
    %2338 = vmatpush1.msra.mxu0 0.0
    %2339 = vmatprep.subr.mxu0 0.0
    %2340 = vmatpush1.msra.mxu0 0.0
    %2341 = vmatprep.subr.mxu0 0.0
    %2342 = vmatpush1.msra.mxu0 0.0
    %2343 = vmatprep.subr.mxu0 0.0
    %2344 = vmatpush1.msra.mxu0 0.0
    %2345 = vmatprep.subr.mxu0 0.0
    %2346 = vmatpush1.msra.mxu0 0.0
    %2347 = vmatprep.subr.mxu0 0.0
    %2348 = vmatpush1.msra.mxu0 0.0
    %2349 = vmatprep.subr.mxu0 0.0
    %2350 = vmatpush1.msra.mxu0 0.0
    %2351 = vmatprep.subr.mxu0 0.0
    %2352 = vmatpush1.msra.mxu0 0.0
    %2353 = vmatprep.subr.mxu0 0.0
    %2354 = vmatpush1.msra.mxu0 0.0
    %2355 = vmatprep.subr.mxu0 0.0
    %2356 = vmatpush1.msra.mxu0 0.0
    %2357 = vmatprep.subr.mxu0 0.0
    %2358 = vmatpush1.msra.mxu0 0.0
    %2359 = vmatprep.subr.mxu0 0.0
    %2360 = vmatpush1.msra.mxu0 0.0
    %2361 = vmatprep.subr.mxu0 0.0
    %2362 = vmatpush1.msra.mxu0 0.0
    %2363 = vmatprep.subr.mxu0 0.0
    %2364 = vmatpush1.msra.mxu0 0.0
    %2365 = vmatprep.subr.mxu0 0.0
    %2366 = vmatpush1.msra.mxu0 0.0
    %2367 = vmatprep.subr.mxu0 0.0
    %2368 = vmatpush1.msra.mxu0 0.0
    %2369 = vmatprep.subr.mxu0 0.0
    %2370 = vmatpush1.msra.mxu0 0.0
    %2371 = vmatprep.subr.mxu0 0.0
    %2372 = vmatpush1.msra.mxu0 0.0
    %2373 = vmatprep.subr.mxu0 0.0
    %2374 = vmatpush1.msra.mxu0 0.0
    %2375 = vmatprep.subr.mxu0 0.0
    %2376 = vmatpush1.msra.mxu0 0.0
    %2377 = vmatprep.subr.mxu0 0.0
    %2378 = vmatpush1.msra.mxu0 0.0
    %2379 = vmatprep.subr.mxu0 0.0
    %2380 = vmatpush1.msra.mxu0 0.0
    %2381 = vmatprep.subr.mxu0 0.0
    %2382 = vmatpush1.msra.mxu0 0.0
    %2383 = vmatprep.subr.mxu0 0.0
    %2384 = vmatpush1.msra.mxu0 0.0
    %2385 = vmatprep.subr.mxu0 0.0
    %2386 = vmatpush1.msra.mxu0 0.0
    %2387 = vmatprep.subr.mxu0 0.0
    %2388 = vmatpush1.msra.mxu0 0.0
    %2389 = vmatprep.mubr.f32.mxu0 0.0
    %2390 = vmatmul.mubr.f32.gmra.mrb[0].mxu0 %v2253
    %v2391 = vpop.f32.mrb[0].mxu0
    %v2392 = vadd.f32 %v81, %v2391
    %v2393 = vpop.f32.mrb[0].mxu0
    %2394 = vdwg.mxu0
    %v2395 = vtanh.pop %v2392
    %vm2396 = vcmask 523264
    %v2398 = vsel %vm2396, %v2395, 0
    %2400 = vmatprep.subr.mxu0 0.0
    %2401 = vmatpush1.msra.mxu0 %v50
    %2402 = vmatprep.subr.mxu0 0.0
    %2403 = vmatpush1.msra.mxu0 %v51
    %2404 = vmatprep.subr.mxu0 0.0
    %2405 = vmatpush1.msra.mxu0 %v52
    %2406 = vmatprep.subr.mxu0 0.0
    %2407 = vmatpush1.msra.mxu0 %v53
    %2408 = vmatprep.subr.mxu0 0.0
    %2409 = vmatpush1.msra.mxu0 %v54
    %2410 = vmatprep.subr.mxu0 0.0
    %2411 = vmatpush1.msra.mxu0 %v55
    %2412 = vmatprep.subr.mxu0 0.0
    %2413 = vmatpush1.msra.mxu0 %v56
    %2414 = vmatprep.subr.mxu0 0.0
    %2415 = vmatpush1.msra.mxu0 %v57
    %2416 = vmatprep.subr.mxu0 0.0
    %2417 = vmatpush1.msra.mxu0 0.0
    %2418 = vmatprep.subr.mxu0 0.0
    %2419 = vmatpush1.msra.mxu0 0.0
    %2420 = vmatprep.subr.mxu0 0.0
    %2421 = vmatpush1.msra.mxu0 0.0
    %2422 = vmatprep.subr.mxu0 0.0
    %2423 = vmatpush1.msra.mxu0 0.0
    %2424 = vmatprep.subr.mxu0 0.0
    %2425 = vmatpush1.msra.mxu0 0.0
    %2426 = vmatprep.subr.mxu0 0.0
    %2427 = vmatpush1.msra.mxu0 0.0
    %2428 = vmatprep.subr.mxu0 0.0
    %2429 = vmatpush1.msra.mxu0 0.0
    %2430 = vmatprep.subr.mxu0 0.0
    %2431 = vmatpush1.msra.mxu0 0.0
    %2432 = vmatprep.subr.mxu0 0.0
    %2433 = vmatpush1.msra.mxu0 0.0
    %2434 = vmatprep.subr.mxu0 0.0
    %2435 = vmatpush1.msra.mxu0 0.0
    %2436 = vmatprep.subr.mxu0 0.0
    %2437 = vmatpush1.msra.mxu0 0.0
    %2438 = vmatprep.subr.mxu0 0.0
    %2439 = vmatpush1.msra.mxu0 0.0
    %2440 = vmatprep.subr.mxu0 0.0
    %2441 = vmatpush1.msra.mxu0 0.0
    %2442 = vmatprep.subr.mxu0 0.0
    %2443 = vmatpush1.msra.mxu0 0.0
    %2444 = vmatprep.subr.mxu0 0.0
    %2445 = vmatpush1.msra.mxu0 0.0
    %2446 = vmatprep.subr.mxu0 0.0
    %2447 = vmatpush1.msra.mxu0 0.0
    %2448 = vmatprep.subr.mxu0 0.0
    %2449 = vmatpush1.msra.mxu0 0.0
    %2450 = vmatprep.subr.mxu0 0.0
    %2451 = vmatpush1.msra.mxu0 0.0
    %2452 = vmatprep.subr.mxu0 0.0
    %2453 = vmatpush1.msra.mxu0 0.0
    %2454 = vmatprep.subr.mxu0 0.0
    %2455 = vmatpush1.msra.mxu0 0.0
    %2456 = vmatprep.subr.mxu0 0.0
    %2457 = vmatpush1.msra.mxu0 0.0
    %2458 = vmatprep.subr.mxu0 0.0
    %2459 = vmatpush1.msra.mxu0 0.0
    %2460 = vmatprep.subr.mxu0 0.0
    %2461 = vmatpush1.msra.mxu0 0.0
    %2462 = vmatprep.subr.mxu0 0.0
    %2463 = vmatpush1.msra.mxu0 0.0
    %2464 = vmatprep.mubr.f32.mxu0 0.0
    %2465 = vmatmul.mubr.f32.gmra.mrb[0].mxu0 %v2398
    %v2466 = vpop.f32.mrb[0].mxu0
    %v2467 = vadd.f32 %v86, %v2466
    %v2468 = vpop.f32.mrb[0].mxu0
    %2469 = vdwg.mxu0
    %v2470 = vtanh.pop %v2467
    %v2472 = vsel %vm2396, %v2470, 0
    %2474 = vmatprep.subr.mxu0 0.0
    %2475 = vmatpush1.msra.mxu0 %v38
    %2476 = vmatprep.subr.mxu0 0.0
    %2477 = vmatpush1.msra.mxu0 %v39
    %2478 = vmatprep.subr.mxu0 0.0
    %2479 = vmatpush1.msra.mxu0 %v40
    %2480 = vmatprep.subr.mxu0 0.0
    %2481 = vmatpush1.msra.mxu0 %v41
    %2482 = vmatprep.subr.mxu0 0.0
    %2483 = vmatpush1.msra.mxu0 %v42
    %2484 = vmatprep.subr.mxu0 0.0
    %2485 = vmatpush1.msra.mxu0 %v43
    %2486 = vmatprep.subr.mxu0 0.0
    %2487 = vmatpush1.msra.mxu0 %v44
    %2488 = vmatprep.subr.mxu0 0.0
    %2489 = vmatpush1.msra.mxu0 %v45
    %2490 = vmatprep.subr.mxu0 0.0
    %2491 = vmatpush1.msra.mxu0 0.0
    %2492 = vmatprep.subr.mxu0 0.0
    %2493 = vmatpush1.msra.mxu0 0.0
    %2494 = vmatprep.subr.mxu0 0.0
    %2495 = vmatpush1.msra.mxu0 0.0
    %2496 = vmatprep.subr.mxu0 0.0
    %2497 = vmatpush1.msra.mxu0 0.0
    %2498 = vmatprep.subr.mxu0 0.0
    %2499 = vmatpush1.msra.mxu0 0.0
    %2500 = vmatprep.subr.mxu0 0.0
    %2501 = vmatpush1.msra.mxu0 0.0
    %2502 = vmatprep.subr.mxu0 0.0
    %2503 = vmatpush1.msra.mxu0 0.0
    %2504 = vmatprep.subr.mxu0 0.0
    %2505 = vmatpush1.msra.mxu0 0.0
    %2506 = vmatprep.subr.mxu0 0.0
    %2507 = vmatpush1.msra.mxu0 0.0
    %2508 = vmatprep.subr.mxu0 0.0
    %2509 = vmatpush1.msra.mxu0 0.0
    %2510 = vmatprep.subr.mxu0 0.0
    %2511 = vmatpush1.msra.mxu0 0.0
    %2512 = vmatprep.subr.mxu0 0.0
    %2513 = vmatpush1.msra.mxu0 0.0
    %2514 = vmatprep.subr.mxu0 0.0
    %2515 = vmatpush1.msra.mxu0 0.0
    %2516 = vmatprep.subr.mxu0 0.0
    %2517 = vmatpush1.msra.mxu0 0.0
    %2518 = vmatprep.subr.mxu0 0.0
    %2519 = vmatpush1.msra.mxu0 0.0
    %2520 = vmatprep.subr.mxu0 0.0
    %2521 = vmatpush1.msra.mxu0 0.0
    %2522 = vmatprep.subr.mxu0 0.0
    %2523 = vmatpush1.msra.mxu0 0.0
    %2524 = vmatprep.subr.mxu0 0.0
    %2525 = vmatpush1.msra.mxu0 0.0
    %2526 = vmatprep.subr.mxu0 0.0
    %2527 = vmatpush1.msra.mxu0 0.0
    %2528 = vmatprep.subr.mxu0 0.0
    %2529 = vmatpush1.msra.mxu0 0.0
    %2530 = vmatprep.subr.mxu0 0.0
    %2531 = vmatpush1.msra.mxu0 0.0
    %2532 = vmatprep.subr.mxu0 0.0
    %2533 = vmatpush1.msra.mxu0 0.0
    %2534 = vmatprep.subr.mxu0 0.0
    %2535 = vmatpush1.msra.mxu0 0.0
    %2536 = vmatprep.subr.mxu0 0.0
    %2537 = vmatpush1.msra.mxu0 0.0
    %2538 = vmatprep.mubr.f32.mxu0 0.0
    %2539 = vmatmul.mubr.f32.gmra.mrb[0].mxu0 %v2472
    %v2540 = vpop.f32.mrb[0].mxu0
    %v2541 = vadd.f32 %v2156, %v2540
    %v2542 = vpop.f32.mrb[0].mxu0
    %2543 = vdwg.mxu0
    %v2544 = vadd.f32 %v2541, %v76
    %v2545 = vtanh.pop %v2544
    %v2546 = vmul.f32 %v2545, 0.5
    %v2547 = vadd.f32 %v2546, 0.5
    %v2549 = vrot.slane %v2076, 6
    %v2551 = vmul.f32 %v2547, %v2549
    %2553 = vrot.lane.b32.xlu0 %v2545, 32
    %v2554 = vpop.permute.xlu0 %2553
    %v2556 = vmul.f32 %v2547, %v2554
    %2558 = vrot.lane.b32.xlu0 %v2556, 32
    %v2559 = vpop.permute.xlu0 %2558
    %v2561 = vadd.f32 %v2551, %v2559
    %v2562 = vtanh.pop %v2561
    %2564 = vrot.lane.b32.xlu0 %v2562, 32
    %v2565 = vpop.permute.xlu0 %2564
    %v2567 = vmul.f32 %v2547, %v2565
    %2569 = vrot.lane.b32.xlu0 %v2567, 64
    %v2570 = vpop.permute.xlu0 %2569
    %v2571 = vsel %vm208, %v2570, 0
    %2573 = vmatprep.subr.mxu0 0.0
    %2574 = vmatpush1.msra.mxu0 %v26
    %2575 = vmatprep.subr.mxu0 0.0
    %2576 = vmatpush1.msra.mxu0 %v27
    %2577 = vmatprep.subr.mxu0 0.0
    %2578 = vmatpush1.msra.mxu0 %v28
    %2579 = vmatprep.subr.mxu0 0.0
    %2580 = vmatpush1.msra.mxu0 %v29
    %2581 = vmatprep.subr.mxu0 0.0
    %2582 = vmatpush1.msra.mxu0 0.0
    %2583 = vmatprep.subr.mxu0 0.0
    %2584 = vmatpush1.msra.mxu0 0.0
    %2585 = vmatprep.subr.mxu0 0.0
    %2586 = vmatpush1.msra.mxu0 0.0
    %2587 = vmatprep.subr.mxu0 0.0
    %2588 = vmatpush1.msra.mxu0 0.0
    %2589 = vmatprep.subr.mxu0 0.0
    %2590 = vmatpush1.msra.mxu0 0.0
    %2591 = vmatprep.subr.mxu0 0.0
    %2592 = vmatpush1.msra.mxu0 0.0
    %2593 = vmatprep.subr.mxu0 0.0
    %2594 = vmatpush1.msra.mxu0 0.0
    %2595 = vmatprep.subr.mxu0 0.0
    %2596 = vmatpush1.msra.mxu0 0.0
    %2597 = vmatprep.subr.mxu0 0.0
    %2598 = vmatpush1.msra.mxu0 0.0
    %2599 = vmatprep.subr.mxu0 0.0
    %2600 = vmatpush1.msra.mxu0 0.0
    %2601 = vmatprep.subr.mxu0 0.0
    %2602 = vmatpush1.msra.mxu0 0.0
    %2603 = vmatprep.subr.mxu0 0.0
    %2604 = vmatpush1.msra.mxu0 0.0
    %2605 = vmatprep.subr.mxu0 0.0
    %2606 = vmatpush1.msra.mxu0 0.0
    %2607 = vmatprep.subr.mxu0 0.0
    %2608 = vmatpush1.msra.mxu0 0.0
    %2609 = vmatprep.subr.mxu0 0.0
    %2610 = vmatpush1.msra.mxu0 0.0
    %2611 = vmatprep.subr.mxu0 0.0
    %2612 = vmatpush1.msra.mxu0 0.0
    %2613 = vmatprep.subr.mxu0 0.0
    %2614 = vmatpush1.msra.mxu0 0.0
    %2615 = vmatprep.subr.mxu0 0.0
    %2616 = vmatpush1.msra.mxu0 0.0
    %2617 = vmatprep.subr.mxu0 0.0
    %2618 = vmatpush1.msra.mxu0 0.0
    %2619 = vmatprep.subr.mxu0 0.0
    %2620 = vmatpush1.msra.mxu0 0.0
    %2621 = vmatprep.subr.mxu0 0.0
    %2622 = vmatpush1.msra.mxu0 0.0
    %2623 = vmatprep.subr.mxu0 0.0
    %2624 = vmatpush1.msra.mxu0 0.0
    %2625 = vmatprep.subr.mxu0 0.0
    %2626 = vmatpush1.msra.mxu0 0.0
    %2627 = vmatprep.subr.mxu0 0.0
    %2628 = vmatpush1.msra.mxu0 0.0
    %2629 = vmatprep.subr.mxu0 0.0
    %2630 = vmatpush1.msra.mxu0 0.0
    %2631 = vmatprep.subr.mxu0 0.0
    %2632 = vmatpush1.msra.mxu0 0.0
    %2633 = vmatprep.subr.mxu0 0.0
    %2634 = vmatpush1.msra.mxu0 0.0
    %2635 = vmatprep.subr.mxu0 0.0
    %2636 = vmatpush1.msra.mxu0 0.0
    %2637 = vmatprep.mubr.f32.mxu0 0.0
    %2638 = vmatmul.mubr.f32.gmra.mrb[0].mxu0 %v2571
    %v2639 = vpop.f32.mrb[0].mxu0
    %v2640 = vadd.f32 0.0, %v2639
    %v2641 = vpop.f32.mrb[0].mxu0
    %2642 = vdwg.mxu0
    %2643 = vmatprep.subr.mxu0 0.0
    %2644 = vmatpush1.msra.mxu0 %v30
    %2645 = vmatprep.subr.mxu0 0.0
    %2646 = vmatpush1.msra.mxu0 %v31
    %2647 = vmatprep.subr.mxu0 0.0
    %2648 = vmatpush1.msra.mxu0 %v32
    %2649 = vmatprep.subr.mxu0 0.0
    %2650 = vmatpush1.msra.mxu0 %v33
    %2651 = vmatprep.subr.mxu0 0.0
    %2652 = vmatpush1.msra.mxu0 0.0
    %2653 = vmatprep.subr.mxu0 0.0
    %2654 = vmatpush1.msra.mxu0 0.0
    %2655 = vmatprep.subr.mxu0 0.0
    %2656 = vmatpush1.msra.mxu0 0.0
    %2657 = vmatprep.subr.mxu0 0.0
    %2658 = vmatpush1.msra.mxu0 0.0
    %2659 = vmatprep.subr.mxu0 0.0
    %2660 = vmatpush1.msra.mxu0 0.0
    %2661 = vmatprep.subr.mxu0 0.0
    %2662 = vmatpush1.msra.mxu0 0.0
    %2663 = vmatprep.subr.mxu0 0.0
    %2664 = vmatpush1.msra.mxu0 0.0
    %2665 = vmatprep.subr.mxu0 0.0
    %2666 = vmatpush1.msra.mxu0 0.0
    %2667 = vmatprep.subr.mxu0 0.0
    %2668 = vmatpush1.msra.mxu0 0.0
    %2669 = vmatprep.subr.mxu0 0.0
    %2670 = vmatpush1.msra.mxu0 0.0
    %2671 = vmatprep.subr.mxu0 0.0
    %2672 = vmatpush1.msra.mxu0 0.0
    %2673 = vmatprep.subr.mxu0 0.0
    %2674 = vmatpush1.msra.mxu0 0.0
    %2675 = vmatprep.subr.mxu0 0.0
    %2676 = vmatpush1.msra.mxu0 0.0
    %2677 = vmatprep.subr.mxu0 0.0
    %2678 = vmatpush1.msra.mxu0 0.0
    %2679 = vmatprep.subr.mxu0 0.0
    %2680 = vmatpush1.msra.mxu0 0.0
    %2681 = vmatprep.subr.mxu0 0.0
    %2682 = vmatpush1.msra.mxu0 0.0
    %2683 = vmatprep.subr.mxu0 0.0
    %2684 = vmatpush1.msra.mxu0 0.0
    %2685 = vmatprep.subr.mxu0 0.0
    %2686 = vmatpush1.msra.mxu0 0.0
    %2687 = vmatprep.subr.mxu0 0.0
    %2688 = vmatpush1.msra.mxu0 0.0
    %2689 = vmatprep.subr.mxu0 0.0
    %2690 = vmatpush1.msra.mxu0 0.0
    %2691 = vmatprep.subr.mxu0 0.0
    %2692 = vmatpush1.msra.mxu0 0.0
    %2693 = vmatprep.subr.mxu0 0.0
    %2694 = vmatpush1.msra.mxu0 0.0
    %2695 = vmatprep.subr.mxu0 0.0
    %2696 = vmatpush1.msra.mxu0 0.0
    %2697 = vmatprep.subr.mxu0 0.0
    %2698 = vmatpush1.msra.mxu0 0.0
    %2699 = vmatprep.subr.mxu0 0.0
    %2700 = vmatpush1.msra.mxu0 0.0
    %2701 = vmatprep.subr.mxu0 0.0
    %2702 = vmatpush1.msra.mxu0 0.0
    %2703 = vmatprep.subr.mxu0 0.0
    %2704 = vmatpush1.msra.mxu0 0.0
    %2705 = vmatprep.subr.mxu0 0.0
    %2706 = vmatpush1.msra.mxu0 0.0
    %2707 = vmatprep.mubr.f32.mxu0 0.0
    %2708 = vmatmul.mubr.f32.gmra.mrb[0].mxu0 %v2571
    %v2709 = vpop.f32.mrb[0].mxu0
    %v2710 = vadd.f32 %v2322, %v2709
    %v2711 = vpop.f32.mrb[0].mxu0
    %2712 = vdwg.mxu0
    %v2713 = vadd.f32 %v2710, %v71
    %v2714 = vtanh.pop %v2713
    %v2715 = vmul.f32 %v2714, 0.5
    %v2716 = vadd.f32 %v2715, 0.5
    %v2717 = vmul.f32 %v2716, %v2243
    %2719 = vrot.lane.b32.xlu0 %v2714, 32
    %v2720 = vpop.permute.xlu0 %2719
    %v2722 = vmul.f32 %v2716, %v2720
    %2724 = vrot.lane.b32.xlu0 %v2722, 32
    %v2725 = vpop.permute.xlu0 %2724
    %v2727 = vadd.f32 %v2717, %v2725
    %v2728 = vtanh.pop %v2727
    %2730 = vrot.lane.b32.xlu0 %v2728, 32
    %v2731 = vpop.permute.xlu0 %2730
    %v2733 = vmul.f32 %v2716, %v2731
    %2735 = vrot.lane.b32.xlu0 %v2733, 64
    %v2736 = vpop.permute.xlu0 %2735
    %v2737 = vsel %vm208, %v2736, 0
    %2739 = vmatprep.subr.mxu0 0.0
    %2740 = vmatpush1.msra.mxu0 %v34
    %2741 = vmatprep.subr.mxu0 0.0
    %2742 = vmatpush1.msra.mxu0 %v35
    %2743 = vmatprep.subr.mxu0 0.0
    %2744 = vmatpush1.msra.mxu0 %v36
    %2745 = vmatprep.subr.mxu0 0.0
    %2746 = vmatpush1.msra.mxu0 %v37
    %2747 = vmatprep.subr.mxu0 0.0
    %2748 = vmatpush1.msra.mxu0 0.0
    %2749 = vmatprep.subr.mxu0 0.0
    %2750 = vmatpush1.msra.mxu0 0.0
    %2751 = vmatprep.subr.mxu0 0.0
    %2752 = vmatpush1.msra.mxu0 0.0
    %2753 = vmatprep.subr.mxu0 0.0
    %2754 = vmatpush1.msra.mxu0 0.0
    %2755 = vmatprep.subr.mxu0 0.0
    %2756 = vmatpush1.msra.mxu0 0.0
    %2757 = vmatprep.subr.mxu0 0.0
    %2758 = vmatpush1.msra.mxu0 0.0
    %2759 = vmatprep.subr.mxu0 0.0
    %2760 = vmatpush1.msra.mxu0 0.0
    %2761 = vmatprep.subr.mxu0 0.0
    %2762 = vmatpush1.msra.mxu0 0.0
    %2763 = vmatprep.subr.mxu0 0.0
    %2764 = vmatpush1.msra.mxu0 0.0
    %2765 = vmatprep.subr.mxu0 0.0
    %2766 = vmatpush1.msra.mxu0 0.0
    %2767 = vmatprep.subr.mxu0 0.0
    %2768 = vmatpush1.msra.mxu0 0.0
    %2769 = vmatprep.subr.mxu0 0.0
    %2770 = vmatpush1.msra.mxu0 0.0
    %2771 = vmatprep.subr.mxu0 0.0
    %2772 = vmatpush1.msra.mxu0 0.0
    %2773 = vmatprep.subr.mxu0 0.0
    %2774 = vmatpush1.msra.mxu0 0.0
    %2775 = vmatprep.subr.mxu0 0.0
    %2776 = vmatpush1.msra.mxu0 0.0
    %2777 = vmatprep.subr.mxu0 0.0
    %2778 = vmatpush1.msra.mxu0 0.0
    %2779 = vmatprep.subr.mxu0 0.0
    %2780 = vmatpush1.msra.mxu0 0.0
    %2781 = vmatprep.subr.mxu0 0.0
    %2782 = vmatpush1.msra.mxu0 0.0
    %2783 = vmatprep.subr.mxu0 0.0
    %2784 = vmatpush1.msra.mxu0 0.0
    %2785 = vmatprep.subr.mxu0 0.0
    %2786 = vmatpush1.msra.mxu0 0.0
    %2787 = vmatprep.subr.mxu0 0.0
    %2788 = vmatpush1.msra.mxu0 0.0
    %2789 = vmatprep.subr.mxu0 0.0
    %2790 = vmatpush1.msra.mxu0 0.0
    %2791 = vmatprep.subr.mxu0 0.0
    %2792 = vmatpush1.msra.mxu0 0.0
    %2793 = vmatprep.subr.mxu0 0.0
    %2794 = vmatpush1.msra.mxu0 0.0
    %2795 = vmatprep.subr.mxu0 0.0
    %2796 = vmatpush1.msra.mxu0 0.0
    %2797 = vmatprep.subr.mxu0 0.0
    %2798 = vmatpush1.msra.mxu0 0.0
    %2799 = vmatprep.subr.mxu0 0.0
    %2800 = vmatpush1.msra.mxu0 0.0
    %2801 = vmatprep.subr.mxu0 0.0
    %2802 = vmatpush1.msra.mxu0 0.0
    %2803 = vmatprep.mubr.f32.mxu0 0.0
    %2804 = vmatmul.mubr.f32.gmra.mrb[0].mxu0 %v2737
    %v2805 = vpop.f32.mrb[0].mxu0
    %v2806 = vadd.f32 0.0, %v2805
    %v2807 = vpop.f32.mrb[0].mxu0
    %2808 = vdwg.mxu0
    %2809 = vmatprep.subr.mxu0 0.0
    %2810 = vmatpush1.msra.mxu0 %v46
    %2811 = vmatprep.subr.mxu0 0.0
    %2812 = vmatpush1.msra.mxu0 %v47
    %2813 = vmatprep.subr.mxu0 0.0
    %2814 = vmatpush1.msra.mxu0 %v48
    %2815 = vmatprep.subr.mxu0 0.0
    %2816 = vmatpush1.msra.mxu0 %v49
    %2817 = vmatprep.subr.mxu0 0.0
    %2818 = vmatpush1.msra.mxu0 0.0
    %2819 = vmatprep.subr.mxu0 0.0
    %2820 = vmatpush1.msra.mxu0 0.0
    %2821 = vmatprep.subr.mxu0 0.0
    %2822 = vmatpush1.msra.mxu0 0.0
    %2823 = vmatprep.subr.mxu0 0.0
    %2824 = vmatpush1.msra.mxu0 0.0
    %2825 = vmatprep.subr.mxu0 0.0
    %2826 = vmatpush1.msra.mxu0 0.0
    %2827 = vmatprep.subr.mxu0 0.0
    %2828 = vmatpush1.msra.mxu0 0.0
    %2829 = vmatprep.subr.mxu0 0.0
    %2830 = vmatpush1.msra.mxu0 0.0
    %2831 = vmatprep.subr.mxu0 0.0
    %2832 = vmatpush1.msra.mxu0 0.0
    %2833 = vmatprep.subr.mxu0 0.0
    %2834 = vmatpush1.msra.mxu0 0.0
    %2835 = vmatprep.subr.mxu0 0.0
    %2836 = vmatpush1.msra.mxu0 0.0
    %2837 = vmatprep.subr.mxu0 0.0
    %2838 = vmatpush1.msra.mxu0 0.0
    %2839 = vmatprep.subr.mxu0 0.0
    %2840 = vmatpush1.msra.mxu0 0.0
    %2841 = vmatprep.subr.mxu0 0.0
    %2842 = vmatpush1.msra.mxu0 0.0
    %2843 = vmatprep.subr.mxu0 0.0
    %2844 = vmatpush1.msra.mxu0 0.0
    %2845 = vmatprep.subr.mxu0 0.0
    %2846 = vmatpush1.msra.mxu0 0.0
    %2847 = vmatprep.subr.mxu0 0.0
    %2848 = vmatpush1.msra.mxu0 0.0
    %2849 = vmatprep.subr.mxu0 0.0
    %2850 = vmatpush1.msra.mxu0 0.0
    %2851 = vmatprep.subr.mxu0 0.0
    %2852 = vmatpush1.msra.mxu0 0.0
    %2853 = vmatprep.subr.mxu0 0.0
    %2854 = vmatpush1.msra.mxu0 0.0
    %2855 = vmatprep.subr.mxu0 0.0
    %2856 = vmatpush1.msra.mxu0 0.0
    %2857 = vmatprep.subr.mxu0 0.0
    %2858 = vmatpush1.msra.mxu0 0.0
    %2859 = vmatprep.subr.mxu0 0.0
    %2860 = vmatpush1.msra.mxu0 0.0
    %2861 = vmatprep.subr.mxu0 0.0
    %2862 = vmatpush1.msra.mxu0 0.0
    %2863 = vmatprep.subr.mxu0 0.0
    %2864 = vmatpush1.msra.mxu0 0.0
    %2865 = vmatprep.subr.mxu0 0.0
    %2866 = vmatpush1.msra.mxu0 0.0
    %2867 = vmatprep.subr.mxu0 0.0
    %2868 = vmatpush1.msra.mxu0 0.0
    %2869 = vmatprep.subr.mxu0 0.0
    %2870 = vmatpush1.msra.mxu0 0.0
    %2871 = vmatprep.subr.mxu0 0.0
    %2872 = vmatpush1.msra.mxu0 0.0
    %2873 = vmatprep.mubr.f32.mxu0 0.0
    %2874 = vmatmul.mubr.f32.gmra.mrb[0].mxu0 %v2737
    %v2875 = vpop.f32.mrb[0].mxu0
    %v2876 = vadd.f32 %v81, %v2875
    %v2877 = vpop.f32.mrb[0].mxu0
    %2878 = vdwg.mxu0
    %v2879 = vtanh.pop %v2876
    %v2881 = vsel %vm2396, %v2879, 0
    %2883 = vmatprep.subr.mxu0 0.0
    %2884 = vmatpush1.msra.mxu0 %v50
    %2885 = vmatprep.subr.mxu0 0.0
    %2886 = vmatpush1.msra.mxu0 %v51
    %2887 = vmatprep.subr.mxu0 0.0
    %2888 = vmatpush1.msra.mxu0 %v52
    %2889 = vmatprep.subr.mxu0 0.0
    %2890 = vmatpush1.msra.mxu0 %v53
    %2891 = vmatprep.subr.mxu0 0.0
    %2892 = vmatpush1.msra.mxu0 %v54
    %2893 = vmatprep.subr.mxu0 0.0
    %2894 = vmatpush1.msra.mxu0 %v55
    %2895 = vmatprep.subr.mxu0 0.0
    %2896 = vmatpush1.msra.mxu0 %v56
    %2897 = vmatprep.subr.mxu0 0.0
    %2898 = vmatpush1.msra.mxu0 %v57
    %2899 = vmatprep.subr.mxu0 0.0
    %2900 = vmatpush1.msra.mxu0 0.0
    %2901 = vmatprep.subr.mxu0 0.0
    %2902 = vmatpush1.msra.mxu0 0.0
    %2903 = vmatprep.subr.mxu0 0.0
    %2904 = vmatpush1.msra.mxu0 0.0
    %2905 = vmatprep.subr.mxu0 0.0
    %2906 = vmatpush1.msra.mxu0 0.0
    %2907 = vmatprep.subr.mxu0 0.0
    %2908 = vmatpush1.msra.mxu0 0.0
    %2909 = vmatprep.subr.mxu0 0.0
    %2910 = vmatpush1.msra.mxu0 0.0
    %2911 = vmatprep.subr.mxu0 0.0
    %2912 = vmatpush1.msra.mxu0 0.0
    %2913 = vmatprep.subr.mxu0 0.0
    %2914 = vmatpush1.msra.mxu0 0.0
    %2915 = vmatprep.subr.mxu0 0.0
    %2916 = vmatpush1.msra.mxu0 0.0
    %2917 = vmatprep.subr.mxu0 0.0
    %2918 = vmatpush1.msra.mxu0 0.0
    %2919 = vmatprep.subr.mxu0 0.0
    %2920 = vmatpush1.msra.mxu0 0.0
    %2921 = vmatprep.subr.mxu0 0.0
    %2922 = vmatpush1.msra.mxu0 0.0
    %2923 = vmatprep.subr.mxu0 0.0
    %2924 = vmatpush1.msra.mxu0 0.0
    %2925 = vmatprep.subr.mxu0 0.0
    %2926 = vmatpush1.msra.mxu0 0.0
    %2927 = vmatprep.subr.mxu0 0.0
    %2928 = vmatpush1.msra.mxu0 0.0
    %2929 = vmatprep.subr.mxu0 0.0
    %2930 = vmatpush1.msra.mxu0 0.0
    %2931 = vmatprep.subr.mxu0 0.0
    %2932 = vmatpush1.msra.mxu0 0.0
    %2933 = vmatprep.subr.mxu0 0.0
    %2934 = vmatpush1.msra.mxu0 0.0
    %2935 = vmatprep.subr.mxu0 0.0
    %2936 = vmatpush1.msra.mxu0 0.0
    %2937 = vmatprep.subr.mxu0 0.0
    %2938 = vmatpush1.msra.mxu0 0.0
    %2939 = vmatprep.subr.mxu0 0.0
    %2940 = vmatpush1.msra.mxu0 0.0
    %2941 = vmatprep.subr.mxu0 0.0
    %2942 = vmatpush1.msra.mxu0 0.0
    %2943 = vmatprep.subr.mxu0 0.0
    %2944 = vmatpush1.msra.mxu0 0.0
    %2945 = vmatprep.subr.mxu0 0.0
    %2946 = vmatpush1.msra.mxu0 0.0
    %2947 = vmatprep.mubr.f32.mxu0 0.0
    %2948 = vmatmul.mubr.f32.gmra.mrb[0].mxu0 %v2881
    %v2949 = vpop.f32.mrb[0].mxu0
    %v2950 = vadd.f32 %v86, %v2949
    %v2951 = vpop.f32.mrb[0].mxu0
    %2952 = vdwg.mxu0
    %v2953 = vtanh.pop %v2950
    %v2955 = vsel %vm2396, %v2953, 0
    %2957 = vmatprep.subr.mxu0 0.0
    %2958 = vmatpush1.msra.mxu0 %v58
    %2959 = vmatprep.subr.mxu0 0.0
    %2960 = vmatpush1.msra.mxu0 %v59
    %2961 = vmatprep.subr.mxu0 0.0
    %2962 = vmatpush1.msra.mxu0 %v60
    %2963 = vmatprep.subr.mxu0 0.0
    %2964 = vmatpush1.msra.mxu0 %v61
    %2965 = vmatprep.subr.mxu0 0.0
    %2966 = vmatpush1.msra.mxu0 %v62
    %2967 = vmatprep.subr.mxu0 0.0
    %2968 = vmatpush1.msra.mxu0 %v63
    %2969 = vmatprep.subr.mxu0 0.0
    %2970 = vmatpush1.msra.mxu0 %v64
    %2971 = vmatprep.subr.mxu0 0.0
    %2972 = vmatpush1.msra.mxu0 %v65
    %2973 = vmatprep.subr.mxu0 0.0
    %2974 = vmatpush1.msra.mxu0 0.0
    %2975 = vmatprep.subr.mxu0 0.0
    %2976 = vmatpush1.msra.mxu0 0.0
    %2977 = vmatprep.subr.mxu0 0.0
    %2978 = vmatpush1.msra.mxu0 0.0
    %2979 = vmatprep.subr.mxu0 0.0
    %2980 = vmatpush1.msra.mxu0 0.0
    %2981 = vmatprep.subr.mxu0 0.0
    %2982 = vmatpush1.msra.mxu0 0.0
    %2983 = vmatprep.subr.mxu0 0.0
    %2984 = vmatpush1.msra.mxu0 0.0
    %2985 = vmatprep.subr.mxu0 0.0
    %2986 = vmatpush1.msra.mxu0 0.0
    %2987 = vmatprep.subr.mxu0 0.0
    %2988 = vmatpush1.msra.mxu0 0.0
    %2989 = vmatprep.subr.mxu0 0.0
    %2990 = vmatpush1.msra.mxu0 0.0
    %2991 = vmatprep.subr.mxu0 0.0
    %2992 = vmatpush1.msra.mxu0 0.0
    %2993 = vmatprep.subr.mxu0 0.0
    %2994 = vmatpush1.msra.mxu0 0.0
    %2995 = vmatprep.subr.mxu0 0.0
    %2996 = vmatpush1.msra.mxu0 0.0
    %2997 = vmatprep.subr.mxu0 0.0
    %2998 = vmatpush1.msra.mxu0 0.0
    %2999 = vmatprep.subr.mxu0 0.0
    %3000 = vmatpush1.msra.mxu0 0.0
    %3001 = vmatprep.subr.mxu0 0.0
    %3002 = vmatpush1.msra.mxu0 0.0
    %3003 = vmatprep.subr.mxu0 0.0
    %3004 = vmatpush1.msra.mxu0 0.0
    %3005 = vmatprep.subr.mxu0 0.0
    %3006 = vmatpush1.msra.mxu0 0.0
    %3007 = vmatprep.subr.mxu0 0.0
    %3008 = vmatpush1.msra.mxu0 0.0
    %3009 = vmatprep.subr.mxu0 0.0
    %3010 = vmatpush1.msra.mxu0 0.0
    %3011 = vmatprep.subr.mxu0 0.0
    %3012 = vmatpush1.msra.mxu0 0.0
    %3013 = vmatprep.subr.mxu0 0.0
    %3014 = vmatpush1.msra.mxu0 0.0
    %3015 = vmatprep.subr.mxu0 0.0
    %3016 = vmatpush1.msra.mxu0 0.0
    %3017 = vmatprep.subr.mxu0 0.0
    %3018 = vmatpush1.msra.mxu0 0.0
    %3019 = vmatprep.subr.mxu0 0.0
    %3020 = vmatpush1.msra.mxu0 0.0
    %3021 = vmatprep.mubr.f32.mxu0 0.0
    %3022 = vmatmul.mubr.f32.gmra.mrb[0].mxu0 %v2955
    %v3023 = vpop.f32.mrb[0].mxu0
    %v3024 = vadd.f32 %v91, %v3023
    %v3025 = vpop.f32.mrb[0].mxu0
    %3026 = vdwg.mxu0
    %3027 = vmatprep.subr.mxu0 0.0
    %3028 = vmatpush1.msra.mxu0 %v38
    %3029 = vmatprep.subr.mxu0 0.0
    %3030 = vmatpush1.msra.mxu0 %v39
    %3031 = vmatprep.subr.mxu0 0.0
    %3032 = vmatpush1.msra.mxu0 %v40
    %3033 = vmatprep.subr.mxu0 0.0
    %3034 = vmatpush1.msra.mxu0 %v41
    %3035 = vmatprep.subr.mxu0 0.0
    %3036 = vmatpush1.msra.mxu0 %v42
    %3037 = vmatprep.subr.mxu0 0.0
    %3038 = vmatpush1.msra.mxu0 %v43
    %3039 = vmatprep.subr.mxu0 0.0
    %3040 = vmatpush1.msra.mxu0 %v44
    %3041 = vmatprep.subr.mxu0 0.0
    %3042 = vmatpush1.msra.mxu0 %v45
    %3043 = vmatprep.subr.mxu0 0.0
    %3044 = vmatpush1.msra.mxu0 0.0
    %3045 = vmatprep.subr.mxu0 0.0
    %3046 = vmatpush1.msra.mxu0 0.0
    %3047 = vmatprep.subr.mxu0 0.0
    %3048 = vmatpush1.msra.mxu0 0.0
    %3049 = vmatprep.subr.mxu0 0.0
    %3050 = vmatpush1.msra.mxu0 0.0
    %3051 = vmatprep.subr.mxu0 0.0
    %3052 = vmatpush1.msra.mxu0 0.0
    %3053 = vmatprep.subr.mxu0 0.0
    %3054 = vmatpush1.msra.mxu0 0.0
    %3055 = vmatprep.subr.mxu0 0.0
    %3056 = vmatpush1.msra.mxu0 0.0
    %3057 = vmatprep.subr.mxu0 0.0
    %3058 = vmatpush1.msra.mxu0 0.0
    %3059 = vmatprep.subr.mxu0 0.0
    %3060 = vmatpush1.msra.mxu0 0.0
    %3061 = vmatprep.subr.mxu0 0.0
    %3062 = vmatpush1.msra.mxu0 0.0
    %3063 = vmatprep.subr.mxu0 0.0
    %3064 = vmatpush1.msra.mxu0 0.0
    %3065 = vmatprep.subr.mxu0 0.0
    %3066 = vmatpush1.msra.mxu0 0.0
    %3067 = vmatprep.subr.mxu0 0.0
    %3068 = vmatpush1.msra.mxu0 0.0
    %3069 = vmatprep.subr.mxu0 0.0
    %3070 = vmatpush1.msra.mxu0 0.0
    %3071 = vmatprep.subr.mxu0 0.0
    %3072 = vmatpush1.msra.mxu0 0.0
    %3073 = vmatprep.subr.mxu0 0.0
    %3074 = vmatpush1.msra.mxu0 0.0
    %3075 = vmatprep.subr.mxu0 0.0
    %3076 = vmatpush1.msra.mxu0 0.0
    %3077 = vmatprep.subr.mxu0 0.0
    %3078 = vmatpush1.msra.mxu0 0.0
    %3079 = vmatprep.subr.mxu0 0.0
    %3080 = vmatpush1.msra.mxu0 0.0
    %3081 = vmatprep.subr.mxu0 0.0
    %3082 = vmatpush1.msra.mxu0 0.0
    %3083 = vmatprep.subr.mxu0 0.0
    %3084 = vmatpush1.msra.mxu0 0.0
    %3085 = vmatprep.subr.mxu0 0.0
    %3086 = vmatpush1.msra.mxu0 0.0
    %3087 = vmatprep.subr.mxu0 0.0
    %3088 = vmatpush1.msra.mxu0 0.0
    %3089 = vmatprep.subr.mxu0 0.0
    %3090 = vmatpush1.msra.mxu0 0.0
    %3091 = vmatprep.mubr.f32.mxu0 0.0
    %3092 = vmatmul.mubr.f32.gmra.mrb[0].mxu0 %v2955
    %v3093 = vpop.f32.mrb[0].mxu0
    %v3094 = vadd.f32 %v2640, %v3093
    %v3095 = vpop.f32.mrb[0].mxu0
    %3096 = vdwg.mxu0
    %v3097 = vadd.f32 %v3094, %v76
    %v3098 = vtanh.pop %v3097
    %v3099 = vmul.f32 %v3098, 0.5
    %v3100 = vadd.f32 %v3099, 0.5
    %v3101 = vmul.f32 %v3100, %v2561
    %3103 = vrot.lane.b32.xlu0 %v3098, 32
    %v3104 = vpop.permute.xlu0 %3103
    %v3106 = vmul.f32 %v3100, %v3104
    %3108 = vrot.lane.b32.xlu0 %v3106, 32
    %v3109 = vpop.permute.xlu0 %3108
    %v3111 = vadd.f32 %v3101, %v3109
    %v3112 = vtanh.pop %v3111
    %3114 = vrot.lane.b32.xlu0 %v3112, 32
    %v3115 = vpop.permute.xlu0 %3114
    %v3117 = vmul.f32 %v3100, %v3115
    %3119 = vrot.lane.b32.xlu0 %v3117, 64
    %v3120 = vpop.permute.xlu0 %3119
    %v3121 = vsel %vm208, %v3120, 0
    %3123 = vmatprep.subr.mxu0 0.0
    %3124 = vmatpush1.msra.mxu0 %v26
    %3125 = vmatprep.subr.mxu0 0.0
    %3126 = vmatpush1.msra.mxu0 %v27
    %3127 = vmatprep.subr.mxu0 0.0
    %3128 = vmatpush1.msra.mxu0 %v28
    %3129 = vmatprep.subr.mxu0 0.0
    %3130 = vmatpush1.msra.mxu0 %v29
    %3131 = vmatprep.subr.mxu0 0.0
    %3132 = vmatpush1.msra.mxu0 0.0
    %3133 = vmatprep.subr.mxu0 0.0
    %3134 = vmatpush1.msra.mxu0 0.0
    %3135 = vmatprep.subr.mxu0 0.0
    %3136 = vmatpush1.msra.mxu0 0.0
    %3137 = vmatprep.subr.mxu0 0.0
    %3138 = vmatpush1.msra.mxu0 0.0
    %3139 = vmatprep.subr.mxu0 0.0
    %3140 = vmatpush1.msra.mxu0 0.0
    %3141 = vmatprep.subr.mxu0 0.0
    %3142 = vmatpush1.msra.mxu0 0.0
    %3143 = vmatprep.subr.mxu0 0.0
    %3144 = vmatpush1.msra.mxu0 0.0
    %3145 = vmatprep.subr.mxu0 0.0
    %3146 = vmatpush1.msra.mxu0 0.0
    %3147 = vmatprep.subr.mxu0 0.0
    %3148 = vmatpush1.msra.mxu0 0.0
    %3149 = vmatprep.subr.mxu0 0.0
    %3150 = vmatpush1.msra.mxu0 0.0
    %3151 = vmatprep.subr.mxu0 0.0
    %3152 = vmatpush1.msra.mxu0 0.0
    %3153 = vmatprep.subr.mxu0 0.0
    %3154 = vmatpush1.msra.mxu0 0.0
    %3155 = vmatprep.subr.mxu0 0.0
    %3156 = vmatpush1.msra.mxu0 0.0
    %3157 = vmatprep.subr.mxu0 0.0
    %3158 = vmatpush1.msra.mxu0 0.0
    %3159 = vmatprep.subr.mxu0 0.0
    %3160 = vmatpush1.msra.mxu0 0.0
    %3161 = vmatprep.subr.mxu0 0.0
    %3162 = vmatpush1.msra.mxu0 0.0
    %3163 = vmatprep.subr.mxu0 0.0
    %3164 = vmatpush1.msra.mxu0 0.0
    %3165 = vmatprep.subr.mxu0 0.0
    %3166 = vmatpush1.msra.mxu0 0.0
    %3167 = vmatprep.subr.mxu0 0.0
    %3168 = vmatpush1.msra.mxu0 0.0
    %3169 = vmatprep.subr.mxu0 0.0
    %3170 = vmatpush1.msra.mxu0 0.0
    %3171 = vmatprep.subr.mxu0 0.0
    %3172 = vmatpush1.msra.mxu0 0.0
    %3173 = vmatprep.subr.mxu0 0.0
    %3174 = vmatpush1.msra.mxu0 0.0
    %3175 = vmatprep.subr.mxu0 0.0
    %3176 = vmatpush1.msra.mxu0 0.0
    %3177 = vmatprep.subr.mxu0 0.0
    %3178 = vmatpush1.msra.mxu0 0.0
    %3179 = vmatprep.subr.mxu0 0.0
    %3180 = vmatpush1.msra.mxu0 0.0
    %3181 = vmatprep.subr.mxu0 0.0
    %3182 = vmatpush1.msra.mxu0 0.0
    %3183 = vmatprep.subr.mxu0 0.0
    %3184 = vmatpush1.msra.mxu0 0.0
    %3185 = vmatprep.subr.mxu0 0.0
    %3186 = vmatpush1.msra.mxu0 0.0
    %3187 = vmatprep.mubr.f32.mxu0 0.0
    %3188 = vmatmul.mubr.f32.gmra.mrb[0].mxu0 %v3121
    %v3189 = vpop.f32.mrb[0].mxu0
    %v3190 = vadd.f32 0.0, %v3189
    %v3191 = vpop.f32.mrb[0].mxu0
    %3192 = vdwg.mxu0
    %3193 = vmatprep.subr.mxu0 0.0
    %3194 = vmatpush1.msra.mxu0 %v30
    %3195 = vmatprep.subr.mxu0 0.0
    %3196 = vmatpush1.msra.mxu0 %v31
    %3197 = vmatprep.subr.mxu0 0.0
    %3198 = vmatpush1.msra.mxu0 %v32
    %3199 = vmatprep.subr.mxu0 0.0
    %3200 = vmatpush1.msra.mxu0 %v33
    %3201 = vmatprep.subr.mxu0 0.0
    %3202 = vmatpush1.msra.mxu0 0.0
    %3203 = vmatprep.subr.mxu0 0.0
    %3204 = vmatpush1.msra.mxu0 0.0
    %3205 = vmatprep.subr.mxu0 0.0
    %3206 = vmatpush1.msra.mxu0 0.0
    %3207 = vmatprep.subr.mxu0 0.0
    %3208 = vmatpush1.msra.mxu0 0.0
    %3209 = vmatprep.subr.mxu0 0.0
    %3210 = vmatpush1.msra.mxu0 0.0
    %3211 = vmatprep.subr.mxu0 0.0
    %3212 = vmatpush1.msra.mxu0 0.0
    %3213 = vmatprep.subr.mxu0 0.0
    %3214 = vmatpush1.msra.mxu0 0.0
    %3215 = vmatprep.subr.mxu0 0.0
    %3216 = vmatpush1.msra.mxu0 0.0
    %3217 = vmatprep.subr.mxu0 0.0
    %3218 = vmatpush1.msra.mxu0 0.0
    %3219 = vmatprep.subr.mxu0 0.0
    %3220 = vmatpush1.msra.mxu0 0.0
    %3221 = vmatprep.subr.mxu0 0.0
    %3222 = vmatpush1.msra.mxu0 0.0
    %3223 = vmatprep.subr.mxu0 0.0
    %3224 = vmatpush1.msra.mxu0 0.0
    %3225 = vmatprep.subr.mxu0 0.0
    %3226 = vmatpush1.msra.mxu0 0.0
    %3227 = vmatprep.subr.mxu0 0.0
    %3228 = vmatpush1.msra.mxu0 0.0
    %3229 = vmatprep.subr.mxu0 0.0
    %3230 = vmatpush1.msra.mxu0 0.0
    %3231 = vmatprep.subr.mxu0 0.0
    %3232 = vmatpush1.msra.mxu0 0.0
    %3233 = vmatprep.subr.mxu0 0.0
    %3234 = vmatpush1.msra.mxu0 0.0
    %3235 = vmatprep.subr.mxu0 0.0
    %3236 = vmatpush1.msra.mxu0 0.0
    %3237 = vmatprep.subr.mxu0 0.0
    %3238 = vmatpush1.msra.mxu0 0.0
    %3239 = vmatprep.subr.mxu0 0.0
    %3240 = vmatpush1.msra.mxu0 0.0
    %3241 = vmatprep.subr.mxu0 0.0
    %3242 = vmatpush1.msra.mxu0 0.0
    %3243 = vmatprep.subr.mxu0 0.0
    %3244 = vmatpush1.msra.mxu0 0.0
    %3245 = vmatprep.subr.mxu0 0.0
    %3246 = vmatpush1.msra.mxu0 0.0
    %3247 = vmatprep.subr.mxu0 0.0
    %3248 = vmatpush1.msra.mxu0 0.0
    %3249 = vmatprep.subr.mxu0 0.0
    %3250 = vmatpush1.msra.mxu0 0.0
    %3251 = vmatprep.subr.mxu0 0.0
    %3252 = vmatpush1.msra.mxu0 0.0
    %3253 = vmatprep.subr.mxu0 0.0
    %3254 = vmatpush1.msra.mxu0 0.0
    %3255 = vmatprep.subr.mxu0 0.0
    %3256 = vmatpush1.msra.mxu0 0.0
    %3257 = vmatprep.mubr.f32.mxu0 0.0
    %3258 = vmatmul.mubr.f32.gmra.mrb[0].mxu0 %v3121
    %v3259 = vpop.f32.mrb[0].mxu0
    %v3260 = vadd.f32 %v2806, %v3259
    %v3261 = vpop.f32.mrb[0].mxu0
    %3262 = vdwg.mxu0
    %v3263 = vadd.f32 %v3260, %v71
    %v3264 = vtanh.pop %v3263
    %v3265 = vmul.f32 %v3264, 0.5
    %v3266 = vadd.f32 %v3265, 0.5
    %v3267 = vmul.f32 %v3266, %v2727
    %3269 = vrot.lane.b32.xlu0 %v3264, 32
    %v3270 = vpop.permute.xlu0 %3269
    %v3272 = vmul.f32 %v3266, %v3270
    %3274 = vrot.lane.b32.xlu0 %v3272, 32
    %v3275 = vpop.permute.xlu0 %3274
    %v3277 = vadd.f32 %v3267, %v3275
    %v3278 = vtanh.pop %v3277
    %3280 = vrot.lane.b32.xlu0 %v3278, 32
    %v3281 = vpop.permute.xlu0 %3280
    %v3283 = vmul.f32 %v3266, %v3281
    %3285 = vrot.lane.b32.xlu0 %v3283, 64
    %v3286 = vpop.permute.xlu0 %3285
    %v3287 = vsel %vm208, %v3286, 0
    %3289 = vmatprep.subr.mxu0 0.0
    %3290 = vmatpush1.msra.mxu0 %v34
    %3291 = vmatprep.subr.mxu0 0.0
    %3292 = vmatpush1.msra.mxu0 %v35
    %3293 = vmatprep.subr.mxu0 0.0
    %3294 = vmatpush1.msra.mxu0 %v36
    %3295 = vmatprep.subr.mxu0 0.0
    %3296 = vmatpush1.msra.mxu0 %v37
    %3297 = vmatprep.subr.mxu0 0.0
    %3298 = vmatpush1.msra.mxu0 0.0
    %3299 = vmatprep.subr.mxu0 0.0
    %3300 = vmatpush1.msra.mxu0 0.0
    %3301 = vmatprep.subr.mxu0 0.0
    %3302 = vmatpush1.msra.mxu0 0.0
    %3303 = vmatprep.subr.mxu0 0.0
    %3304 = vmatpush1.msra.mxu0 0.0
    %3305 = vmatprep.subr.mxu0 0.0
    %3306 = vmatpush1.msra.mxu0 0.0
    %3307 = vmatprep.subr.mxu0 0.0
    %3308 = vmatpush1.msra.mxu0 0.0
    %3309 = vmatprep.subr.mxu0 0.0
    %3310 = vmatpush1.msra.mxu0 0.0
    %3311 = vmatprep.subr.mxu0 0.0
    %3312 = vmatpush1.msra.mxu0 0.0
    %3313 = vmatprep.subr.mxu0 0.0
    %3314 = vmatpush1.msra.mxu0 0.0
    %3315 = vmatprep.subr.mxu0 0.0
    %3316 = vmatpush1.msra.mxu0 0.0
    %3317 = vmatprep.subr.mxu0 0.0
    %3318 = vmatpush1.msra.mxu0 0.0
    %3319 = vmatprep.subr.mxu0 0.0
    %3320 = vmatpush1.msra.mxu0 0.0
    %3321 = vmatprep.subr.mxu0 0.0
    %3322 = vmatpush1.msra.mxu0 0.0
    %3323 = vmatprep.subr.mxu0 0.0
    %3324 = vmatpush1.msra.mxu0 0.0
    %3325 = vmatprep.subr.mxu0 0.0
    %3326 = vmatpush1.msra.mxu0 0.0
    %3327 = vmatprep.subr.mxu0 0.0
    %3328 = vmatpush1.msra.mxu0 0.0
    %3329 = vmatprep.subr.mxu0 0.0
    %3330 = vmatpush1.msra.mxu0 0.0
    %3331 = vmatprep.subr.mxu0 0.0
    %3332 = vmatpush1.msra.mxu0 0.0
    %3333 = vmatprep.subr.mxu0 0.0
    %3334 = vmatpush1.msra.mxu0 0.0
    %3335 = vmatprep.subr.mxu0 0.0
    %3336 = vmatpush1.msra.mxu0 0.0
    %3337 = vmatprep.subr.mxu0 0.0
    %3338 = vmatpush1.msra.mxu0 0.0
    %3339 = vmatprep.subr.mxu0 0.0
    %3340 = vmatpush1.msra.mxu0 0.0
    %3341 = vmatprep.subr.mxu0 0.0
    %3342 = vmatpush1.msra.mxu0 0.0
    %3343 = vmatprep.subr.mxu0 0.0
    %3344 = vmatpush1.msra.mxu0 0.0
    %3345 = vmatprep.subr.mxu0 0.0
    %3346 = vmatpush1.msra.mxu0 0.0
    %3347 = vmatprep.subr.mxu0 0.0
    %3348 = vmatpush1.msra.mxu0 0.0
    %3349 = vmatprep.subr.mxu0 0.0
    %3350 = vmatpush1.msra.mxu0 0.0
    %3351 = vmatprep.subr.mxu0 0.0
    %3352 = vmatpush1.msra.mxu0 0.0
    %3353 = vmatprep.mubr.f32.mxu0 0.0
    %3354 = vmatmul.mubr.f32.gmra.mrb[0].mxu0 %v3287
    %v3355 = vpop.f32.mrb[0].mxu0
    %v3356 = vadd.f32 0.0, %v3355
    %v3357 = vpop.f32.mrb[0].mxu0
    %3358 = vdwg.mxu0
    %3359 = vmatprep.subr.mxu0 0.0
    %3360 = vmatpush1.msra.mxu0 %v46
    %3361 = vmatprep.subr.mxu0 0.0
    %3362 = vmatpush1.msra.mxu0 %v47
    %3363 = vmatprep.subr.mxu0 0.0
    %3364 = vmatpush1.msra.mxu0 %v48
    %3365 = vmatprep.subr.mxu0 0.0
    %3366 = vmatpush1.msra.mxu0 %v49
    %3367 = vmatprep.subr.mxu0 0.0
    %3368 = vmatpush1.msra.mxu0 0.0
    %3369 = vmatprep.subr.mxu0 0.0
    %3370 = vmatpush1.msra.mxu0 0.0
    %3371 = vmatprep.subr.mxu0 0.0
    %3372 = vmatpush1.msra.mxu0 0.0
    %3373 = vmatprep.subr.mxu0 0.0
    %3374 = vmatpush1.msra.mxu0 0.0
    %3375 = vmatprep.subr.mxu0 0.0
    %3376 = vmatpush1.msra.mxu0 0.0
    %3377 = vmatprep.subr.mxu0 0.0
    %3378 = vmatpush1.msra.mxu0 0.0
    %3379 = vmatprep.subr.mxu0 0.0
    %3380 = vmatpush1.msra.mxu0 0.0
    %3381 = vmatprep.subr.mxu0 0.0
    %3382 = vmatpush1.msra.mxu0 0.0
    %3383 = vmatprep.subr.mxu0 0.0
    %3384 = vmatpush1.msra.mxu0 0.0
    %3385 = vmatprep.subr.mxu0 0.0
    %3386 = vmatpush1.msra.mxu0 0.0
    %3387 = vmatprep.subr.mxu0 0.0
    %3388 = vmatpush1.msra.mxu0 0.0
    %3389 = vmatprep.subr.mxu0 0.0
    %3390 = vmatpush1.msra.mxu0 0.0
    %3391 = vmatprep.subr.mxu0 0.0
    %3392 = vmatpush1.msra.mxu0 0.0
    %3393 = vmatprep.subr.mxu0 0.0
    %3394 = vmatpush1.msra.mxu0 0.0
    %3395 = vmatprep.subr.mxu0 0.0
    %3396 = vmatpush1.msra.mxu0 0.0
    %3397 = vmatprep.subr.mxu0 0.0
    %3398 = vmatpush1.msra.mxu0 0.0
    %3399 = vmatprep.subr.mxu0 0.0
    %3400 = vmatpush1.msra.mxu0 0.0
    %3401 = vmatprep.subr.mxu0 0.0
    %3402 = vmatpush1.msra.mxu0 0.0
    %3403 = vmatprep.subr.mxu0 0.0
    %3404 = vmatpush1.msra.mxu0 0.0
    %3405 = vmatprep.subr.mxu0 0.0
    %3406 = vmatpush1.msra.mxu0 0.0
    %3407 = vmatprep.subr.mxu0 0.0
    %3408 = vmatpush1.msra.mxu0 0.0
    %3409 = vmatprep.subr.mxu0 0.0
    %3410 = vmatpush1.msra.mxu0 0.0
    %3411 = vmatprep.subr.mxu0 0.0
    %3412 = vmatpush1.msra.mxu0 0.0
    %3413 = vmatprep.subr.mxu0 0.0
    %3414 = vmatpush1.msra.mxu0 0.0
    %3415 = vmatprep.subr.mxu0 0.0
    %3416 = vmatpush1.msra.mxu0 0.0
    %3417 = vmatprep.subr.mxu0 0.0
    %3418 = vmatpush1.msra.mxu0 0.0
    %3419 = vmatprep.subr.mxu0 0.0
    %3420 = vmatpush1.msra.mxu0 0.0
    %3421 = vmatprep.subr.mxu0 0.0
    %3422 = vmatpush1.msra.mxu0 0.0
    %3423 = vmatprep.mubr.f32.mxu0 0.0
    %3424 = vmatmul.mubr.f32.gmra.mrb[0].mxu0 %v3287
    %v3425 = vpop.f32.mrb[0].mxu0
    %v3426 = vadd.f32 %v81, %v3425
    %v3427 = vpop.f32.mrb[0].mxu0
    %3428 = vdwg.mxu0
    %v3429 = vtanh.pop %v3426
    %v3431 = vsel %vm2396, %v3429, 0
    %3433 = vmatprep.subr.mxu0 0.0
    %3434 = vmatpush1.msra.mxu0 %v50
    %3435 = vmatprep.subr.mxu0 0.0
    %3436 = vmatpush1.msra.mxu0 %v51
    %3437 = vmatprep.subr.mxu0 0.0
    %3438 = vmatpush1.msra.mxu0 %v52
    %3439 = vmatprep.subr.mxu0 0.0
    %3440 = vmatpush1.msra.mxu0 %v53
    %3441 = vmatprep.subr.mxu0 0.0
    %3442 = vmatpush1.msra.mxu0 %v54
    %3443 = vmatprep.subr.mxu0 0.0
    %3444 = vmatpush1.msra.mxu0 %v55
    %3445 = vmatprep.subr.mxu0 0.0
    %3446 = vmatpush1.msra.mxu0 %v56
    %3447 = vmatprep.subr.mxu0 0.0
    %3448 = vmatpush1.msra.mxu0 %v57
    %3449 = vmatprep.subr.mxu0 0.0
    %3450 = vmatpush1.msra.mxu0 0.0
    %3451 = vmatprep.subr.mxu0 0.0
    %3452 = vmatpush1.msra.mxu0 0.0
    %3453 = vmatprep.subr.mxu0 0.0
    %3454 = vmatpush1.msra.mxu0 0.0
    %3455 = vmatprep.subr.mxu0 0.0
    %3456 = vmatpush1.msra.mxu0 0.0
    %3457 = vmatprep.subr.mxu0 0.0
    %3458 = vmatpush1.msra.mxu0 0.0
    %3459 = vmatprep.subr.mxu0 0.0
    %3460 = vmatpush1.msra.mxu0 0.0
    %3461 = vmatprep.subr.mxu0 0.0
    %3462 = vmatpush1.msra.mxu0 0.0
    %3463 = vmatprep.subr.mxu0 0.0
    %3464 = vmatpush1.msra.mxu0 0.0
    %3465 = vmatprep.subr.mxu0 0.0
    %3466 = vmatpush1.msra.mxu0 0.0
    %3467 = vmatprep.subr.mxu0 0.0
    %3468 = vmatpush1.msra.mxu0 0.0
    %3469 = vmatprep.subr.mxu0 0.0
    %3470 = vmatpush1.msra.mxu0 0.0
    %3471 = vmatprep.subr.mxu0 0.0
    %3472 = vmatpush1.msra.mxu0 0.0
    %3473 = vmatprep.subr.mxu0 0.0
    %3474 = vmatpush1.msra.mxu0 0.0
    %3475 = vmatprep.subr.mxu0 0.0
    %3476 = vmatpush1.msra.mxu0 0.0
    %3477 = vmatprep.subr.mxu0 0.0
    %3478 = vmatpush1.msra.mxu0 0.0
    %3479 = vmatprep.subr.mxu0 0.0
    %3480 = vmatpush1.msra.mxu0 0.0
    %3481 = vmatprep.subr.mxu0 0.0
    %3482 = vmatpush1.msra.mxu0 0.0
    %3483 = vmatprep.subr.mxu0 0.0
    %3484 = vmatpush1.msra.mxu0 0.0
    %3485 = vmatprep.subr.mxu0 0.0
    %3486 = vmatpush1.msra.mxu0 0.0
    %3487 = vmatprep.subr.mxu0 0.0
    %3488 = vmatpush1.msra.mxu0 0.0
    %3489 = vmatprep.subr.mxu0 0.0
    %3490 = vmatpush1.msra.mxu0 0.0
    %3491 = vmatprep.subr.mxu0 0.0
    %3492 = vmatpush1.msra.mxu0 0.0
    %3493 = vmatprep.subr.mxu0 0.0
    %3494 = vmatpush1.msra.mxu0 0.0
    %3495 = vmatprep.subr.mxu0 0.0
    %3496 = vmatpush1.msra.mxu0 0.0
    %3497 = vmatprep.mubr.f32.mxu0 0.0
    %3498 = vmatmul.mubr.f32.gmra.mrb[0].mxu0 %v3431
    %v3499 = vpop.f32.mrb[0].mxu0
    %v3500 = vadd.f32 %v86, %v3499
    %v3501 = vpop.f32.mrb[0].mxu0
    %3502 = vdwg.mxu0
    %v3503 = vtanh.pop %v3500
    %v3505 = vsel %vm2396, %v3503, 0
    %3507 = vmatprep.subr.mxu0 0.0
    %3508 = vmatpush1.msra.mxu0 %v58
    %3509 = vmatprep.subr.mxu0 0.0
    %3510 = vmatpush1.msra.mxu0 %v59
    %3511 = vmatprep.subr.mxu0 0.0
    %3512 = vmatpush1.msra.mxu0 %v60
    %3513 = vmatprep.subr.mxu0 0.0
    %3514 = vmatpush1.msra.mxu0 %v61
    %3515 = vmatprep.subr.mxu0 0.0
    %3516 = vmatpush1.msra.mxu0 %v62
    %3517 = vmatprep.subr.mxu0 0.0
    %3518 = vmatpush1.msra.mxu0 %v63
    %3519 = vmatprep.subr.mxu0 0.0
    %3520 = vmatpush1.msra.mxu0 %v64
    %3521 = vmatprep.subr.mxu0 0.0
    %3522 = vmatpush1.msra.mxu0 %v65
    %3523 = vmatprep.subr.mxu0 0.0
    %3524 = vmatpush1.msra.mxu0 0.0
    %3525 = vmatprep.subr.mxu0 0.0
    %3526 = vmatpush1.msra.mxu0 0.0
    %3527 = vmatprep.subr.mxu0 0.0
    %3528 = vmatpush1.msra.mxu0 0.0
    %3529 = vmatprep.subr.mxu0 0.0
    %3530 = vmatpush1.msra.mxu0 0.0
    %3531 = vmatprep.subr.mxu0 0.0
    %3532 = vmatpush1.msra.mxu0 0.0
    %3533 = vmatprep.subr.mxu0 0.0
    %3534 = vmatpush1.msra.mxu0 0.0
    %3535 = vmatprep.subr.mxu0 0.0
    %3536 = vmatpush1.msra.mxu0 0.0
    %3537 = vmatprep.subr.mxu0 0.0
    %3538 = vmatpush1.msra.mxu0 0.0
    %3539 = vmatprep.subr.mxu0 0.0
    %3540 = vmatpush1.msra.mxu0 0.0
    %3541 = vmatprep.subr.mxu0 0.0
    %3542 = vmatpush1.msra.mxu0 0.0
    %3543 = vmatprep.subr.mxu0 0.0
    %3544 = vmatpush1.msra.mxu0 0.0
    %3545 = vmatprep.subr.mxu0 0.0
    %3546 = vmatpush1.msra.mxu0 0.0
    %3547 = vmatprep.subr.mxu0 0.0
    %3548 = vmatpush1.msra.mxu0 0.0
    %3549 = vmatprep.subr.mxu0 0.0
    %3550 = vmatpush1.msra.mxu0 0.0
    %3551 = vmatprep.subr.mxu0 0.0
    %3552 = vmatpush1.msra.mxu0 0.0
    %3553 = vmatprep.subr.mxu0 0.0
    %3554 = vmatpush1.msra.mxu0 0.0
    %3555 = vmatprep.subr.mxu0 0.0
    %3556 = vmatpush1.msra.mxu0 0.0
    %3557 = vmatprep.subr.mxu0 0.0
    %3558 = vmatpush1.msra.mxu0 0.0
    %3559 = vmatprep.subr.mxu0 0.0
    %3560 = vmatpush1.msra.mxu0 0.0
    %3561 = vmatprep.subr.mxu0 0.0
    %3562 = vmatpush1.msra.mxu0 0.0
    %3563 = vmatprep.subr.mxu0 0.0
    %3564 = vmatpush1.msra.mxu0 0.0
    %3565 = vmatprep.subr.mxu0 0.0
    %3566 = vmatpush1.msra.mxu0 0.0
    %3567 = vmatprep.subr.mxu0 0.0
    %3568 = vmatpush1.msra.mxu0 0.0
    %3569 = vmatprep.subr.mxu0 0.0
    %3570 = vmatpush1.msra.mxu0 0.0
    %3571 = vmatprep.mubr.f32.mxu0 0.0
    %3572 = vmatmul.mubr.f32.gmra.mrb[0].mxu0 %v3505
    %v3573 = vpop.f32.mrb[0].mxu0
    %v3574 = vadd.f32 %v91, %v3573
    %v3575 = vpop.f32.mrb[0].mxu0
    %3576 = vdwg.mxu0
    %3577 = vmatprep.subr.mxu0 0.0
    %3578 = vmatpush1.msra.mxu0 %v38
    %3579 = vmatprep.subr.mxu0 0.0
    %3580 = vmatpush1.msra.mxu0 %v39
    %3581 = vmatprep.subr.mxu0 0.0
    %3582 = vmatpush1.msra.mxu0 %v40
    %3583 = vmatprep.subr.mxu0 0.0
    %3584 = vmatpush1.msra.mxu0 %v41
    %3585 = vmatprep.subr.mxu0 0.0
    %3586 = vmatpush1.msra.mxu0 %v42
    %3587 = vmatprep.subr.mxu0 0.0
    %3588 = vmatpush1.msra.mxu0 %v43
    %3589 = vmatprep.subr.mxu0 0.0
    %3590 = vmatpush1.msra.mxu0 %v44
    %3591 = vmatprep.subr.mxu0 0.0
    %3592 = vmatpush1.msra.mxu0 %v45
    %3593 = vmatprep.subr.mxu0 0.0
    %3594 = vmatpush1.msra.mxu0 0.0
    %3595 = vmatprep.subr.mxu0 0.0
    %3596 = vmatpush1.msra.mxu0 0.0
    %3597 = vmatprep.subr.mxu0 0.0
    %3598 = vmatpush1.msra.mxu0 0.0
    %3599 = vmatprep.subr.mxu0 0.0
    %3600 = vmatpush1.msra.mxu0 0.0
    %3601 = vmatprep.subr.mxu0 0.0
    %3602 = vmatpush1.msra.mxu0 0.0
    %3603 = vmatprep.subr.mxu0 0.0
    %3604 = vmatpush1.msra.mxu0 0.0
    %3605 = vmatprep.subr.mxu0 0.0
    %3606 = vmatpush1.msra.mxu0 0.0
    %3607 = vmatprep.subr.mxu0 0.0
    %3608 = vmatpush1.msra.mxu0 0.0
    %3609 = vmatprep.subr.mxu0 0.0
    %3610 = vmatpush1.msra.mxu0 0.0
    %3611 = vmatprep.subr.mxu0 0.0
    %3612 = vmatpush1.msra.mxu0 0.0
    %3613 = vmatprep.subr.mxu0 0.0
    %3614 = vmatpush1.msra.mxu0 0.0
    %3615 = vmatprep.subr.mxu0 0.0
    %3616 = vmatpush1.msra.mxu0 0.0
    %3617 = vmatprep.subr.mxu0 0.0
    %3618 = vmatpush1.msra.mxu0 0.0
    %3619 = vmatprep.subr.mxu0 0.0
    %3620 = vmatpush1.msra.mxu0 0.0
    %3621 = vmatprep.subr.mxu0 0.0
    %3622 = vmatpush1.msra.mxu0 0.0
    %3623 = vmatprep.subr.mxu0 0.0
    %3624 = vmatpush1.msra.mxu0 0.0
    %3625 = vmatprep.subr.mxu0 0.0
    %3626 = vmatpush1.msra.mxu0 0.0
    %3627 = vmatprep.subr.mxu0 0.0
    %3628 = vmatpush1.msra.mxu0 0.0
    %3629 = vmatprep.subr.mxu0 0.0
    %3630 = vmatpush1.msra.mxu0 0.0
    %3631 = vmatprep.subr.mxu0 0.0
    %3632 = vmatpush1.msra.mxu0 0.0
    %3633 = vmatprep.subr.mxu0 0.0
    %3634 = vmatpush1.msra.mxu0 0.0
    %3635 = vmatprep.subr.mxu0 0.0
    %3636 = vmatpush1.msra.mxu0 0.0
    %3637 = vmatprep.subr.mxu0 0.0
    %3638 = vmatpush1.msra.mxu0 0.0
    %3639 = vmatprep.subr.mxu0 0.0
    %3640 = vmatpush1.msra.mxu0 0.0
    %3641 = vmatprep.mubr.f32.mxu0 0.0
    %3642 = vmatmul.mubr.f32.gmra.mrb[0].mxu0 %v3505
    %v3643 = vpop.f32.mrb[0].mxu0
    %v3644 = vadd.f32 %v3190, %v3643
    %v3645 = vpop.f32.mrb[0].mxu0
    %3646 = vdwg.mxu0
    %v3647 = vadd.f32 %v3644, %v76
    %v3648 = vtanh.pop %v3647
    %v3649 = vmul.f32 %v3648, 0.5
    %v3650 = vadd.f32 %v3649, 0.5
    %v3651 = vmul.f32 %v3650, %v3111
    %3653 = vrot.lane.b32.xlu0 %v3648, 32
    %v3654 = vpop.permute.xlu0 %3653
    %v3656 = vmul.f32 %v3650, %v3654
    %3658 = vrot.lane.b32.xlu0 %v3656, 32
    %v3659 = vpop.permute.xlu0 %3658
    %v3661 = vadd.f32 %v3651, %v3659
    %v3662 = vtanh.pop %v3661
    %3664 = vrot.lane.b32.xlu0 %v3662, 32
    %v3665 = vpop.permute.xlu0 %3664
    %v3667 = vmul.f32 %v3650, %v3665
    %3669 = vrot.lane.b32.xlu0 %v3667, 64
    %v3670 = vpop.permute.xlu0 %3669
    %v3671 = vsel %vm208, %v3670, 0
    %3673 = vmatprep.subr.mxu0 0.0
    %3674 = vmatpush1.msra.mxu0 %v26
    %3675 = vmatprep.subr.mxu0 0.0
    %3676 = vmatpush1.msra.mxu0 %v27
    %3677 = vmatprep.subr.mxu0 0.0
    %3678 = vmatpush1.msra.mxu0 %v28
    %3679 = vmatprep.subr.mxu0 0.0
    %3680 = vmatpush1.msra.mxu0 %v29
    %3681 = vmatprep.subr.mxu0 0.0
    %3682 = vmatpush1.msra.mxu0 0.0
    %3683 = vmatprep.subr.mxu0 0.0
    %3684 = vmatpush1.msra.mxu0 0.0
    %3685 = vmatprep.subr.mxu0 0.0
    %3686 = vmatpush1.msra.mxu0 0.0
    %3687 = vmatprep.subr.mxu0 0.0
    %3688 = vmatpush1.msra.mxu0 0.0
    %3689 = vmatprep.subr.mxu0 0.0
    %3690 = vmatpush1.msra.mxu0 0.0
    %3691 = vmatprep.subr.mxu0 0.0
    %3692 = vmatpush1.msra.mxu0 0.0
    %3693 = vmatprep.subr.mxu0 0.0
    %3694 = vmatpush1.msra.mxu0 0.0
    %3695 = vmatprep.subr.mxu0 0.0
    %3696 = vmatpush1.msra.mxu0 0.0
    %3697 = vmatprep.subr.mxu0 0.0
    %3698 = vmatpush1.msra.mxu0 0.0
    %3699 = vmatprep.subr.mxu0 0.0
    %3700 = vmatpush1.msra.mxu0 0.0
    %3701 = vmatprep.subr.mxu0 0.0
    %3702 = vmatpush1.msra.mxu0 0.0
    %3703 = vmatprep.subr.mxu0 0.0
    %3704 = vmatpush1.msra.mxu0 0.0
    %3705 = vmatprep.subr.mxu0 0.0
    %3706 = vmatpush1.msra.mxu0 0.0
    %3707 = vmatprep.subr.mxu0 0.0
    %3708 = vmatpush1.msra.mxu0 0.0
    %3709 = vmatprep.subr.mxu0 0.0
    %3710 = vmatpush1.msra.mxu0 0.0
    %3711 = vmatprep.subr.mxu0 0.0
    %3712 = vmatpush1.msra.mxu0 0.0
    %3713 = vmatprep.subr.mxu0 0.0
    %3714 = vmatpush1.msra.mxu0 0.0
    %3715 = vmatprep.subr.mxu0 0.0
    %3716 = vmatpush1.msra.mxu0 0.0
    %3717 = vmatprep.subr.mxu0 0.0
    %3718 = vmatpush1.msra.mxu0 0.0
    %3719 = vmatprep.subr.mxu0 0.0
    %3720 = vmatpush1.msra.mxu0 0.0
    %3721 = vmatprep.subr.mxu0 0.0
    %3722 = vmatpush1.msra.mxu0 0.0
    %3723 = vmatprep.subr.mxu0 0.0
    %3724 = vmatpush1.msra.mxu0 0.0
    %3725 = vmatprep.subr.mxu0 0.0
    %3726 = vmatpush1.msra.mxu0 0.0
    %3727 = vmatprep.subr.mxu0 0.0
    %3728 = vmatpush1.msra.mxu0 0.0
    %3729 = vmatprep.subr.mxu0 0.0
    %3730 = vmatpush1.msra.mxu0 0.0
    %3731 = vmatprep.subr.mxu0 0.0
    %3732 = vmatpush1.msra.mxu0 0.0
    %3733 = vmatprep.subr.mxu0 0.0
    %3734 = vmatpush1.msra.mxu0 0.0
    %3735 = vmatprep.subr.mxu0 0.0
    %3736 = vmatpush1.msra.mxu0 0.0
    %3737 = vmatprep.mubr.f32.mxu0 0.0
    %3738 = vmatmul.mubr.f32.gmra.mrb[0].mxu0 %v3671
    %v3739 = vpop.f32.mrb[0].mxu0
    %v3740 = vadd.f32 0.0, %v3739
    %v3741 = vpop.f32.mrb[0].mxu0
    %3742 = vdwg.mxu0
    %3743 = vmatprep.subr.mxu0 0.0
    %3744 = vmatpush1.msra.mxu0 %v30
    %3745 = vmatprep.subr.mxu0 0.0
    %3746 = vmatpush1.msra.mxu0 %v31
    %3747 = vmatprep.subr.mxu0 0.0
    %3748 = vmatpush1.msra.mxu0 %v32
    %3749 = vmatprep.subr.mxu0 0.0
    %3750 = vmatpush1.msra.mxu0 %v33
    %3751 = vmatprep.subr.mxu0 0.0
    %3752 = vmatpush1.msra.mxu0 0.0
    %3753 = vmatprep.subr.mxu0 0.0
    %3754 = vmatpush1.msra.mxu0 0.0
    %3755 = vmatprep.subr.mxu0 0.0
    %3756 = vmatpush1.msra.mxu0 0.0
    %3757 = vmatprep.subr.mxu0 0.0
    %3758 = vmatpush1.msra.mxu0 0.0
    %3759 = vmatprep.subr.mxu0 0.0
    %3760 = vmatpush1.msra.mxu0 0.0
    %3761 = vmatprep.subr.mxu0 0.0
    %3762 = vmatpush1.msra.mxu0 0.0
    %3763 = vmatprep.subr.mxu0 0.0
    %3764 = vmatpush1.msra.mxu0 0.0
    %3765 = vmatprep.subr.mxu0 0.0
    %3766 = vmatpush1.msra.mxu0 0.0
    %3767 = vmatprep.subr.mxu0 0.0
    %3768 = vmatpush1.msra.mxu0 0.0
    %3769 = vmatprep.subr.mxu0 0.0
    %3770 = vmatpush1.msra.mxu0 0.0
    %3771 = vmatprep.subr.mxu0 0.0
    %3772 = vmatpush1.msra.mxu0 0.0
    %3773 = vmatprep.subr.mxu0 0.0
    %3774 = vmatpush1.msra.mxu0 0.0
    %3775 = vmatprep.subr.mxu0 0.0
    %3776 = vmatpush1.msra.mxu0 0.0
    %3777 = vmatprep.subr.mxu0 0.0
    %3778 = vmatpush1.msra.mxu0 0.0
    %3779 = vmatprep.subr.mxu0 0.0
    %3780 = vmatpush1.msra.mxu0 0.0
    %3781 = vmatprep.subr.mxu0 0.0
    %3782 = vmatpush1.msra.mxu0 0.0
    %3783 = vmatprep.subr.mxu0 0.0
    %3784 = vmatpush1.msra.mxu0 0.0
    %3785 = vmatprep.subr.mxu0 0.0
    %3786 = vmatpush1.msra.mxu0 0.0
    %3787 = vmatprep.subr.mxu0 0.0
    %3788 = vmatpush1.msra.mxu0 0.0
    %3789 = vmatprep.subr.mxu0 0.0
    %3790 = vmatpush1.msra.mxu0 0.0
    %3791 = vmatprep.subr.mxu0 0.0
    %3792 = vmatpush1.msra.mxu0 0.0
    %3793 = vmatprep.subr.mxu0 0.0
    %3794 = vmatpush1.msra.mxu0 0.0
    %3795 = vmatprep.subr.mxu0 0.0
    %3796 = vmatpush1.msra.mxu0 0.0
    %3797 = vmatprep.subr.mxu0 0.0
    %3798 = vmatpush1.msra.mxu0 0.0
    %3799 = vmatprep.subr.mxu0 0.0
    %3800 = vmatpush1.msra.mxu0 0.0
    %3801 = vmatprep.subr.mxu0 0.0
    %3802 = vmatpush1.msra.mxu0 0.0
    %3803 = vmatprep.subr.mxu0 0.0
    %3804 = vmatpush1.msra.mxu0 0.0
    %3805 = vmatprep.subr.mxu0 0.0
    %3806 = vmatpush1.msra.mxu0 0.0
    %3807 = vmatprep.mubr.f32.mxu0 0.0
    %3808 = vmatmul.mubr.f32.gmra.mrb[0].mxu0 %v3671
    %v3809 = vpop.f32.mrb[0].mxu0
    %v3810 = vadd.f32 %v3356, %v3809
    %v3811 = vpop.f32.mrb[0].mxu0
    %3812 = vdwg.mxu0
    %v3813 = vadd.f32 %v3810, %v71
    %v3814 = vtanh.pop %v3813
    %v3815 = vmul.f32 %v3814, 0.5
    %v3816 = vadd.f32 %v3815, 0.5
    %v3817 = vmul.f32 %v3816, %v3277
    %3819 = vrot.lane.b32.xlu0 %v3814, 32
    %v3820 = vpop.permute.xlu0 %3819
    %v3822 = vmul.f32 %v3816, %v3820
    %3824 = vrot.lane.b32.xlu0 %v3822, 32
    %v3825 = vpop.permute.xlu0 %3824
    %v3827 = vadd.f32 %v3817, %v3825
    %v3828 = vtanh.pop %v3827
    %3830 = vrot.lane.b32.xlu0 %v3828, 32
    %v3831 = vpop.permute.xlu0 %3830
    %v3833 = vmul.f32 %v3816, %v3831
    %3835 = vrot.lane.b32.xlu0 %v3833, 64
    %v3836 = vpop.permute.xlu0 %3835
    %v3837 = vsel %vm208, %v3836, 0
    %3839 = vmatprep.subr.mxu0 0.0
    %3840 = vmatpush1.msra.mxu0 %v34
    %3841 = vmatprep.subr.mxu0 0.0
    %3842 = vmatpush1.msra.mxu0 %v35
    %3843 = vmatprep.subr.mxu0 0.0
    %3844 = vmatpush1.msra.mxu0 %v36
    %3845 = vmatprep.subr.mxu0 0.0
    %3846 = vmatpush1.msra.mxu0 %v37
    %3847 = vmatprep.subr.mxu0 0.0
    %3848 = vmatpush1.msra.mxu0 0.0
    %3849 = vmatprep.subr.mxu0 0.0
    %3850 = vmatpush1.msra.mxu0 0.0
    %3851 = vmatprep.subr.mxu0 0.0
    %3852 = vmatpush1.msra.mxu0 0.0
    %3853 = vmatprep.subr.mxu0 0.0
    %3854 = vmatpush1.msra.mxu0 0.0
    %3855 = vmatprep.subr.mxu0 0.0
    %3856 = vmatpush1.msra.mxu0 0.0
    %3857 = vmatprep.subr.mxu0 0.0
    %3858 = vmatpush1.msra.mxu0 0.0
    %3859 = vmatprep.subr.mxu0 0.0
    %3860 = vmatpush1.msra.mxu0 0.0
    %3861 = vmatprep.subr.mxu0 0.0
    %3862 = vmatpush1.msra.mxu0 0.0
    %3863 = vmatprep.subr.mxu0 0.0
    %3864 = vmatpush1.msra.mxu0 0.0
    %3865 = vmatprep.subr.mxu0 0.0
    %3866 = vmatpush1.msra.mxu0 0.0
    %3867 = vmatprep.subr.mxu0 0.0
    %3868 = vmatpush1.msra.mxu0 0.0
    %3869 = vmatprep.subr.mxu0 0.0
    %3870 = vmatpush1.msra.mxu0 0.0
    %3871 = vmatprep.subr.mxu0 0.0
    %3872 = vmatpush1.msra.mxu0 0.0
    %3873 = vmatprep.subr.mxu0 0.0
    %3874 = vmatpush1.msra.mxu0 0.0
    %3875 = vmatprep.subr.mxu0 0.0
    %3876 = vmatpush1.msra.mxu0 0.0
    %3877 = vmatprep.subr.mxu0 0.0
    %3878 = vmatpush1.msra.mxu0 0.0
    %3879 = vmatprep.subr.mxu0 0.0
    %3880 = vmatpush1.msra.mxu0 0.0
    %3881 = vmatprep.subr.mxu0 0.0
    %3882 = vmatpush1.msra.mxu0 0.0
    %3883 = vmatprep.subr.mxu0 0.0
    %3884 = vmatpush1.msra.mxu0 0.0
    %3885 = vmatprep.subr.mxu0 0.0
    %3886 = vmatpush1.msra.mxu0 0.0
    %3887 = vmatprep.subr.mxu0 0.0
    %3888 = vmatpush1.msra.mxu0 0.0
    %3889 = vmatprep.subr.mxu0 0.0
    %3890 = vmatpush1.msra.mxu0 0.0
    %3891 = vmatprep.subr.mxu0 0.0
    %3892 = vmatpush1.msra.mxu0 0.0
    %3893 = vmatprep.subr.mxu0 0.0
    %3894 = vmatpush1.msra.mxu0 0.0
    %3895 = vmatprep.subr.mxu0 0.0
    %3896 = vmatpush1.msra.mxu0 0.0
    %3897 = vmatprep.subr.mxu0 0.0
    %3898 = vmatpush1.msra.mxu0 0.0
    %3899 = vmatprep.subr.mxu0 0.0
    %3900 = vmatpush1.msra.mxu0 0.0
    %3901 = vmatprep.subr.mxu0 0.0
    %3902 = vmatpush1.msra.mxu0 0.0
    %3903 = vmatprep.mubr.f32.mxu0 0.0
    %3904 = vmatmul.mubr.f32.gmra.mrb[0].mxu0 %v3837
    %v3905 = vpop.f32.mrb[0].mxu0
    %v3906 = vadd.f32 0.0, %v3905
    %v3907 = vpop.f32.mrb[0].mxu0
    %3908 = vdwg.mxu0
    %3909 = vmatprep.subr.mxu0 0.0
    %3910 = vmatpush1.msra.mxu0 %v46
    %3911 = vmatprep.subr.mxu0 0.0
    %3912 = vmatpush1.msra.mxu0 %v47
    %3913 = vmatprep.subr.mxu0 0.0
    %3914 = vmatpush1.msra.mxu0 %v48
    %3915 = vmatprep.subr.mxu0 0.0
    %3916 = vmatpush1.msra.mxu0 %v49
    %3917 = vmatprep.subr.mxu0 0.0
    %3918 = vmatpush1.msra.mxu0 0.0
    %3919 = vmatprep.subr.mxu0 0.0
    %3920 = vmatpush1.msra.mxu0 0.0
    %3921 = vmatprep.subr.mxu0 0.0
    %3922 = vmatpush1.msra.mxu0 0.0
    %3923 = vmatprep.subr.mxu0 0.0
    %3924 = vmatpush1.msra.mxu0 0.0
    %3925 = vmatprep.subr.mxu0 0.0
    %3926 = vmatpush1.msra.mxu0 0.0
    %3927 = vmatprep.subr.mxu0 0.0
    %3928 = vmatpush1.msra.mxu0 0.0
    %3929 = vmatprep.subr.mxu0 0.0
    %3930 = vmatpush1.msra.mxu0 0.0
    %3931 = vmatprep.subr.mxu0 0.0
    %3932 = vmatpush1.msra.mxu0 0.0
    %3933 = vmatprep.subr.mxu0 0.0
    %3934 = vmatpush1.msra.mxu0 0.0
    %3935 = vmatprep.subr.mxu0 0.0
    %3936 = vmatpush1.msra.mxu0 0.0
    %3937 = vmatprep.subr.mxu0 0.0
    %3938 = vmatpush1.msra.mxu0 0.0
    %3939 = vmatprep.subr.mxu0 0.0
    %3940 = vmatpush1.msra.mxu0 0.0
    %3941 = vmatprep.subr.mxu0 0.0
    %3942 = vmatpush1.msra.mxu0 0.0
    %3943 = vmatprep.subr.mxu0 0.0
    %3944 = vmatpush1.msra.mxu0 0.0
    %3945 = vmatprep.subr.mxu0 0.0
    %3946 = vmatpush1.msra.mxu0 0.0
    %3947 = vmatprep.subr.mxu0 0.0
    %3948 = vmatpush1.msra.mxu0 0.0
    %3949 = vmatprep.subr.mxu0 0.0
    %3950 = vmatpush1.msra.mxu0 0.0
    %3951 = vmatprep.subr.mxu0 0.0
    %3952 = vmatpush1.msra.mxu0 0.0
    %3953 = vmatprep.subr.mxu0 0.0
    %3954 = vmatpush1.msra.mxu0 0.0
    %3955 = vmatprep.subr.mxu0 0.0
    %3956 = vmatpush1.msra.mxu0 0.0
    %3957 = vmatprep.subr.mxu0 0.0
    %3958 = vmatpush1.msra.mxu0 0.0
    %3959 = vmatprep.subr.mxu0 0.0
    %3960 = vmatpush1.msra.mxu0 0.0
    %3961 = vmatprep.subr.mxu0 0.0
    %3962 = vmatpush1.msra.mxu0 0.0
    %3963 = vmatprep.subr.mxu0 0.0
    %3964 = vmatpush1.msra.mxu0 0.0
    %3965 = vmatprep.subr.mxu0 0.0
    %3966 = vmatpush1.msra.mxu0 0.0
    %3967 = vmatprep.subr.mxu0 0.0
    %3968 = vmatpush1.msra.mxu0 0.0
    %3969 = vmatprep.subr.mxu0 0.0
    %3970 = vmatpush1.msra.mxu0 0.0
    %3971 = vmatprep.subr.mxu0 0.0
    %3972 = vmatpush1.msra.mxu0 0.0
    %3973 = vmatprep.mubr.f32.mxu0 0.0
    %3974 = vmatmul.mubr.f32.gmra.mrb[0].mxu0 %v3837
    %v3975 = vpop.f32.mrb[0].mxu0
    %v3976 = vadd.f32 %v81, %v3975
    %v3977 = vpop.f32.mrb[0].mxu0
    %3978 = vdwg.mxu0
    %v3979 = vtanh.pop %v3976
    %v3981 = vsel %vm2396, %v3979, 0
    %3983 = vmatprep.subr.mxu0 0.0
    %3984 = vmatpush1.msra.mxu0 %v50
    %3985 = vmatprep.subr.mxu0 0.0
    %3986 = vmatpush1.msra.mxu0 %v51
    %3987 = vmatprep.subr.mxu0 0.0
    %3988 = vmatpush1.msra.mxu0 %v52
    %3989 = vmatprep.subr.mxu0 0.0
    %3990 = vmatpush1.msra.mxu0 %v53
    %3991 = vmatprep.subr.mxu0 0.0
    %3992 = vmatpush1.msra.mxu0 %v54
    %3993 = vmatprep.subr.mxu0 0.0
    %3994 = vmatpush1.msra.mxu0 %v55
    %3995 = vmatprep.subr.mxu0 0.0
    %3996 = vmatpush1.msra.mxu0 %v56
    %3997 = vmatprep.subr.mxu0 0.0
    %3998 = vmatpush1.msra.mxu0 %v57
    %3999 = vmatprep.subr.mxu0 0.0
    %4000 = vmatpush1.msra.mxu0 0.0
    %4001 = vmatprep.subr.mxu0 0.0
    %4002 = vmatpush1.msra.mxu0 0.0
    %4003 = vmatprep.subr.mxu0 0.0
    %4004 = vmatpush1.msra.mxu0 0.0
    %4005 = vmatprep.subr.mxu0 0.0
    %4006 = vmatpush1.msra.mxu0 0.0
    %4007 = vmatprep.subr.mxu0 0.0
    %4008 = vmatpush1.msra.mxu0 0.0
    %4009 = vmatprep.subr.mxu0 0.0
    %4010 = vmatpush1.msra.mxu0 0.0
    %4011 = vmatprep.subr.mxu0 0.0
    %4012 = vmatpush1.msra.mxu0 0.0
    %4013 = vmatprep.subr.mxu0 0.0
    %4014 = vmatpush1.msra.mxu0 0.0
    %4015 = vmatprep.subr.mxu0 0.0
    %4016 = vmatpush1.msra.mxu0 0.0
    %4017 = vmatprep.subr.mxu0 0.0
    %4018 = vmatpush1.msra.mxu0 0.0
    %4019 = vmatprep.subr.mxu0 0.0
    %4020 = vmatpush1.msra.mxu0 0.0
    %4021 = vmatprep.subr.mxu0 0.0
    %4022 = vmatpush1.msra.mxu0 0.0
    %4023 = vmatprep.subr.mxu0 0.0
    %4024 = vmatpush1.msra.mxu0 0.0
    %4025 = vmatprep.subr.mxu0 0.0
    %4026 = vmatpush1.msra.mxu0 0.0
    %4027 = vmatprep.subr.mxu0 0.0
    %4028 = vmatpush1.msra.mxu0 0.0
    %4029 = vmatprep.subr.mxu0 0.0
    %4030 = vmatpush1.msra.mxu0 0.0
    %4031 = vmatprep.subr.mxu0 0.0
    %4032 = vmatpush1.msra.mxu0 0.0
    %4033 = vmatprep.subr.mxu0 0.0
    %4034 = vmatpush1.msra.mxu0 0.0
    %4035 = vmatprep.subr.mxu0 0.0
    %4036 = vmatpush1.msra.mxu0 0.0
    %4037 = vmatprep.subr.mxu0 0.0
    %4038 = vmatpush1.msra.mxu0 0.0
    %4039 = vmatprep.subr.mxu0 0.0
    %4040 = vmatpush1.msra.mxu0 0.0
    %4041 = vmatprep.subr.mxu0 0.0
    %4042 = vmatpush1.msra.mxu0 0.0
    %4043 = vmatprep.subr.mxu0 0.0
    %4044 = vmatpush1.msra.mxu0 0.0
    %4045 = vmatprep.subr.mxu0 0.0
    %4046 = vmatpush1.msra.mxu0 0.0
    %4047 = vmatprep.mubr.f32.mxu0 0.0
    %4048 = vmatmul.mubr.f32.gmra.mrb[0].mxu0 %v3981
    %v4049 = vpop.f32.mrb[0].mxu0
    %v4050 = vadd.f32 %v86, %v4049
    %v4051 = vpop.f32.mrb[0].mxu0
    %4052 = vdwg.mxu0
    %v4053 = vtanh.pop %v4050
    %v4055 = vsel %vm2396, %v4053, 0
    %4057 = vmatprep.subr.mxu0 0.0
    %4058 = vmatpush1.msra.mxu0 %v58
    %4059 = vmatprep.subr.mxu0 0.0
    %4060 = vmatpush1.msra.mxu0 %v59
    %4061 = vmatprep.subr.mxu0 0.0
    %4062 = vmatpush1.msra.mxu0 %v60
    %4063 = vmatprep.subr.mxu0 0.0
    %4064 = vmatpush1.msra.mxu0 %v61
    %4065 = vmatprep.subr.mxu0 0.0
    %4066 = vmatpush1.msra.mxu0 %v62
    %4067 = vmatprep.subr.mxu0 0.0
    %4068 = vmatpush1.msra.mxu0 %v63
    %4069 = vmatprep.subr.mxu0 0.0
    %4070 = vmatpush1.msra.mxu0 %v64
    %4071 = vmatprep.subr.mxu0 0.0
    %4072 = vmatpush1.msra.mxu0 %v65
    %4073 = vmatprep.subr.mxu0 0.0
    %4074 = vmatpush1.msra.mxu0 0.0
    %4075 = vmatprep.subr.mxu0 0.0
    %4076 = vmatpush1.msra.mxu0 0.0
    %4077 = vmatprep.subr.mxu0 0.0
    %4078 = vmatpush1.msra.mxu0 0.0
    %4079 = vmatprep.subr.mxu0 0.0
    %4080 = vmatpush1.msra.mxu0 0.0
    %4081 = vmatprep.subr.mxu0 0.0
    %4082 = vmatpush1.msra.mxu0 0.0
    %4083 = vmatprep.subr.mxu0 0.0
    %4084 = vmatpush1.msra.mxu0 0.0
    %4085 = vmatprep.subr.mxu0 0.0
    %4086 = vmatpush1.msra.mxu0 0.0
    %4087 = vmatprep.subr.mxu0 0.0
    %4088 = vmatpush1.msra.mxu0 0.0
    %4089 = vmatprep.subr.mxu0 0.0
    %4090 = vmatpush1.msra.mxu0 0.0
    %4091 = vmatprep.subr.mxu0 0.0
    %4092 = vmatpush1.msra.mxu0 0.0
    %4093 = vmatprep.subr.mxu0 0.0
    %4094 = vmatpush1.msra.mxu0 0.0
    %4095 = vmatprep.subr.mxu0 0.0
    %4096 = vmatpush1.msra.mxu0 0.0
    %4097 = vmatprep.subr.mxu0 0.0
    %4098 = vmatpush1.msra.mxu0 0.0
    %4099 = vmatprep.subr.mxu0 0.0
    %4100 = vmatpush1.msra.mxu0 0.0
    %4101 = vmatprep.subr.mxu0 0.0
    %4102 = vmatpush1.msra.mxu0 0.0
    %4103 = vmatprep.subr.mxu0 0.0
    %4104 = vmatpush1.msra.mxu0 0.0
    %4105 = vmatprep.subr.mxu0 0.0
    %4106 = vmatpush1.msra.mxu0 0.0
    %4107 = vmatprep.subr.mxu0 0.0
    %4108 = vmatpush1.msra.mxu0 0.0
    %4109 = vmatprep.subr.mxu0 0.0
    %4110 = vmatpush1.msra.mxu0 0.0
    %4111 = vmatprep.subr.mxu0 0.0
    %4112 = vmatpush1.msra.mxu0 0.0
    %4113 = vmatprep.subr.mxu0 0.0
    %4114 = vmatpush1.msra.mxu0 0.0
    %4115 = vmatprep.subr.mxu0 0.0
    %4116 = vmatpush1.msra.mxu0 0.0
    %4117 = vmatprep.subr.mxu0 0.0
    %4118 = vmatpush1.msra.mxu0 0.0
    %4119 = vmatprep.subr.mxu0 0.0
    %4120 = vmatpush1.msra.mxu0 0.0
    %4121 = vmatprep.mubr.f32.mxu0 0.0
    %4122 = vmatmul.mubr.f32.gmra.mrb[0].mxu0 %v4055
    %v4123 = vpop.f32.mrb[0].mxu0
    %v4124 = vadd.f32 %v91, %v4123
    %v4125 = vpop.f32.mrb[0].mxu0
    %4126 = vdwg.mxu0
    %4127 = vmatprep.subr.mxu0 0.0
    %4128 = vmatpush1.msra.mxu0 %v38
    %4129 = vmatprep.subr.mxu0 0.0
    %4130 = vmatpush1.msra.mxu0 %v39
    %4131 = vmatprep.subr.mxu0 0.0
    %4132 = vmatpush1.msra.mxu0 %v40
    %4133 = vmatprep.subr.mxu0 0.0
    %4134 = vmatpush1.msra.mxu0 %v41
    %4135 = vmatprep.subr.mxu0 0.0
    %4136 = vmatpush1.msra.mxu0 %v42
    %4137 = vmatprep.subr.mxu0 0.0
    %4138 = vmatpush1.msra.mxu0 %v43
    %4139 = vmatprep.subr.mxu0 0.0
    %4140 = vmatpush1.msra.mxu0 %v44
    %4141 = vmatprep.subr.mxu0 0.0
    %4142 = vmatpush1.msra.mxu0 %v45
    %4143 = vmatprep.subr.mxu0 0.0
    %4144 = vmatpush1.msra.mxu0 0.0
    %4145 = vmatprep.subr.mxu0 0.0
    %4146 = vmatpush1.msra.mxu0 0.0
    %4147 = vmatprep.subr.mxu0 0.0
    %4148 = vmatpush1.msra.mxu0 0.0
    %4149 = vmatprep.subr.mxu0 0.0
    %4150 = vmatpush1.msra.mxu0 0.0
    %4151 = vmatprep.subr.mxu0 0.0
    %4152 = vmatpush1.msra.mxu0 0.0
    %4153 = vmatprep.subr.mxu0 0.0
    %4154 = vmatpush1.msra.mxu0 0.0
    %4155 = vmatprep.subr.mxu0 0.0
    %4156 = vmatpush1.msra.mxu0 0.0
    %4157 = vmatprep.subr.mxu0 0.0
    %4158 = vmatpush1.msra.mxu0 0.0
    %4159 = vmatprep.subr.mxu0 0.0
    %4160 = vmatpush1.msra.mxu0 0.0
    %4161 = vmatprep.subr.mxu0 0.0
    %4162 = vmatpush1.msra.mxu0 0.0
    %4163 = vmatprep.subr.mxu0 0.0
    %4164 = vmatpush1.msra.mxu0 0.0
    %4165 = vmatprep.subr.mxu0 0.0
    %4166 = vmatpush1.msra.mxu0 0.0
    %4167 = vmatprep.subr.mxu0 0.0
    %4168 = vmatpush1.msra.mxu0 0.0
    %4169 = vmatprep.subr.mxu0 0.0
    %4170 = vmatpush1.msra.mxu0 0.0
    %4171 = vmatprep.subr.mxu0 0.0
    %4172 = vmatpush1.msra.mxu0 0.0
    %4173 = vmatprep.subr.mxu0 0.0
    %4174 = vmatpush1.msra.mxu0 0.0
    %4175 = vmatprep.subr.mxu0 0.0
    %4176 = vmatpush1.msra.mxu0 0.0
    %4177 = vmatprep.subr.mxu0 0.0
    %4178 = vmatpush1.msra.mxu0 0.0
    %4179 = vmatprep.subr.mxu0 0.0
    %4180 = vmatpush1.msra.mxu0 0.0
    %4181 = vmatprep.subr.mxu0 0.0
    %4182 = vmatpush1.msra.mxu0 0.0
    %4183 = vmatprep.subr.mxu0 0.0
    %4184 = vmatpush1.msra.mxu0 0.0
    %4185 = vmatprep.subr.mxu0 0.0
    %4186 = vmatpush1.msra.mxu0 0.0
    %4187 = vmatprep.subr.mxu0 0.0
    %4188 = vmatpush1.msra.mxu0 0.0
    %4189 = vmatprep.subr.mxu0 0.0
    %4190 = vmatpush1.msra.mxu0 0.0
    %4191 = vmatprep.mubr.f32.mxu0 0.0
    %4192 = vmatmul.mubr.f32.gmra.mrb[0].mxu0 %v4055
    %v4193 = vpop.f32.mrb[0].mxu0
    %v4194 = vadd.f32 %v3740, %v4193
    %v4195 = vpop.f32.mrb[0].mxu0
    %4196 = vdwg.mxu0
    %v4197 = vadd.f32 %v4194, %v76
    %v4198 = vtanh.pop %v4197
    %v4199 = vmul.f32 %v4198, 0.5
    %v4200 = vadd.f32 %v4199, 0.5
    %v4201 = vmul.f32 %v4200, %v3661
    %4203 = vrot.lane.b32.xlu0 %v4198, 32
    %v4204 = vpop.permute.xlu0 %4203
    %v4206 = vmul.f32 %v4200, %v4204
    %4208 = vrot.lane.b32.xlu0 %v4206, 32
    %v4209 = vpop.permute.xlu0 %4208
    %v4211 = vadd.f32 %v4201, %v4209
    %v4212 = vtanh.pop %v4211
    %4214 = vrot.lane.b32.xlu0 %v4212, 32
    %v4215 = vpop.permute.xlu0 %4214
    %v4217 = vmul.f32 %v4200, %v4215
    %4219 = vrot.lane.b32.xlu0 %v4217, 64
    %v4220 = vpop.permute.xlu0 %4219
    %v4221 = vsel %vm208, %v4220, 0
    %4223 = vmatprep.subr.mxu0 0.0
    %4224 = vmatpush1.msra.mxu0 %v26
    %4225 = vmatprep.subr.mxu0 0.0
    %4226 = vmatpush1.msra.mxu0 %v27
    %4227 = vmatprep.subr.mxu0 0.0
    %4228 = vmatpush1.msra.mxu0 %v28
    %4229 = vmatprep.subr.mxu0 0.0
    %4230 = vmatpush1.msra.mxu0 %v29
    %4231 = vmatprep.subr.mxu0 0.0
    %4232 = vmatpush1.msra.mxu0 0.0
    %4233 = vmatprep.subr.mxu0 0.0
    %4234 = vmatpush1.msra.mxu0 0.0
    %4235 = vmatprep.subr.mxu0 0.0
    %4236 = vmatpush1.msra.mxu0 0.0
    %4237 = vmatprep.subr.mxu0 0.0
    %4238 = vmatpush1.msra.mxu0 0.0
    %4239 = vmatprep.subr.mxu0 0.0
    %4240 = vmatpush1.msra.mxu0 0.0
    %4241 = vmatprep.subr.mxu0 0.0
    %4242 = vmatpush1.msra.mxu0 0.0
    %4243 = vmatprep.subr.mxu0 0.0
    %4244 = vmatpush1.msra.mxu0 0.0
    %4245 = vmatprep.subr.mxu0 0.0
    %4246 = vmatpush1.msra.mxu0 0.0
    %4247 = vmatprep.subr.mxu0 0.0
    %4248 = vmatpush1.msra.mxu0 0.0
    %4249 = vmatprep.subr.mxu0 0.0
    %4250 = vmatpush1.msra.mxu0 0.0
    %4251 = vmatprep.subr.mxu0 0.0
    %4252 = vmatpush1.msra.mxu0 0.0
    %4253 = vmatprep.subr.mxu0 0.0
    %4254 = vmatpush1.msra.mxu0 0.0
    %4255 = vmatprep.subr.mxu0 0.0
    %4256 = vmatpush1.msra.mxu0 0.0
    %4257 = vmatprep.subr.mxu0 0.0
    %4258 = vmatpush1.msra.mxu0 0.0
    %4259 = vmatprep.subr.mxu0 0.0
    %4260 = vmatpush1.msra.mxu0 0.0
    %4261 = vmatprep.subr.mxu0 0.0
    %4262 = vmatpush1.msra.mxu0 0.0
    %4263 = vmatprep.subr.mxu0 0.0
    %4264 = vmatpush1.msra.mxu0 0.0
    %4265 = vmatprep.subr.mxu0 0.0
    %4266 = vmatpush1.msra.mxu0 0.0
    %4267 = vmatprep.subr.mxu0 0.0
    %4268 = vmatpush1.msra.mxu0 0.0
    %4269 = vmatprep.subr.mxu0 0.0
    %4270 = vmatpush1.msra.mxu0 0.0
    %4271 = vmatprep.subr.mxu0 0.0
    %4272 = vmatpush1.msra.mxu0 0.0
    %4273 = vmatprep.subr.mxu0 0.0
    %4274 = vmatpush1.msra.mxu0 0.0
    %4275 = vmatprep.subr.mxu0 0.0
    %4276 = vmatpush1.msra.mxu0 0.0
    %4277 = vmatprep.subr.mxu0 0.0
    %4278 = vmatpush1.msra.mxu0 0.0
    %4279 = vmatprep.subr.mxu0 0.0
    %4280 = vmatpush1.msra.mxu0 0.0
    %4281 = vmatprep.subr.mxu0 0.0
    %4282 = vmatpush1.msra.mxu0 0.0
    %4283 = vmatprep.subr.mxu0 0.0
    %4284 = vmatpush1.msra.mxu0 0.0
    %4285 = vmatprep.subr.mxu0 0.0
    %4286 = vmatpush1.msra.mxu0 0.0
    %4287 = vmatprep.mubr.f32.mxu0 0.0
    %4288 = vmatmul.mubr.f32.gmra.mrb[0].mxu0 %v4221
    %v4289 = vpop.f32.mrb[0].mxu0
    %v4290 = vadd.f32 0.0, %v4289
    %v4291 = vpop.f32.mrb[0].mxu0
    %4292 = vdwg.mxu0
    %4293 = vmatprep.subr.mxu0 0.0
    %4294 = vmatpush1.msra.mxu0 %v30
    %4295 = vmatprep.subr.mxu0 0.0
    %4296 = vmatpush1.msra.mxu0 %v31
    %4297 = vmatprep.subr.mxu0 0.0
    %4298 = vmatpush1.msra.mxu0 %v32
    %4299 = vmatprep.subr.mxu0 0.0
    %4300 = vmatpush1.msra.mxu0 %v33
    %4301 = vmatprep.subr.mxu0 0.0
    %4302 = vmatpush1.msra.mxu0 0.0
    %4303 = vmatprep.subr.mxu0 0.0
    %4304 = vmatpush1.msra.mxu0 0.0
    %4305 = vmatprep.subr.mxu0 0.0
    %4306 = vmatpush1.msra.mxu0 0.0
    %4307 = vmatprep.subr.mxu0 0.0
    %4308 = vmatpush1.msra.mxu0 0.0
    %4309 = vmatprep.subr.mxu0 0.0
    %4310 = vmatpush1.msra.mxu0 0.0
    %4311 = vmatprep.subr.mxu0 0.0
    %4312 = vmatpush1.msra.mxu0 0.0
    %4313 = vmatprep.subr.mxu0 0.0
    %4314 = vmatpush1.msra.mxu0 0.0
    %4315 = vmatprep.subr.mxu0 0.0
    %4316 = vmatpush1.msra.mxu0 0.0
    %4317 = vmatprep.subr.mxu0 0.0
    %4318 = vmatpush1.msra.mxu0 0.0
    %4319 = vmatprep.subr.mxu0 0.0
    %4320 = vmatpush1.msra.mxu0 0.0
    %4321 = vmatprep.subr.mxu0 0.0
    %4322 = vmatpush1.msra.mxu0 0.0
    %4323 = vmatprep.subr.mxu0 0.0
    %4324 = vmatpush1.msra.mxu0 0.0
    %4325 = vmatprep.subr.mxu0 0.0
    %4326 = vmatpush1.msra.mxu0 0.0
    %4327 = vmatprep.subr.mxu0 0.0
    %4328 = vmatpush1.msra.mxu0 0.0
    %4329 = vmatprep.subr.mxu0 0.0
    %4330 = vmatpush1.msra.mxu0 0.0
    %4331 = vmatprep.subr.mxu0 0.0
    %4332 = vmatpush1.msra.mxu0 0.0
    %4333 = vmatprep.subr.mxu0 0.0
    %4334 = vmatpush1.msra.mxu0 0.0
    %4335 = vmatprep.subr.mxu0 0.0
    %4336 = vmatpush1.msra.mxu0 0.0
    %4337 = vmatprep.subr.mxu0 0.0
    %4338 = vmatpush1.msra.mxu0 0.0
    %4339 = vmatprep.subr.mxu0 0.0
    %4340 = vmatpush1.msra.mxu0 0.0
    %4341 = vmatprep.subr.mxu0 0.0
    %4342 = vmatpush1.msra.mxu0 0.0
    %4343 = vmatprep.subr.mxu0 0.0
    %4344 = vmatpush1.msra.mxu0 0.0
    %4345 = vmatprep.subr.mxu0 0.0
    %4346 = vmatpush1.msra.mxu0 0.0
    %4347 = vmatprep.subr.mxu0 0.0
    %4348 = vmatpush1.msra.mxu0 0.0
    %4349 = vmatprep.subr.mxu0 0.0
    %4350 = vmatpush1.msra.mxu0 0.0
    %4351 = vmatprep.subr.mxu0 0.0
    %4352 = vmatpush1.msra.mxu0 0.0
    %4353 = vmatprep.subr.mxu0 0.0
    %4354 = vmatpush1.msra.mxu0 0.0
    %4355 = vmatprep.subr.mxu0 0.0
    %4356 = vmatpush1.msra.mxu0 0.0
    %4357 = vmatprep.mubr.f32.mxu0 0.0
    %4358 = vmatmul.mubr.f32.gmra.mrb[0].mxu0 %v4221
    %v4359 = vpop.f32.mrb[0].mxu0
    %v4360 = vadd.f32 %v3906, %v4359
    %v4361 = vpop.f32.mrb[0].mxu0
    %4362 = vdwg.mxu0
    %v4363 = vadd.f32 %v4360, %v71
    %v4364 = vtanh.pop %v4363
    %v4365 = vmul.f32 %v4364, 0.5
    %v4366 = vadd.f32 %v4365, 0.5
    %v4367 = vmul.f32 %v4366, %v3827
    %4369 = vrot.lane.b32.xlu0 %v4364, 32
    %v4370 = vpop.permute.xlu0 %4369
    %v4372 = vmul.f32 %v4366, %v4370
    %4374 = vrot.lane.b32.xlu0 %v4372, 32
    %v4375 = vpop.permute.xlu0 %4374
    %v4377 = vadd.f32 %v4367, %v4375
    %v4378 = vtanh.pop %v4377
    %4380 = vrot.lane.b32.xlu0 %v4378, 32
    %v4381 = vpop.permute.xlu0 %4380
    %v4383 = vmul.f32 %v4366, %v4381
    %4385 = vrot.lane.b32.xlu0 %v4383, 64
    %v4386 = vpop.permute.xlu0 %4385
    %v4387 = vsel %vm208, %v4386, 0
    %4389 = vmatprep.subr.mxu0 0.0
    %4390 = vmatpush1.msra.mxu0 %v34
    %4391 = vmatprep.subr.mxu0 0.0
    %4392 = vmatpush1.msra.mxu0 %v35
    %4393 = vmatprep.subr.mxu0 0.0
    %4394 = vmatpush1.msra.mxu0 %v36
    %4395 = vmatprep.subr.mxu0 0.0
    %4396 = vmatpush1.msra.mxu0 %v37
    %4397 = vmatprep.subr.mxu0 0.0
    %4398 = vmatpush1.msra.mxu0 0.0
    %4399 = vmatprep.subr.mxu0 0.0
    %4400 = vmatpush1.msra.mxu0 0.0
    %4401 = vmatprep.subr.mxu0 0.0
    %4402 = vmatpush1.msra.mxu0 0.0
    %4403 = vmatprep.subr.mxu0 0.0
    %4404 = vmatpush1.msra.mxu0 0.0
    %4405 = vmatprep.subr.mxu0 0.0
    %4406 = vmatpush1.msra.mxu0 0.0
    %4407 = vmatprep.subr.mxu0 0.0
    %4408 = vmatpush1.msra.mxu0 0.0
    %4409 = vmatprep.subr.mxu0 0.0
    %4410 = vmatpush1.msra.mxu0 0.0
    %4411 = vmatprep.subr.mxu0 0.0
    %4412 = vmatpush1.msra.mxu0 0.0
    %4413 = vmatprep.subr.mxu0 0.0
    %4414 = vmatpush1.msra.mxu0 0.0
    %4415 = vmatprep.subr.mxu0 0.0
    %4416 = vmatpush1.msra.mxu0 0.0
    %4417 = vmatprep.subr.mxu0 0.0
    %4418 = vmatpush1.msra.mxu0 0.0
    %4419 = vmatprep.subr.mxu0 0.0
    %4420 = vmatpush1.msra.mxu0 0.0
    %4421 = vmatprep.subr.mxu0 0.0
    %4422 = vmatpush1.msra.mxu0 0.0
    %4423 = vmatprep.subr.mxu0 0.0
    %4424 = vmatpush1.msra.mxu0 0.0
    %4425 = vmatprep.subr.mxu0 0.0
    %4426 = vmatpush1.msra.mxu0 0.0
    %4427 = vmatprep.subr.mxu0 0.0
    %4428 = vmatpush1.msra.mxu0 0.0
    %4429 = vmatprep.subr.mxu0 0.0
    %4430 = vmatpush1.msra.mxu0 0.0
    %4431 = vmatprep.subr.mxu0 0.0
    %4432 = vmatpush1.msra.mxu0 0.0
    %4433 = vmatprep.subr.mxu0 0.0
    %4434 = vmatpush1.msra.mxu0 0.0
    %4435 = vmatprep.subr.mxu0 0.0
    %4436 = vmatpush1.msra.mxu0 0.0
    %4437 = vmatprep.subr.mxu0 0.0
    %4438 = vmatpush1.msra.mxu0 0.0
    %4439 = vmatprep.subr.mxu0 0.0
    %4440 = vmatpush1.msra.mxu0 0.0
    %4441 = vmatprep.subr.mxu0 0.0
    %4442 = vmatpush1.msra.mxu0 0.0
    %4443 = vmatprep.subr.mxu0 0.0
    %4444 = vmatpush1.msra.mxu0 0.0
    %4445 = vmatprep.subr.mxu0 0.0
    %4446 = vmatpush1.msra.mxu0 0.0
    %4447 = vmatprep.subr.mxu0 0.0
    %4448 = vmatpush1.msra.mxu0 0.0
    %4449 = vmatprep.subr.mxu0 0.0
    %4450 = vmatpush1.msra.mxu0 0.0
    %4451 = vmatprep.subr.mxu0 0.0
    %4452 = vmatpush1.msra.mxu0 0.0
    %4453 = vmatprep.mubr.f32.mxu0 0.0
    %4454 = vmatmul.mubr.f32.gmra.mrb[0].mxu0 %v4387
    %v4455 = vpop.f32.mrb[0].mxu0
    %v4456 = vadd.f32 0.0, %v4455
    %v4457 = vpop.f32.mrb[0].mxu0
    %4458 = vdwg.mxu0
    %4459 = vmatprep.subr.mxu0 0.0
    %4460 = vmatpush1.msra.mxu0 %v46
    %4461 = vmatprep.subr.mxu0 0.0
    %4462 = vmatpush1.msra.mxu0 %v47
    %4463 = vmatprep.subr.mxu0 0.0
    %4464 = vmatpush1.msra.mxu0 %v48
    %4465 = vmatprep.subr.mxu0 0.0
    %4466 = vmatpush1.msra.mxu0 %v49
    %4467 = vmatprep.subr.mxu0 0.0
    %4468 = vmatpush1.msra.mxu0 0.0
    %4469 = vmatprep.subr.mxu0 0.0
    %4470 = vmatpush1.msra.mxu0 0.0
    %4471 = vmatprep.subr.mxu0 0.0
    %4472 = vmatpush1.msra.mxu0 0.0
    %4473 = vmatprep.subr.mxu0 0.0
    %4474 = vmatpush1.msra.mxu0 0.0
    %4475 = vmatprep.subr.mxu0 0.0
    %4476 = vmatpush1.msra.mxu0 0.0
    %4477 = vmatprep.subr.mxu0 0.0
    %4478 = vmatpush1.msra.mxu0 0.0
    %4479 = vmatprep.subr.mxu0 0.0
    %4480 = vmatpush1.msra.mxu0 0.0
    %4481 = vmatprep.subr.mxu0 0.0
    %4482 = vmatpush1.msra.mxu0 0.0
    %4483 = vmatprep.subr.mxu0 0.0
    %4484 = vmatpush1.msra.mxu0 0.0
    %4485 = vmatprep.subr.mxu0 0.0
    %4486 = vmatpush1.msra.mxu0 0.0
    %4487 = vmatprep.subr.mxu0 0.0
    %4488 = vmatpush1.msra.mxu0 0.0
    %4489 = vmatprep.subr.mxu0 0.0
    %4490 = vmatpush1.msra.mxu0 0.0
    %4491 = vmatprep.subr.mxu0 0.0
    %4492 = vmatpush1.msra.mxu0 0.0
    %4493 = vmatprep.subr.mxu0 0.0
    %4494 = vmatpush1.msra.mxu0 0.0
    %4495 = vmatprep.subr.mxu0 0.0
    %4496 = vmatpush1.msra.mxu0 0.0
    %4497 = vmatprep.subr.mxu0 0.0
    %4498 = vmatpush1.msra.mxu0 0.0
    %4499 = vmatprep.subr.mxu0 0.0
    %4500 = vmatpush1.msra.mxu0 0.0
    %4501 = vmatprep.subr.mxu0 0.0
    %4502 = vmatpush1.msra.mxu0 0.0
    %4503 = vmatprep.subr.mxu0 0.0
    %4504 = vmatpush1.msra.mxu0 0.0
    %4505 = vmatprep.subr.mxu0 0.0
    %4506 = vmatpush1.msra.mxu0 0.0
    %4507 = vmatprep.subr.mxu0 0.0
    %4508 = vmatpush1.msra.mxu0 0.0
    %4509 = vmatprep.subr.mxu0 0.0
    %4510 = vmatpush1.msra.mxu0 0.0
    %4511 = vmatprep.subr.mxu0 0.0
    %4512 = vmatpush1.msra.mxu0 0.0
    %4513 = vmatprep.subr.mxu0 0.0
    %4514 = vmatpush1.msra.mxu0 0.0
    %4515 = vmatprep.subr.mxu0 0.0
    %4516 = vmatpush1.msra.mxu0 0.0
    %4517 = vmatprep.subr.mxu0 0.0
    %4518 = vmatpush1.msra.mxu0 0.0
    %4519 = vmatprep.subr.mxu0 0.0
    %4520 = vmatpush1.msra.mxu0 0.0
    %4521 = vmatprep.subr.mxu0 0.0
    %4522 = vmatpush1.msra.mxu0 0.0
    %4523 = vmatprep.mubr.f32.mxu0 0.0
    %4524 = vmatmul.mubr.f32.gmra.mrb[0].mxu0 %v4387
    %v4525 = vpop.f32.mrb[0].mxu0
    %v4526 = vadd.f32 %v81, %v4525
    %v4527 = vpop.f32.mrb[0].mxu0
    %4528 = vdwg.mxu0
    %v4529 = vtanh.pop %v4526
    %v4531 = vsel %vm2396, %v4529, 0
    %4533 = vmatprep.subr.mxu0 0.0
    %4534 = vmatpush1.msra.mxu0 %v50
    %4535 = vmatprep.subr.mxu0 0.0
    %4536 = vmatpush1.msra.mxu0 %v51
    %4537 = vmatprep.subr.mxu0 0.0
    %4538 = vmatpush1.msra.mxu0 %v52
    %4539 = vmatprep.subr.mxu0 0.0
    %4540 = vmatpush1.msra.mxu0 %v53
    %4541 = vmatprep.subr.mxu0 0.0
    %4542 = vmatpush1.msra.mxu0 %v54
    %4543 = vmatprep.subr.mxu0 0.0
    %4544 = vmatpush1.msra.mxu0 %v55
    %4545 = vmatprep.subr.mxu0 0.0
    %4546 = vmatpush1.msra.mxu0 %v56
    %4547 = vmatprep.subr.mxu0 0.0
    %4548 = vmatpush1.msra.mxu0 %v57
    %4549 = vmatprep.subr.mxu0 0.0
    %4550 = vmatpush1.msra.mxu0 0.0
    %4551 = vmatprep.subr.mxu0 0.0
    %4552 = vmatpush1.msra.mxu0 0.0
    %4553 = vmatprep.subr.mxu0 0.0
    %4554 = vmatpush1.msra.mxu0 0.0
    %4555 = vmatprep.subr.mxu0 0.0
    %4556 = vmatpush1.msra.mxu0 0.0
    %4557 = vmatprep.subr.mxu0 0.0
    %4558 = vmatpush1.msra.mxu0 0.0
    %4559 = vmatprep.subr.mxu0 0.0
    %4560 = vmatpush1.msra.mxu0 0.0
    %4561 = vmatprep.subr.mxu0 0.0
    %4562 = vmatpush1.msra.mxu0 0.0
    %4563 = vmatprep.subr.mxu0 0.0
    %4564 = vmatpush1.msra.mxu0 0.0
    %4565 = vmatprep.subr.mxu0 0.0
    %4566 = vmatpush1.msra.mxu0 0.0
    %4567 = vmatprep.subr.mxu0 0.0
    %4568 = vmatpush1.msra.mxu0 0.0
    %4569 = vmatprep.subr.mxu0 0.0
    %4570 = vmatpush1.msra.mxu0 0.0
    %4571 = vmatprep.subr.mxu0 0.0
    %4572 = vmatpush1.msra.mxu0 0.0
    %4573 = vmatprep.subr.mxu0 0.0
    %4574 = vmatpush1.msra.mxu0 0.0
    %4575 = vmatprep.subr.mxu0 0.0
    %4576 = vmatpush1.msra.mxu0 0.0
    %4577 = vmatprep.subr.mxu0 0.0
    %4578 = vmatpush1.msra.mxu0 0.0
    %4579 = vmatprep.subr.mxu0 0.0
    %4580 = vmatpush1.msra.mxu0 0.0
    %4581 = vmatprep.subr.mxu0 0.0
    %4582 = vmatpush1.msra.mxu0 0.0
    %4583 = vmatprep.subr.mxu0 0.0
    %4584 = vmatpush1.msra.mxu0 0.0
    %4585 = vmatprep.subr.mxu0 0.0
    %4586 = vmatpush1.msra.mxu0 0.0
    %4587 = vmatprep.subr.mxu0 0.0
    %4588 = vmatpush1.msra.mxu0 0.0
    %4589 = vmatprep.subr.mxu0 0.0
    %4590 = vmatpush1.msra.mxu0 0.0
    %4591 = vmatprep.subr.mxu0 0.0
    %4592 = vmatpush1.msra.mxu0 0.0
    %4593 = vmatprep.subr.mxu0 0.0
    %4594 = vmatpush1.msra.mxu0 0.0
    %4595 = vmatprep.subr.mxu0 0.0
    %4596 = vmatpush1.msra.mxu0 0.0
    %4597 = vmatprep.mubr.f32.mxu0 0.0
    %4598 = vmatmul.mubr.f32.gmra.mrb[0].mxu0 %v4531
    %v4599 = vpop.f32.mrb[0].mxu0
    %v4600 = vadd.f32 %v86, %v4599
    %v4601 = vpop.f32.mrb[0].mxu0
    %4602 = vdwg.mxu0
    %v4603 = vtanh.pop %v4600
    %v4605 = vsel %vm2396, %v4603, 0
    %4607 = vmatprep.subr.mxu0 0.0
    %4608 = vmatpush1.msra.mxu0 %v58
    %4609 = vmatprep.subr.mxu0 0.0
    %4610 = vmatpush1.msra.mxu0 %v59
    %4611 = vmatprep.subr.mxu0 0.0
    %4612 = vmatpush1.msra.mxu0 %v60
    %4613 = vmatprep.subr.mxu0 0.0
    %4614 = vmatpush1.msra.mxu0 %v61
    %4615 = vmatprep.subr.mxu0 0.0
    %4616 = vmatpush1.msra.mxu0 %v62
    %4617 = vmatprep.subr.mxu0 0.0
    %4618 = vmatpush1.msra.mxu0 %v63
    %4619 = vmatprep.subr.mxu0 0.0
    %4620 = vmatpush1.msra.mxu0 %v64
    %4621 = vmatprep.subr.mxu0 0.0
    %4622 = vmatpush1.msra.mxu0 %v65
    %4623 = vmatprep.subr.mxu0 0.0
    %4624 = vmatpush1.msra.mxu0 0.0
    %4625 = vmatprep.subr.mxu0 0.0
    %4626 = vmatpush1.msra.mxu0 0.0
    %4627 = vmatprep.subr.mxu0 0.0
    %4628 = vmatpush1.msra.mxu0 0.0
    %4629 = vmatprep.subr.mxu0 0.0
    %4630 = vmatpush1.msra.mxu0 0.0
    %4631 = vmatprep.subr.mxu0 0.0
    %4632 = vmatpush1.msra.mxu0 0.0
    %4633 = vmatprep.subr.mxu0 0.0
    %4634 = vmatpush1.msra.mxu0 0.0
    %4635 = vmatprep.subr.mxu0 0.0
    %4636 = vmatpush1.msra.mxu0 0.0
    %4637 = vmatprep.subr.mxu0 0.0
    %4638 = vmatpush1.msra.mxu0 0.0
    %4639 = vmatprep.subr.mxu0 0.0
    %4640 = vmatpush1.msra.mxu0 0.0
    %4641 = vmatprep.subr.mxu0 0.0
    %4642 = vmatpush1.msra.mxu0 0.0
    %4643 = vmatprep.subr.mxu0 0.0
    %4644 = vmatpush1.msra.mxu0 0.0
    %4645 = vmatprep.subr.mxu0 0.0
    %4646 = vmatpush1.msra.mxu0 0.0
    %4647 = vmatprep.subr.mxu0 0.0
    %4648 = vmatpush1.msra.mxu0 0.0
    %4649 = vmatprep.subr.mxu0 0.0
    %4650 = vmatpush1.msra.mxu0 0.0
    %4651 = vmatprep.subr.mxu0 0.0
    %4652 = vmatpush1.msra.mxu0 0.0
    %4653 = vmatprep.subr.mxu0 0.0
    %4654 = vmatpush1.msra.mxu0 0.0
    %4655 = vmatprep.subr.mxu0 0.0
    %4656 = vmatpush1.msra.mxu0 0.0
    %4657 = vmatprep.subr.mxu0 0.0
    %4658 = vmatpush1.msra.mxu0 0.0
    %4659 = vmatprep.subr.mxu0 0.0
    %4660 = vmatpush1.msra.mxu0 0.0
    %4661 = vmatprep.subr.mxu0 0.0
    %4662 = vmatpush1.msra.mxu0 0.0
    %4663 = vmatprep.subr.mxu0 0.0
    %4664 = vmatpush1.msra.mxu0 0.0
    %4665 = vmatprep.subr.mxu0 0.0
    %4666 = vmatpush1.msra.mxu0 0.0
    %4667 = vmatprep.subr.mxu0 0.0
    %4668 = vmatpush1.msra.mxu0 0.0
    %4669 = vmatprep.subr.mxu0 0.0
    %4670 = vmatpush1.msra.mxu0 0.0
    %4671 = vmatprep.mubr.f32.mxu0 0.0
    %4672 = vmatmul.mubr.f32.gmra.mrb[0].mxu0 %v4605
    %v4673 = vpop.f32.mrb[0].mxu0
    %v4674 = vadd.f32 %v91, %v4673
    %v4675 = vpop.f32.mrb[0].mxu0
    %4676 = vdwg.mxu0
    %4677 = vmatprep.subr.mxu0 0.0
    %4678 = vmatpush1.msra.mxu0 %v38
    %4679 = vmatprep.subr.mxu0 0.0
    %4680 = vmatpush1.msra.mxu0 %v39
    %4681 = vmatprep.subr.mxu0 0.0
    %4682 = vmatpush1.msra.mxu0 %v40
    %4683 = vmatprep.subr.mxu0 0.0
    %4684 = vmatpush1.msra.mxu0 %v41
    %4685 = vmatprep.subr.mxu0 0.0
    %4686 = vmatpush1.msra.mxu0 %v42
    %4687 = vmatprep.subr.mxu0 0.0
    %4688 = vmatpush1.msra.mxu0 %v43
    %4689 = vmatprep.subr.mxu0 0.0
    %4690 = vmatpush1.msra.mxu0 %v44
    %4691 = vmatprep.subr.mxu0 0.0
    %4692 = vmatpush1.msra.mxu0 %v45
    %4693 = vmatprep.subr.mxu0 0.0
    %4694 = vmatpush1.msra.mxu0 0.0
    %4695 = vmatprep.subr.mxu0 0.0
    %4696 = vmatpush1.msra.mxu0 0.0
    %4697 = vmatprep.subr.mxu0 0.0
    %4698 = vmatpush1.msra.mxu0 0.0
    %4699 = vmatprep.subr.mxu0 0.0
    %4700 = vmatpush1.msra.mxu0 0.0
    %4701 = vmatprep.subr.mxu0 0.0
    %4702 = vmatpush1.msra.mxu0 0.0
    %4703 = vmatprep.subr.mxu0 0.0
    %4704 = vmatpush1.msra.mxu0 0.0
    %4705 = vmatprep.subr.mxu0 0.0
    %4706 = vmatpush1.msra.mxu0 0.0
    %4707 = vmatprep.subr.mxu0 0.0
    %4708 = vmatpush1.msra.mxu0 0.0
    %4709 = vmatprep.subr.mxu0 0.0
    %4710 = vmatpush1.msra.mxu0 0.0
    %4711 = vmatprep.subr.mxu0 0.0
    %4712 = vmatpush1.msra.mxu0 0.0
    %4713 = vmatprep.subr.mxu0 0.0
    %4714 = vmatpush1.msra.mxu0 0.0
    %4715 = vmatprep.subr.mxu0 0.0
    %4716 = vmatpush1.msra.mxu0 0.0
    %4717 = vmatprep.subr.mxu0 0.0
    %4718 = vmatpush1.msra.mxu0 0.0
    %4719 = vmatprep.subr.mxu0 0.0
    %4720 = vmatpush1.msra.mxu0 0.0
    %4721 = vmatprep.subr.mxu0 0.0
    %4722 = vmatpush1.msra.mxu0 0.0
    %4723 = vmatprep.subr.mxu0 0.0
    %4724 = vmatpush1.msra.mxu0 0.0
    %4725 = vmatprep.subr.mxu0 0.0
    %4726 = vmatpush1.msra.mxu0 0.0
    %4727 = vmatprep.subr.mxu0 0.0
    %4728 = vmatpush1.msra.mxu0 0.0
    %4729 = vmatprep.subr.mxu0 0.0
    %4730 = vmatpush1.msra.mxu0 0.0
    %4731 = vmatprep.subr.mxu0 0.0
    %4732 = vmatpush1.msra.mxu0 0.0
    %4733 = vmatprep.subr.mxu0 0.0
    %4734 = vmatpush1.msra.mxu0 0.0
    %4735 = vmatprep.subr.mxu0 0.0
    %4736 = vmatpush1.msra.mxu0 0.0
    %4737 = vmatprep.subr.mxu0 0.0
    %4738 = vmatpush1.msra.mxu0 0.0
    %4739 = vmatprep.subr.mxu0 0.0
    %4740 = vmatpush1.msra.mxu0 0.0
    %4741 = vmatprep.mubr.f32.mxu0 0.0
    %4742 = vmatmul.mubr.f32.gmra.mrb[0].mxu0 %v4605
    %v4743 = vpop.f32.mrb[0].mxu0
    %v4744 = vadd.f32 %v4290, %v4743
    %v4745 = vpop.f32.mrb[0].mxu0
    %4746 = vdwg.mxu0
    %v4747 = vadd.f32 %v4744, %v76
    %v4748 = vtanh.pop %v4747
    %v4749 = vmul.f32 %v4748, 0.5
    %v4750 = vadd.f32 %v4749, 0.5
    %v4751 = vmul.f32 %v4750, %v4211
    %4753 = vrot.lane.b32.xlu0 %v4748, 32
    %v4754 = vpop.permute.xlu0 %4753
    %v4756 = vmul.f32 %v4750, %v4754
    %4758 = vrot.lane.b32.xlu0 %v4756, 32
    %v4759 = vpop.permute.xlu0 %4758
    %v4761 = vadd.f32 %v4751, %v4759
    %v4762 = vtanh.pop %v4761
    %4764 = vrot.lane.b32.xlu0 %v4762, 32
    %v4765 = vpop.permute.xlu0 %4764
    %v4767 = vmul.f32 %v4750, %v4765
    %4769 = vrot.lane.b32.xlu0 %v4767, 64
    %v4770 = vpop.permute.xlu0 %4769
    %v4771 = vsel %vm208, %v4770, 0
    %4773 = vmatprep.subr.mxu0 0.0
    %4774 = vmatpush1.msra.mxu0 %v30
    %4775 = vmatprep.subr.mxu0 0.0
    %4776 = vmatpush1.msra.mxu0 %v31
    %4777 = vmatprep.subr.mxu0 0.0
    %4778 = vmatpush1.msra.mxu0 %v32
    %4779 = vmatprep.subr.mxu0 0.0
    %4780 = vmatpush1.msra.mxu0 %v33
    %4781 = vmatprep.subr.mxu0 0.0
    %4782 = vmatpush1.msra.mxu0 0.0
    %4783 = vmatprep.subr.mxu0 0.0
    %4784 = vmatpush1.msra.mxu0 0.0
    %4785 = vmatprep.subr.mxu0 0.0
    %4786 = vmatpush1.msra.mxu0 0.0
    %4787 = vmatprep.subr.mxu0 0.0
    %4788 = vmatpush1.msra.mxu0 0.0
    %4789 = vmatprep.subr.mxu0 0.0
    %4790 = vmatpush1.msra.mxu0 0.0
    %4791 = vmatprep.subr.mxu0 0.0
    %4792 = vmatpush1.msra.mxu0 0.0
    %4793 = vmatprep.subr.mxu0 0.0
    %4794 = vmatpush1.msra.mxu0 0.0
    %4795 = vmatprep.subr.mxu0 0.0
    %4796 = vmatpush1.msra.mxu0 0.0
    %4797 = vmatprep.subr.mxu0 0.0
    %4798 = vmatpush1.msra.mxu0 0.0
    %4799 = vmatprep.subr.mxu0 0.0
    %4800 = vmatpush1.msra.mxu0 0.0
    %4801 = vmatprep.subr.mxu0 0.0
    %4802 = vmatpush1.msra.mxu0 0.0
    %4803 = vmatprep.subr.mxu0 0.0
    %4804 = vmatpush1.msra.mxu0 0.0
    %4805 = vmatprep.subr.mxu0 0.0
    %4806 = vmatpush1.msra.mxu0 0.0
    %4807 = vmatprep.subr.mxu0 0.0
    %4808 = vmatpush1.msra.mxu0 0.0
    %4809 = vmatprep.subr.mxu0 0.0
    %4810 = vmatpush1.msra.mxu0 0.0
    %4811 = vmatprep.subr.mxu0 0.0
    %4812 = vmatpush1.msra.mxu0 0.0
    %4813 = vmatprep.subr.mxu0 0.0
    %4814 = vmatpush1.msra.mxu0 0.0
    %4815 = vmatprep.subr.mxu0 0.0
    %4816 = vmatpush1.msra.mxu0 0.0
    %4817 = vmatprep.subr.mxu0 0.0
    %4818 = vmatpush1.msra.mxu0 0.0
    %4819 = vmatprep.subr.mxu0 0.0
    %4820 = vmatpush1.msra.mxu0 0.0
    %4821 = vmatprep.subr.mxu0 0.0
    %4822 = vmatpush1.msra.mxu0 0.0
    %4823 = vmatprep.subr.mxu0 0.0
    %4824 = vmatpush1.msra.mxu0 0.0
    %4825 = vmatprep.subr.mxu0 0.0
    %4826 = vmatpush1.msra.mxu0 0.0
    %4827 = vmatprep.subr.mxu0 0.0
    %4828 = vmatpush1.msra.mxu0 0.0
    %4829 = vmatprep.subr.mxu0 0.0
    %4830 = vmatpush1.msra.mxu0 0.0
    %4831 = vmatprep.subr.mxu0 0.0
    %4832 = vmatpush1.msra.mxu0 0.0
    %4833 = vmatprep.subr.mxu0 0.0
    %4834 = vmatpush1.msra.mxu0 0.0
    %4835 = vmatprep.subr.mxu0 0.0
    %4836 = vmatpush1.msra.mxu0 0.0
    %4837 = vmatprep.mubr.f32.mxu0 0.0
    %4838 = vmatmul.mubr.f32.gmra.mrb[0].mxu0 %v4771
    %v4839 = vpop.f32.mrb[0].mxu0
    %v4840 = vadd.f32 %v4456, %v4839
    %v4841 = vpop.f32.mrb[0].mxu0
    %4842 = vdwg.mxu0
    %v4843 = vadd.f32 %v4840, %v71
    %v4844 = vtanh.pop %v4843
    %v4845 = vmul.f32 %v4844, 0.5
    %v4846 = vadd.f32 %v4845, 0.5
    %v4847 = vmul.f32 %v4846, %v4377
    %4849 = vrot.lane.b32.xlu0 %v4844, 32
    %v4850 = vpop.permute.xlu0 %4849
    %v4852 = vmul.f32 %v4846, %v4850
    %4854 = vrot.lane.b32.xlu0 %v4852, 32
    %v4855 = vpop.permute.xlu0 %4854
    %v4857 = vadd.f32 %v4847, %v4855
    %v4858 = vtanh.pop %v4857
    %4860 = vrot.lane.b32.xlu0 %v4858, 32
    %v4861 = vpop.permute.xlu0 %4860
    %v4863 = vmul.f32 %v4846, %v4861
    %4865 = vrot.lane.b32.xlu0 %v4863, 64
    %v4866 = vpop.permute.xlu0 %4865
    %v4867 = vsel %vm208, %v4866, 0
    %4869 = vmatprep.subr.mxu0 0.0
    %4870 = vmatpush1.msra.mxu0 %v46
    %4871 = vmatprep.subr.mxu0 0.0
    %4872 = vmatpush1.msra.mxu0 %v47
    %4873 = vmatprep.subr.mxu0 0.0
    %4874 = vmatpush1.msra.mxu0 %v48
    %4875 = vmatprep.subr.mxu0 0.0
    %4876 = vmatpush1.msra.mxu0 %v49
    %4877 = vmatprep.subr.mxu0 0.0
    %4878 = vmatpush1.msra.mxu0 0.0
    %4879 = vmatprep.subr.mxu0 0.0
    %4880 = vmatpush1.msra.mxu0 0.0
    %4881 = vmatprep.subr.mxu0 0.0
    %4882 = vmatpush1.msra.mxu0 0.0
    %4883 = vmatprep.subr.mxu0 0.0
    %4884 = vmatpush1.msra.mxu0 0.0
    %4885 = vmatprep.subr.mxu0 0.0
    %4886 = vmatpush1.msra.mxu0 0.0
    %4887 = vmatprep.subr.mxu0 0.0
    %4888 = vmatpush1.msra.mxu0 0.0
    %4889 = vmatprep.subr.mxu0 0.0
    %4890 = vmatpush1.msra.mxu0 0.0
    %4891 = vmatprep.subr.mxu0 0.0
    %4892 = vmatpush1.msra.mxu0 0.0
    %4893 = vmatprep.subr.mxu0 0.0
    %4894 = vmatpush1.msra.mxu0 0.0
    %4895 = vmatprep.subr.mxu0 0.0
    %4896 = vmatpush1.msra.mxu0 0.0
    %4897 = vmatprep.subr.mxu0 0.0
    %4898 = vmatpush1.msra.mxu0 0.0
    %4899 = vmatprep.subr.mxu0 0.0
    %4900 = vmatpush1.msra.mxu0 0.0
    %4901 = vmatprep.subr.mxu0 0.0
    %4902 = vmatpush1.msra.mxu0 0.0
    %4903 = vmatprep.subr.mxu0 0.0
    %4904 = vmatpush1.msra.mxu0 0.0
    %4905 = vmatprep.subr.mxu0 0.0
    %4906 = vmatpush1.msra.mxu0 0.0
    %4907 = vmatprep.subr.mxu0 0.0
    %4908 = vmatpush1.msra.mxu0 0.0
    %4909 = vmatprep.subr.mxu0 0.0
    %4910 = vmatpush1.msra.mxu0 0.0
    %4911 = vmatprep.subr.mxu0 0.0
    %4912 = vmatpush1.msra.mxu0 0.0
    %4913 = vmatprep.subr.mxu0 0.0
    %4914 = vmatpush1.msra.mxu0 0.0
    %4915 = vmatprep.subr.mxu0 0.0
    %4916 = vmatpush1.msra.mxu0 0.0
    %4917 = vmatprep.subr.mxu0 0.0
    %4918 = vmatpush1.msra.mxu0 0.0
    %4919 = vmatprep.subr.mxu0 0.0
    %4920 = vmatpush1.msra.mxu0 0.0
    %4921 = vmatprep.subr.mxu0 0.0
    %4922 = vmatpush1.msra.mxu0 0.0
    %4923 = vmatprep.subr.mxu0 0.0
    %4924 = vmatpush1.msra.mxu0 0.0
    %4925 = vmatprep.subr.mxu0 0.0
    %4926 = vmatpush1.msra.mxu0 0.0
    %4927 = vmatprep.subr.mxu0 0.0
    %4928 = vmatpush1.msra.mxu0 0.0
    %4929 = vmatprep.subr.mxu0 0.0
    %4930 = vmatpush1.msra.mxu0 0.0
    %4931 = vmatprep.subr.mxu0 0.0
    %4932 = vmatpush1.msra.mxu0 0.0
    %4933 = vmatprep.mubr.f32.mxu0 0.0
    %4934 = vmatmul.mubr.f32.gmra.mrb[0].mxu0 %v4867
    %v4935 = vpop.f32.mrb[0].mxu0
    %v4936 = vadd.f32 %v81, %v4935
    %v4937 = vpop.f32.mrb[0].mxu0
    %4938 = vdwg.mxu0
    %v4939 = vtanh.pop %v4936
    %v4941 = vsel %vm2396, %v4939, 0
    %4943 = vmatprep.subr.mxu0 0.0
    %4944 = vmatpush1.msra.mxu0 %v50
    %4945 = vmatprep.subr.mxu0 0.0
    %4946 = vmatpush1.msra.mxu0 %v51
    %4947 = vmatprep.subr.mxu0 0.0
    %4948 = vmatpush1.msra.mxu0 %v52
    %4949 = vmatprep.subr.mxu0 0.0
    %4950 = vmatpush1.msra.mxu0 %v53
    %4951 = vmatprep.subr.mxu0 0.0
    %4952 = vmatpush1.msra.mxu0 %v54
    %4953 = vmatprep.subr.mxu0 0.0
    %4954 = vmatpush1.msra.mxu0 %v55
    %4955 = vmatprep.subr.mxu0 0.0
    %4956 = vmatpush1.msra.mxu0 %v56
    %4957 = vmatprep.subr.mxu0 0.0
    %4958 = vmatpush1.msra.mxu0 %v57
    %4959 = vmatprep.subr.mxu0 0.0
    %4960 = vmatpush1.msra.mxu0 0.0
    %4961 = vmatprep.subr.mxu0 0.0
    %4962 = vmatpush1.msra.mxu0 0.0
    %4963 = vmatprep.subr.mxu0 0.0
    %4964 = vmatpush1.msra.mxu0 0.0
    %4965 = vmatprep.subr.mxu0 0.0
    %4966 = vmatpush1.msra.mxu0 0.0
    %4967 = vmatprep.subr.mxu0 0.0
    %4968 = vmatpush1.msra.mxu0 0.0
    %4969 = vmatprep.subr.mxu0 0.0
    %4970 = vmatpush1.msra.mxu0 0.0
    %4971 = vmatprep.subr.mxu0 0.0
    %4972 = vmatpush1.msra.mxu0 0.0
    %4973 = vmatprep.subr.mxu0 0.0
    %4974 = vmatpush1.msra.mxu0 0.0
    %4975 = vmatprep.subr.mxu0 0.0
    %4976 = vmatpush1.msra.mxu0 0.0
    %4977 = vmatprep.subr.mxu0 0.0
    %4978 = vmatpush1.msra.mxu0 0.0
    %4979 = vmatprep.subr.mxu0 0.0
    %4980 = vmatpush1.msra.mxu0 0.0
    %4981 = vmatprep.subr.mxu0 0.0
    %4982 = vmatpush1.msra.mxu0 0.0
    %4983 = vmatprep.subr.mxu0 0.0
    %4984 = vmatpush1.msra.mxu0 0.0
    %4985 = vmatprep.subr.mxu0 0.0
    %4986 = vmatpush1.msra.mxu0 0.0
    %4987 = vmatprep.subr.mxu0 0.0
    %4988 = vmatpush1.msra.mxu0 0.0
    %4989 = vmatprep.subr.mxu0 0.0
    %4990 = vmatpush1.msra.mxu0 0.0
    %4991 = vmatprep.subr.mxu0 0.0
    %4992 = vmatpush1.msra.mxu0 0.0
    %4993 = vmatprep.subr.mxu0 0.0
    %4994 = vmatpush1.msra.mxu0 0.0
    %4995 = vmatprep.subr.mxu0 0.0
    %4996 = vmatpush1.msra.mxu0 0.0
    %4997 = vmatprep.subr.mxu0 0.0
    %4998 = vmatpush1.msra.mxu0 0.0
    %4999 = vmatprep.subr.mxu0 0.0
    %5000 = vmatpush1.msra.mxu0 0.0
    %5001 = vmatprep.subr.mxu0 0.0
    %5002 = vmatpush1.msra.mxu0 0.0
    %5003 = vmatprep.subr.mxu0 0.0
    %5004 = vmatpush1.msra.mxu0 0.0
    %5005 = vmatprep.subr.mxu0 0.0
    %5006 = vmatpush1.msra.mxu0 0.0
    %5007 = vmatprep.mubr.f32.mxu0 0.0
    %5008 = vmatmul.mubr.f32.gmra.mrb[0].mxu0 %v4941
    %v5009 = vpop.f32.mrb[0].mxu0
    %v5010 = vadd.f32 %v86, %v5009
    %v5011 = vpop.f32.mrb[0].mxu0
    %5012 = vdwg.mxu0
    %v5013 = vtanh.pop %v5010
    %v5015 = vsel %vm2396, %v5013, 0
    %5017 = vmatprep.subr.mxu0 0.0
    %5018 = vmatpush1.msra.mxu0 %v58
    %5019 = vmatprep.subr.mxu0 0.0
    %5020 = vmatpush1.msra.mxu0 %v59
    %5021 = vmatprep.subr.mxu0 0.0
    %5022 = vmatpush1.msra.mxu0 %v60
    %5023 = vmatprep.subr.mxu0 0.0
    %5024 = vmatpush1.msra.mxu0 %v61
    %5025 = vmatprep.subr.mxu0 0.0
    %5026 = vmatpush1.msra.mxu0 %v62
    %5027 = vmatprep.subr.mxu0 0.0
    %5028 = vmatpush1.msra.mxu0 %v63
    %5029 = vmatprep.subr.mxu0 0.0
    %5030 = vmatpush1.msra.mxu0 %v64
    %5031 = vmatprep.subr.mxu0 0.0
    %5032 = vmatpush1.msra.mxu0 %v65
    %5033 = vmatprep.subr.mxu0 0.0
    %5034 = vmatpush1.msra.mxu0 0.0
    %5035 = vmatprep.subr.mxu0 0.0
    %5036 = vmatpush1.msra.mxu0 0.0
    %5037 = vmatprep.subr.mxu0 0.0
    %5038 = vmatpush1.msra.mxu0 0.0
    %5039 = vmatprep.subr.mxu0 0.0
    %5040 = vmatpush1.msra.mxu0 0.0
    %5041 = vmatprep.subr.mxu0 0.0
    %5042 = vmatpush1.msra.mxu0 0.0
    %5043 = vmatprep.subr.mxu0 0.0
    %5044 = vmatpush1.msra.mxu0 0.0
    %5045 = vmatprep.subr.mxu0 0.0
    %5046 = vmatpush1.msra.mxu0 0.0
    %5047 = vmatprep.subr.mxu0 0.0
    %5048 = vmatpush1.msra.mxu0 0.0
    %5049 = vmatprep.subr.mxu0 0.0
    %5050 = vmatpush1.msra.mxu0 0.0
    %5051 = vmatprep.subr.mxu0 0.0
    %5052 = vmatpush1.msra.mxu0 0.0
    %5053 = vmatprep.subr.mxu0 0.0
    %5054 = vmatpush1.msra.mxu0 0.0
    %5055 = vmatprep.subr.mxu0 0.0
    %5056 = vmatpush1.msra.mxu0 0.0
    %5057 = vmatprep.subr.mxu0 0.0
    %5058 = vmatpush1.msra.mxu0 0.0
    %5059 = vmatprep.subr.mxu0 0.0
    %5060 = vmatpush1.msra.mxu0 0.0
    %5061 = vmatprep.subr.mxu0 0.0
    %5062 = vmatpush1.msra.mxu0 0.0
    %5063 = vmatprep.subr.mxu0 0.0
    %5064 = vmatpush1.msra.mxu0 0.0
    %5065 = vmatprep.subr.mxu0 0.0
    %5066 = vmatpush1.msra.mxu0 0.0
    %5067 = vmatprep.subr.mxu0 0.0
    %5068 = vmatpush1.msra.mxu0 0.0
    %5069 = vmatprep.subr.mxu0 0.0
    %5070 = vmatpush1.msra.mxu0 0.0
    %5071 = vmatprep.subr.mxu0 0.0
    %5072 = vmatpush1.msra.mxu0 0.0
    %5073 = vmatprep.subr.mxu0 0.0
    %5074 = vmatpush1.msra.mxu0 0.0
    %5075 = vmatprep.subr.mxu0 0.0
    %5076 = vmatpush1.msra.mxu0 0.0
    %5077 = vmatprep.subr.mxu0 0.0
    %5078 = vmatpush1.msra.mxu0 0.0
    %5079 = vmatprep.subr.mxu0 0.0
    %5080 = vmatpush1.msra.mxu0 0.0
    %5081 = vmatprep.mubr.f32.mxu0 0.0
    %5082 = vmatmul.mubr.f32.gmra.mrb[0].mxu0 %v5015
    %v5083 = vpop.f32.mrb[0].mxu0
    %v5084 = vadd.f32 %v91, %v5083
    %v5085 = vpop.f32.mrb[0].mxu0
    %5086 = vdwg.mxu0
    %v5088 = vrot.slane %v3574, 6
    %v5091 = vrot.slane %v4124, 4
    %v5094 = vrot.slane %v4674, 2
    %vm5096 = vcmask 1041408
    %v5097 = vsel %vm5096, %v3024, %v5088
    %v5098 = vsel %vm105, %v5097, %v5091
    %vm5099 = vcmask 1045504
    %v5100 = vsel %vm5099, %v5098, %v5094
    %5101 = vst.msk [vmem:[%s2] sm:$0xff] %vm98, %v5100
    %vm5102 = vcmask 25600
    %5103 = vst.msk [vmem:[%s2 + $0x8] sm:$0x3] %vm5102, %v5084
    // Predicated region
    $region14: #{tpu_custom_call.1} parent=1 // pred_check
      _
    $region15: #{tpu_custom_call.1} parent=1 // pred_check_branch
      %5105 = sbr.rel (0) target = $region17
    $region16: #{tpu_custom_call.1} parent=1 // pred_region
      _
    $region17: #{tpu_custom_call.1} parent=1 // pred_fallthru
      _
    // Predicated region
    $region18: #{tpu_custom_call.1} parent=1 // pred_check
      _
    $region19: #{tpu_custom_call.1} parent=1 // pred_check_branch
      %5107 = sbr.rel (0) target = $region21
    $region20: #{tpu_custom_call.1} parent=1 // pred_region
      _
    $region21: #{tpu_custom_call.1} parent=1 // pred_fallthru
      _
    %5108 = vsyncpa [#allocation3], 1

</llo_original>
